<compile_context>
chip_gen: v7x
topology: tpu7x:2x2x1
jax: 0.10.0
libtpu: 0.0.40
codegen_flags: <defaults>
</compile_context>

<pallas_src>
import functools

import jax
import jax.numpy as jnp
from jax.experimental import pallas as pl
from jax.experimental.pallas import tpu as pltpu


# ----------------------------------------------------------------------------
# Pallas kernel: one invocation; LSTM recurrence + masked mean + dense head.
# ----------------------------------------------------------------------------
def social_lstm_kernel(
    x_ref,       # (T*B, E)    embedded sequence, time-major flattened
    len_ref,     # (B, 1)      float32 lengths (packed-sequence lengths)
    wih_ref,     # (E, 4*Hp)   LSTM input weights, gate order i,f,g,o, H-padded
    whh_ref,     # (Hp, 4*Hp)  LSTM hidden weights, H-padded (pad rows/cols zero)
    b_ref,       # (1, 4*Hp)   LSTM bias (b_ih + b_hh), pad columns zero
    featx_ref,   # (B, DX)     [metafeats.t(), user, sub0, sub1] concatenated
    w1h_ref,     # (Hp, H1)    out_layer1 block acting on h (pad rows zero)
    w1x_ref,     # (DX, H1)    out_layer1 block acting on the extra features
    b1_ref,      # (1, H1)     out_layer1 bias
    w2_ref,      # (H1, C)     out_layer2 weight
    b2_ref,      # (1, C)      out_layer2 bias
    out_ref,     # (B, C)      final logits
    gx_sc,       # scratch (T*B, 4*Hp): precomputed input-projection gates
    *,
    seq_len,     # static T
):
    B = len_ref.shape[0]
    Hp = whh_ref.shape[0]

    # --- input projection hoisted out of the recurrence: one big MXU matmul ---
    gx_sc[...] = (
        jnp.dot(x_ref[...], wih_ref[...], preferred_element_type=jnp.float32)
        + b_ref[...]
    )

    len_f = len_ref[...]                       # (B, 1)

    h = jnp.zeros((B, Hp), jnp.float32)
    c = jnp.zeros((B, Hp), jnp.float32)
    acc = jnp.zeros((B, Hp), jnp.float32)

    # --- recurrence: fully static unroll (T is small); only h@W_hh per step ---
    for t in range(seq_len):
        g_x = gx_sc[pl.ds(t * B, B), :]        # (B, 4*Hp), static sublane-aligned slice
        gates = g_x + jnp.dot(h, whh_ref[...], preferred_element_type=jnp.float32)

        i_g = jax.nn.sigmoid(gates[:, 0 * Hp:1 * Hp])
        f_g = jax.nn.sigmoid(gates[:, 1 * Hp:2 * Hp])
        g_g = jnp.tanh(gates[:, 2 * Hp:3 * Hp])
        o_g = jax.nn.sigmoid(gates[:, 3 * Hp:4 * Hp])

        c_new = f_g * c + i_g * g_g
        h_new = o_g * jnp.tanh(c_new)

        # packed-sequence semantics: state frozen & output zero past each length
        m = len_f > float(t)                   # (B, 1) bool, valid if t < length
        h = jnp.where(m, h_new, h)
        c = jnp.where(m, c_new, c)
        acc = acc + jnp.where(m, h_new, 0.0)

    # --- masked time-mean + dense head (one-shot) ---
    h_mean = acc / len_f                       # h.sum(dim=0) / lengths
    z = (
        jnp.dot(h_mean, w1h_ref[...], preferred_element_type=jnp.float32)
        + jnp.dot(featx_ref[...], w1x_ref[...], preferred_element_type=jnp.float32)
        + b1_ref[...]
    )
    z = jnp.tanh(z)                            # self.relu = nn.Tanh()
    out_ref[...] = (
        jnp.dot(z, w2_ref[...], preferred_element_type=jnp.float32) + b2_ref[...]
    ).astype(out_ref.dtype)


# ----------------------------------------------------------------------------
# Parameter padding: hidden dim H -> Hp (=128) with exact-zero padded lanes.
# ----------------------------------------------------------------------------
def pad_lstm_params(w_ih, w_hh, b, w1_h, Hp):
    E, four_h = w_ih.shape
    H = four_h // 4
    w_ih_p = jnp.zeros((E, 4 * Hp), w_ih.dtype)
    w_hh_p = jnp.zeros((Hp, 4 * Hp), w_hh.dtype)
    b_p = jnp.zeros((1, 4 * Hp), b.dtype)
    for g in range(4):
        w_ih_p = w_ih_p.at[:, g * Hp:g * Hp + H].set(w_ih[:, g * H:(g + 1) * H])
        w_hh_p = w_hh_p.at[:H, g * Hp:g * Hp + H].set(w_hh[:, g * H:(g + 1) * H])
        b_p = b_p.at[:, g * Hp:g * Hp + H].set(b[:, g * H:(g + 1) * H])
    w1_h_p = jnp.zeros((Hp, w1_h.shape[1]), w1_h.dtype).at[:H].set(w1_h)
    return w_ih_p, w_hh_p, b_p, w1_h_p


# ----------------------------------------------------------------------------
# Wrapper: single pallas_call, whole arrays as single VMEM blocks.
# ----------------------------------------------------------------------------
def social_lstm_forward(x_seq, lengths_f, feat_x, params, *, h_pad=128):
    T, B, E = x_seq.shape
    H = params["w_hh"].shape[0]
    Hp = max(h_pad, ((H + 127) // 128) * 128)
    H1 = params["w1_h"].shape[1]
    C = params["w2"].shape[1]
    DX = feat_x.shape[1]

    w_ih_p, w_hh_p, b_p, w1_h_p = pad_lstm_params(
        params["w_ih"], params["w_hh"], params["b"], params["w1_h"], Hp
    )
    x_flat = x_seq.reshape(T * B, E)

    const = lambda shape: pl.BlockSpec(shape, lambda i: tuple(0 for _ in shape))

    grid_spec = pltpu.PrefetchScalarGridSpec(
        num_scalar_prefetch=0,
        grid=(1,),
        in_specs=[
            const((T * B, E)),        # x_flat
            const((B, 1)),            # lengths (float)
            const((E, 4 * Hp)),       # w_ih (padded)
            const((Hp, 4 * Hp)),      # w_hh (padded)
            const((1, 4 * Hp)),       # b    (padded)
            const((B, DX)),           # feat_x = [meta, user, sub0, sub1]
            const((Hp, H1)),          # w1_h (padded rows)
            const((DX, H1)),          # w1_x
            const((1, H1)),           # b1
            const((H1, C)),           # w2
            const((1, C)),            # b2
        ],
        out_specs=pl.BlockSpec((B, C), lambda i: (0, 0)),
        scratch_shapes=[pltpu.VMEM((T * B, 4 * Hp), jnp.float32)],
    )

    return pl.pallas_call(
        functools.partial(social_lstm_kernel, seq_len=T),
        out_shape=jax.ShapeDtypeStruct((B, C), jnp.float32),
        grid_spec=grid_spec,
        compiler_params=pltpu.CompilerParams(dimension_semantics=("arbitrary",)),
    )(
        x_flat, lengths_f,
        w_ih_p, w_hh_p, b_p,
        feat_x, w1_h_p, params["w1_x"], params["b1"],
        params["w2"], params["b2"],
    )


# ----------------------------------------------------------------------------
# Pure-JAX reference (mirrors the PyTorch forward exactly) for verification.
# ----------------------------------------------------------------------------
def reference_forward(x_seq, mask, lengths_f, feat_x, params):
    H = params["w_hh"].shape[0]
    B = x_seq.shape[1]

    def step(carry, xt_mt):
        h, c, acc = carry
        xt, mt = xt_mt
        gates = xt @ params["w_ih"] + h @ params["w_hh"] + params["b"]
        i = jax.nn.sigmoid(gates[:, :H])
        f = jax.nn.sigmoid(gates[:, H:2 * H])
        g = jnp.tanh(gates[:, 2 * H:3 * H])
        o = jax.nn.sigmoid(gates[:, 3 * H:])
        c_new = f * c + i * g
        h_new = o * jnp.tanh(c_new)
        h = jnp.where(mt > 0, h_new, h)
        c = jnp.where(mt > 0, c_new, c)
        acc = acc + h_new * mt
        return (h, c, acc), None

    init = (jnp.zeros((B, H)), jnp.zeros((B, H)), jnp.zeros((B, H)))
    (_, _, acc), _ = jax.lax.scan(step, init, (x_seq, mask))
    h_mean = acc / lengths_f
    z = jnp.tanh(h_mean @ params["w1_h"] + feat_x @ params["w1_x"] + params["b1"])
    return z @ params["w2"] + params["b2"]


if __name__ == "__main__":
    # ---- synthetic config (mirrors the module's __init__ constants) ----
    B = 8           # BATCH_SIZE
    E = 32          # WORD_EMBED_DIM
    H = 32          # hidden_dim
    SF = 16         # SF_LEN
    C = 2           # NUM_CLASSES
    VOCAB = 50      # VOCAB_SIZE
    NUM_USERS = 12
    NUM_SUBS = 6
    T_TEXT = 8      # text sequence length
    T = T_TEXT + 3  # prepend_social=True: [user(1), subreddit(2), text(T_TEXT)]
    DX = SF + 3 * E  # extra features fed to out_layer1 alongside h

    key = jax.random.PRNGKey(0)
    ks = jax.random.split(key, 20)

    # ---- embedding tables (synthetic stand-ins for glove/user/subreddit files) ----
    # TODO(synk): pretrained embedding files are replaced by deterministic random tables.
    word_tbl = jnp.concatenate([
        0.1 * jax.random.normal(ks[0], (VOCAB, E)),
        jnp.zeros((1, E)),                                            # pad
        (1.0 / jnp.sqrt(E)) * jax.random.normal(ks[1], (1, E)),       # unk
    ], axis=0).astype(jnp.float32)
    user_tbl = jnp.concatenate([
        0.1 * jax.random.normal(ks[2], (NUM_USERS, E)), jnp.zeros((1, E))
    ], axis=0).astype(jnp.float32)
    sub_tbl = jnp.concatenate([
        0.1 * jax.random.normal(ks[3], (NUM_SUBS, E)), jnp.zeros((1, E))
    ], axis=0).astype(jnp.float32)

    # ---- model parameters (stored as (in, out); LSTM gate order i,f,g,o) ----
    params = {
        "w_ih": 0.1 * jax.random.normal(ks[4], (E, 4 * H), jnp.float32),
        "w_hh": 0.1 * jax.random.normal(ks[5], (H, 4 * H), jnp.float32),
        "b":    0.1 * jax.random.normal(ks[6], (1, 4 * H), jnp.float32),
        # out_layer1 split into the block acting on h and on [meta,user,sub0,sub1]
        "w1_h": 0.1 * jax.random.normal(ks[7], (H, H), jnp.float32),
        "w1_x": 0.1 * jax.random.normal(ks[8], (DX, H), jnp.float32),
        "b1":   0.1 * jax.random.normal(ks[12], (1, H), jnp.float32),
        "w2":   0.1 * jax.random.normal(ks[13], (H, C), jnp.float32),
        "b2":   0.1 * jax.random.normal(ks[14], (1, C), jnp.float32),
    }

    # ---- example inputs (same conventions as the PyTorch forward) ----
    text_inputs = jax.random.randint(ks[15], (T_TEXT, B), 0, VOCAB)      # (T_text, B)
    user_inputs = jax.random.randint(ks[16], (1, B), 0, NUM_USERS)       # (1, B)
    subreddit_inputs = jax.random.randint(ks[17], (2, B), 0, NUM_SUBS)   # (2, B)
    metafeats = jax.random.normal(ks[18], (SF, B), jnp.float32)          # (SF, B)
    # lengths of the concatenated sequence, sorted descending (pack_padded_sequence)
    lengths = jnp.sort(
        jax.random.randint(ks[19], (B,), 4, T + 1), descending=True
    ).astype(jnp.int32)

    # ---- plain-JAX glue: embedding lookups + concat + feature assembly ----
    text_e = jnp.take(word_tbl, text_inputs, axis=0)        # (T_text, B, E)
    user_e = jnp.take(user_tbl, user_inputs, axis=0)        # (1, B, E)
    sub_e = jnp.take(sub_tbl, subreddit_inputs, axis=0)     # (2, B, E)
    x_seq = jnp.concatenate([user_e, sub_e, text_e], axis=0)  # (T, B, E)

    lengths_f = lengths.astype(jnp.float32)[:, None]          # (B, 1)
    feat_x = jnp.concatenate(                                  # (B, SF + 3E)
        [metafeats.T, user_e[0], sub_e[0], sub_e[1]], axis=1
    )

    out = social_lstm_forward(x_seq, lengths_f, feat_x, params)
    out = jax.block_until_ready(out)

    mask = (jnp.arange(T)[:, None] < lengths[None, :]).astype(jnp.float32)[:, :, None]
    ref = reference_forward(x_seq, mask, lengths_f, feat_x, params)
    assert out.shape == (B, C)
    assert jnp.allclose(out, ref, rtol=1e-4, atol=1e-4), (out, ref)

    print("KERNEL_OK")
</pallas_src>

<mosaic_0001>
module attributes {stable_mosaic.version = 11 : i64} {
  func.func @social_lstm_kernel(%arg0: i32, %arg1: memref<88x32xf32, #tpu.memory_space<vmem>>, %arg2: memref<8x1xf32, #tpu.memory_space<vmem>>, %arg3: memref<32x512xf32, #tpu.memory_space<vmem>>, %arg4: memref<128x512xf32, #tpu.memory_space<vmem>>, %arg5: memref<1x512xf32, #tpu.memory_space<vmem>>, %arg6: memref<8x112xf32, #tpu.memory_space<vmem>>, %arg7: memref<128x32xf32, #tpu.memory_space<vmem>>, %arg8: memref<112x32xf32, #tpu.memory_space<vmem>>, %arg9: memref<1x32xf32, #tpu.memory_space<vmem>>, %arg10: memref<32x2xf32, #tpu.memory_space<vmem>>, %arg11: memref<1x2xf32, #tpu.memory_space<vmem>>, %arg12: memref<8x2xf32, #tpu.memory_space<vmem>>, %arg13: memref<88x512xf32, #tpu.memory_space<vmem>>) attributes {dimension_semantics = [#tpu.dimension_semantics<arbitrary>], iteration_bounds = array<i64: 1>, scalar_prefetch = 0 : i64, scratch_operands = 1 : i64, tpu.core_type = #tpu.core_type<tc>, window_params = [{pipeline_mode = #tpu.pipeline_mode<synchronous>, transform_indices = @transform_0, window_bounds = array<i64: 88, 32>}, {pipeline_mode = #tpu.pipeline_mode<synchronous>, transform_indices = @transform_1, window_bounds = array<i64: 8, 1>}, {pipeline_mode = #tpu.pipeline_mode<synchronous>, transform_indices = @transform_2, window_bounds = array<i64: 32, 512>}, {pipeline_mode = #tpu.pipeline_mode<synchronous>, transform_indices = @transform_3, window_bounds = array<i64: 128, 512>}, {pipeline_mode = #tpu.pipeline_mode<synchronous>, transform_indices = @transform_4, window_bounds = array<i64: 1, 512>}, {pipeline_mode = #tpu.pipeline_mode<synchronous>, transform_indices = @transform_5, window_bounds = array<i64: 8, 112>}, {pipeline_mode = #tpu.pipeline_mode<synchronous>, transform_indices = @transform_6, window_bounds = array<i64: 128, 32>}, {pipeline_mode = #tpu.pipeline_mode<synchronous>, transform_indices = @transform_7, window_bounds = array<i64: 112, 32>}, {pipeline_mode = #tpu.pipeline_mode<synchronous>, transform_indices = @transform_8, window_bounds = array<i64: 1, 32>}, {pipeline_mode = #tpu.pipeline_mode<synchronous>, transform_indices = @transform_9, window_bounds = array<i64: 32, 2>}, {pipeline_mode = #tpu.pipeline_mode<synchronous>, transform_indices = @transform_10, window_bounds = array<i64: 1, 2>}, {pipeline_mode = #tpu.pipeline_mode<synchronous>, transform_indices = @transform_11, window_bounds = array<i64: 8, 2>}]} {
    %c0 = arith.constant 0 : index
    %c0_0 = arith.constant 0 : index
    %0 = vector.load %arg1[%c0, %c0_0] : memref<88x32xf32, #tpu.memory_space<vmem>>, vector<88x32xf32>
    %c0_1 = arith.constant 0 : index
    %c0_2 = arith.constant 0 : index
    %1 = vector.load %arg3[%c0_1, %c0_2] : memref<32x512xf32, #tpu.memory_space<vmem>>, vector<32x512xf32>
    %cst = arith.constant dense<0.000000e+00> : vector<88x512xf32>
    %2 = tpu.matmul %0, %1, %cst {dimension_numbers = #tpu.dot_dimension_numbers<[1], [0], [0], [1], [0, 0, 1, 1], [], []>} : vector<88x32xf32>, vector<32x512xf32>, vector<88x512xf32> -> vector<88x512xf32>
    %c0_3 = arith.constant 0 : index
    %c0_4 = arith.constant 0 : index
    %3 = vector.load %arg5[%c0_3, %c0_4] : memref<1x512xf32, #tpu.memory_space<vmem>>, vector<1x512xf32>
    %4 = vector.broadcast %3 : vector<1x512xf32> to vector<88x512xf32>
    %5 = arith.addf %2, %4 : vector<88x512xf32>
    %c0_5 = arith.constant 0 : index
    %c0_6 = arith.constant 0 : index
    %6 = vector.load %arg13[%c0_5, %c0_6] : memref<88x512xf32, #tpu.memory_space<vmem>>, vector<88x512xf32>
    tpu.vector_store %arg13[%c0_5, %c0_6], %5 {strides = array<i32>} : memref<88x512xf32, #tpu.memory_space<vmem>>, vector<88x512xf32>,
    %c0_7 = arith.constant 0 : index
    %c0_8 = arith.constant 0 : index
    %7 = vector.load %arg2[%c0_7, %c0_8] : memref<8x1xf32, #tpu.memory_space<vmem>>, vector<8x1xf32>
    %cst_9 = arith.constant 0.000000e+00 : f32
    %8 = vector.broadcast %cst_9 : f32 to vector<8x128xf32>
    %cst_10 = arith.constant 0.000000e+00 : f32
    %9 = vector.broadcast %cst_10 : f32 to vector<8x128xf32>
    %cst_11 = arith.constant 0.000000e+00 : f32
    %10 = vector.broadcast %cst_11 : f32 to vector<8x128xf32>
    %c0_12 = arith.constant 0 : index
    %c0_13 = arith.constant 0 : index
    %11 = vector.load %arg13[%c0_12, %c0_13] : memref<88x512xf32, #tpu.memory_space<vmem>>, vector<8x512xf32>
    %c0_14 = arith.constant 0 : index
    %c0_15 = arith.constant 0 : index
    %12 = vector.load %arg4[%c0_14, %c0_15] : memref<128x512xf32, #tpu.memory_space<vmem>>, vector<128x512xf32>
    %cst_16 = arith.constant dense<0.000000e+00> : vector<8x512xf32>
    %13 = tpu.matmul %8, %12, %cst_16 {dimension_numbers = #tpu.dot_dimension_numbers<[1], [0], [0], [1], [0, 0, 1, 1], [], []>} : vector<8x128xf32>, vector<128x512xf32>, vector<8x512xf32> -> vector<8x512xf32>
    %14 = arith.addf %11, %13 : vector<8x512xf32>
    %15 = vector.extract_strided_slice %14 {offsets = [0, 0], sizes = [8, 128], strides = [1, 1]} : vector<8x512xf32> to vector<8x128xf32>
    %16 = arith.negf %15 : vector<8x128xf32>
    %17 = math.exp %16 : vector<8x128xf32>
    %cst_17 = arith.constant 1.000000e+00 : f32
    %18 = vector.broadcast %cst_17 : f32 to vector<8x128xf32>
    %19 = arith.addf %18, %17 : vector<8x128xf32>
    %20 = arith.divf %18, %19 : vector<8x128xf32>
    %21 = vector.extract_strided_slice %14 {offsets = [0, 128], sizes = [8, 128], strides = [1, 1]} : vector<8x512xf32> to vector<8x128xf32>
    %22 = arith.negf %21 : vector<8x128xf32>
    %23 = math.exp %22 : vector<8x128xf32>
    %cst_18 = arith.constant 1.000000e+00 : f32
    %24 = vector.broadcast %cst_18 : f32 to vector<8x128xf32>
    %25 = arith.addf %24, %23 : vector<8x128xf32>
    %26 = arith.divf %24, %25 : vector<8x128xf32>
    %27 = vector.extract_strided_slice %14 {offsets = [0, 256], sizes = [8, 128], strides = [1, 1]} : vector<8x512xf32> to vector<8x128xf32>
    %28 = math.tanh %27 : vector<8x128xf32>
    %29 = vector.extract_strided_slice %14 {offsets = [0, 384], sizes = [8, 128], strides = [1, 1]} : vector<8x512xf32> to vector<8x128xf32>
    %30 = arith.negf %29 : vector<8x128xf32>
    %31 = math.exp %30 : vector<8x128xf32>
    %cst_19 = arith.constant 1.000000e+00 : f32
    %32 = vector.broadcast %cst_19 : f32 to vector<8x128xf32>
    %33 = arith.addf %32, %31 : vector<8x128xf32>
    %34 = arith.divf %32, %33 : vector<8x128xf32>
    %35 = arith.mulf %26, %9 : vector<8x128xf32>
    %36 = arith.mulf %20, %28 : vector<8x128xf32>
    %37 = arith.addf %35, %36 : vector<8x128xf32>
    %38 = math.tanh %37 : vector<8x128xf32>
    %39 = arith.mulf %34, %38 : vector<8x128xf32>
    %cst_20 = arith.constant 0.000000e+00 : f32
    %40 = vector.broadcast %cst_20 : f32 to vector<8x1xf32>
    %41 = arith.cmpf ogt, %7, %40 : vector<8x1xf32>
    %42 = vector.shape_cast %41 : vector<8x1xi1> to vector<8x1xi1>
    %43 = vector.broadcast %42 : vector<8x1xi1> to vector<8x128xi1>
    %44 = arith.select %43, %39, %8 : vector<8x128xi1>, vector<8x128xf32>
    %45 = vector.shape_cast %41 : vector<8x1xi1> to vector<8x1xi1>
    %46 = vector.broadcast %45 : vector<8x1xi1> to vector<8x128xi1>
    %47 = arith.select %46, %37, %9 : vector<8x128xi1>, vector<8x128xf32>
    %cst_21 = arith.constant 0.000000e+00 : f32
    %48 = vector.shape_cast %41 : vector<8x1xi1> to vector<8x1xi1>
    %49 = vector.broadcast %48 : vector<8x1xi1> to vector<8x128xi1>
    %50 = vector.broadcast %cst_21 : f32 to vector<8x128xf32>
    %51 = arith.select %49, %39, %50 : vector<8x128xi1>, vector<8x128xf32>
    %52 = arith.addf %10, %51 : vector<8x128xf32>
    %c8 = arith.constant 8 : index
    %c0_22 = arith.constant 0 : index
    %53 = vector.load %arg13[%c8, %c0_22] : memref<88x512xf32, #tpu.memory_space<vmem>>, vector<8x512xf32>
    %c0_23 = arith.constant 0 : index
    %c0_24 = arith.constant 0 : index
    %54 = vector.load %arg4[%c0_23, %c0_24] : memref<128x512xf32, #tpu.memory_space<vmem>>, vector<128x512xf32>
    %cst_25 = arith.constant dense<0.000000e+00> : vector<8x512xf32>
    %55 = tpu.matmul %44, %54, %cst_25 {dimension_numbers = #tpu.dot_dimension_numbers<[1], [0], [0], [1], [0, 0, 1, 1], [], []>} : vector<8x128xf32>, vector<128x512xf32>, vector<8x512xf32> -> vector<8x512xf32>
    %56 = arith.addf %53, %55 : vector<8x512xf32>
    %57 = vector.extract_strided_slice %56 {offsets = [0, 0], sizes = [8, 128], strides = [1, 1]} : vector<8x512xf32> to vector<8x128xf32>
    %58 = arith.negf %57 : vector<8x128xf32>
    %59 = math.exp %58 : vector<8x128xf32>
    %cst_26 = arith.constant 1.000000e+00 : f32
    %60 = vector.broadcast %cst_26 : f32 to vector<8x128xf32>
    %61 = arith.addf %60, %59 : vector<8x128xf32>
    %62 = arith.divf %60, %61 : vector<8x128xf32>
    %63 = vector.extract_strided_slice %56 {offsets = [0, 128], sizes = [8, 128], strides = [1, 1]} : vector<8x512xf32> to vector<8x128xf32>
    %64 = arith.negf %63 : vector<8x128xf32>
    %65 = math.exp %64 : vector<8x128xf32>
    %cst_27 = arith.constant 1.000000e+00 : f32
    %66 = vector.broadcast %cst_27 : f32 to vector<8x128xf32>
    %67 = arith.addf %66, %65 : vector<8x128xf32>
    %68 = arith.divf %66, %67 : vector<8x128xf32>
    %69 = vector.extract_strided_slice %56 {offsets = [0, 256], sizes = [8, 128], strides = [1, 1]} : vector<8x512xf32> to vector<8x128xf32>
    %70 = math.tanh %69 : vector<8x128xf32>
    %71 = vector.extract_strided_slice %56 {offsets = [0, 384], sizes = [8, 128], strides = [1, 1]} : vector<8x512xf32> to vector<8x128xf32>
    %72 = arith.negf %71 : vector<8x128xf32>
    %73 = math.exp %72 : vector<8x128xf32>
    %cst_28 = arith.constant 1.000000e+00 : f32
    %74 = vector.broadcast %cst_28 : f32 to vector<8x128xf32>
    %75 = arith.addf %74, %73 : vector<8x128xf32>
    %76 = arith.divf %74, %75 : vector<8x128xf32>
    %77 = arith.mulf %68, %47 : vector<8x128xf32>
    %78 = arith.mulf %62, %70 : vector<8x128xf32>
    %79 = arith.addf %77, %78 : vector<8x128xf32>
    %80 = math.tanh %79 : vector<8x128xf32>
    %81 = arith.mulf %76, %80 : vector<8x128xf32>
    %cst_29 = arith.constant 1.000000e+00 : f32
    %82 = vector.broadcast %cst_29 : f32 to vector<8x1xf32>
    %83 = arith.cmpf ogt, %7, %82 : vector<8x1xf32>
    %84 = vector.shape_cast %83 : vector<8x1xi1> to vector<8x1xi1>
    %85 = vector.broadcast %84 : vector<8x1xi1> to vector<8x128xi1>
    %86 = arith.select %85, %81, %44 : vector<8x128xi1>, vector<8x128xf32>
    %87 = vector.shape_cast %83 : vector<8x1xi1> to vector<8x1xi1>
    %88 = vector.broadcast %87 : vector<8x1xi1> to vector<8x128xi1>
    %89 = arith.select %88, %79, %47 : vector<8x128xi1>, vector<8x128xf32>
    %cst_30 = arith.constant 0.000000e+00 : f32
    %90 = vector.shape_cast %83 : vector<8x1xi1> to vector<8x1xi1>
    %91 = vector.broadcast %90 : vector<8x1xi1> to vector<8x128xi1>
    %92 = vector.broadcast %cst_30 : f32 to vector<8x128xf32>
    %93 = arith.select %91, %81, %92 : vector<8x128xi1>, vector<8x128xf32>
    %94 = arith.addf %52, %93 : vector<8x128xf32>
    %c16 = arith.constant 16 : index
    %c0_31 = arith.constant 0 : index
    %95 = vector.load %arg13[%c16, %c0_31] : memref<88x512xf32, #tpu.memory_space<vmem>>, vector<8x512xf32>
    %c0_32 = arith.constant 0 : index
    %c0_33 = arith.constant 0 : index
    %96 = vector.load %arg4[%c0_32, %c0_33] : memref<128x512xf32, #tpu.memory_space<vmem>>, vector<128x512xf32>
    %cst_34 = arith.constant dense<0.000000e+00> : vector<8x512xf32>
    %97 = tpu.matmul %86, %96, %cst_34 {dimension_numbers = #tpu.dot_dimension_numbers<[1], [0], [0], [1], [0, 0, 1, 1], [], []>} : vector<8x128xf32>, vector<128x512xf32>, vector<8x512xf32> -> vector<8x512xf32>
    %98 = arith.addf %95, %97 : vector<8x512xf32>
    %99 = vector.extract_strided_slice %98 {offsets = [0, 0], sizes = [8, 128], strides = [1, 1]} : vector<8x512xf32> to vector<8x128xf32>
    %100 = arith.negf %99 : vector<8x128xf32>
    %101 = math.exp %100 : vector<8x128xf32>
    %cst_35 = arith.constant 1.000000e+00 : f32
    %102 = vector.broadcast %cst_35 : f32 to vector<8x128xf32>
    %103 = arith.addf %102, %101 : vector<8x128xf32>
    %104 = arith.divf %102, %103 : vector<8x128xf32>
    %105 = vector.extract_strided_slice %98 {offsets = [0, 128], sizes = [8, 128], strides = [1, 1]} : vector<8x512xf32> to vector<8x128xf32>
    %106 = arith.negf %105 : vector<8x128xf32>
    %107 = math.exp %106 : vector<8x128xf32>
    %cst_36 = arith.constant 1.000000e+00 : f32
    %108 = vector.broadcast %cst_36 : f32 to vector<8x128xf32>
    %109 = arith.addf %108, %107 : vector<8x128xf32>
    %110 = arith.divf %108, %109 : vector<8x128xf32>
    %111 = vector.extract_strided_slice %98 {offsets = [0, 256], sizes = [8, 128], strides = [1, 1]} : vector<8x512xf32> to vector<8x128xf32>
    %112 = math.tanh %111 : vector<8x128xf32>
    %113 = vector.extract_strided_slice %98 {offsets = [0, 384], sizes = [8, 128], strides = [1, 1]} : vector<8x512xf32> to vector<8x128xf32>
    %114 = arith.negf %113 : vector<8x128xf32>
    %115 = math.exp %114 : vector<8x128xf32>
    %cst_37 = arith.constant 1.000000e+00 : f32
    %116 = vector.broadcast %cst_37 : f32 to vector<8x128xf32>
    %117 = arith.addf %116, %115 : vector<8x128xf32>
    %118 = arith.divf %116, %117 : vector<8x128xf32>
    %119 = arith.mulf %110, %89 : vector<8x128xf32>
    %120 = arith.mulf %104, %112 : vector<8x128xf32>
    %121 = arith.addf %119, %120 : vector<8x128xf32>
    %122 = math.tanh %121 : vector<8x128xf32>
    %123 = arith.mulf %118, %122 : vector<8x128xf32>
    %cst_38 = arith.constant 2.000000e+00 : f32
    %124 = vector.broadcast %cst_38 : f32 to vector<8x1xf32>
    %125 = arith.cmpf ogt, %7, %124 : vector<8x1xf32>
    %126 = vector.shape_cast %125 : vector<8x1xi1> to vector<8x1xi1>
    %127 = vector.broadcast %126 : vector<8x1xi1> to vector<8x128xi1>
    %128 = arith.select %127, %123, %86 : vector<8x128xi1>, vector<8x128xf32>
    %129 = vector.shape_cast %125 : vector<8x1xi1> to vector<8x1xi1>
    %130 = vector.broadcast %129 : vector<8x1xi1> to vector<8x128xi1>
    %131 = arith.select %130, %121, %89 : vector<8x128xi1>, vector<8x128xf32>
    %cst_39 = arith.constant 0.000000e+00 : f32
    %132 = vector.shape_cast %125 : vector<8x1xi1> to vector<8x1xi1>
    %133 = vector.broadcast %132 : vector<8x1xi1> to vector<8x128xi1>
    %134 = vector.broadcast %cst_39 : f32 to vector<8x128xf32>
    %135 = arith.select %133, %123, %134 : vector<8x128xi1>, vector<8x128xf32>
    %136 = arith.addf %94, %135 : vector<8x128xf32>
    %c24 = arith.constant 24 : index
    %c0_40 = arith.constant 0 : index
    %137 = vector.load %arg13[%c24, %c0_40] : memref<88x512xf32, #tpu.memory_space<vmem>>, vector<8x512xf32>
    %c0_41 = arith.constant 0 : index
    %c0_42 = arith.constant 0 : index
    %138 = vector.load %arg4[%c0_41, %c0_42] : memref<128x512xf32, #tpu.memory_space<vmem>>, vector<128x512xf32>
    %cst_43 = arith.constant dense<0.000000e+00> : vector<8x512xf32>
    %139 = tpu.matmul %128, %138, %cst_43 {dimension_numbers = #tpu.dot_dimension_numbers<[1], [0], [0], [1], [0, 0, 1, 1], [], []>} : vector<8x128xf32>, vector<128x512xf32>, vector<8x512xf32> -> vector<8x512xf32>
    %140 = arith.addf %137, %139 : vector<8x512xf32>
    %141 = vector.extract_strided_slice %140 {offsets = [0, 0], sizes = [8, 128], strides = [1, 1]} : vector<8x512xf32> to vector<8x128xf32>
    %142 = arith.negf %141 : vector<8x128xf32>
    %143 = math.exp %142 : vector<8x128xf32>
    %cst_44 = arith.constant 1.000000e+00 : f32
    %144 = vector.broadcast %cst_44 : f32 to vector<8x128xf32>
    %145 = arith.addf %144, %143 : vector<8x128xf32>
    %146 = arith.divf %144, %145 : vector<8x128xf32>
    %147 = vector.extract_strided_slice %140 {offsets = [0, 128], sizes = [8, 128], strides = [1, 1]} : vector<8x512xf32> to vector<8x128xf32>
    %148 = arith.negf %147 : vector<8x128xf32>
    %149 = math.exp %148 : vector<8x128xf32>
    %cst_45 = arith.constant 1.000000e+00 : f32
    %150 = vector.broadcast %cst_45 : f32 to vector<8x128xf32>
    %151 = arith.addf %150, %149 : vector<8x128xf32>
    %152 = arith.divf %150, %151 : vector<8x128xf32>
    %153 = vector.extract_strided_slice %140 {offsets = [0, 256], sizes = [8, 128], strides = [1, 1]} : vector<8x512xf32> to vector<8x128xf32>
    %154 = math.tanh %153 : vector<8x128xf32>
    %155 = vector.extract_strided_slice %140 {offsets = [0, 384], sizes = [8, 128], strides = [1, 1]} : vector<8x512xf32> to vector<8x128xf32>
    %156 = arith.negf %155 : vector<8x128xf32>
    %157 = math.exp %156 : vector<8x128xf32>
    %cst_46 = arith.constant 1.000000e+00 : f32
    %158 = vector.broadcast %cst_46 : f32 to vector<8x128xf32>
    %159 = arith.addf %158, %157 : vector<8x128xf32>
    %160 = arith.divf %158, %159 : vector<8x128xf32>
    %161 = arith.mulf %152, %131 : vector<8x128xf32>
    %162 = arith.mulf %146, %154 : vector<8x128xf32>
    %163 = arith.addf %161, %162 : vector<8x128xf32>
    %164 = math.tanh %163 : vector<8x128xf32>
    %165 = arith.mulf %160, %164 : vector<8x128xf32>
    %cst_47 = arith.constant 3.000000e+00 : f32
    %166 = vector.broadcast %cst_47 : f32 to vector<8x1xf32>
    %167 = arith.cmpf ogt, %7, %166 : vector<8x1xf32>
    %168 = vector.shape_cast %167 : vector<8x1xi1> to vector<8x1xi1>
    %169 = vector.broadcast %168 : vector<8x1xi1> to vector<8x128xi1>
    %170 = arith.select %169, %165, %128 : vector<8x128xi1>, vector<8x128xf32>
    %171 = vector.shape_cast %167 : vector<8x1xi1> to vector<8x1xi1>
    %172 = vector.broadcast %171 : vector<8x1xi1> to vector<8x128xi1>
    %173 = arith.select %172, %163, %131 : vector<8x128xi1>, vector<8x128xf32>
    %cst_48 = arith.constant 0.000000e+00 : f32
    %174 = vector.shape_cast %167 : vector<8x1xi1> to vector<8x1xi1>
    %175 = vector.broadcast %174 : vector<8x1xi1> to vector<8x128xi1>
    %176 = vector.broadcast %cst_48 : f32 to vector<8x128xf32>
    %177 = arith.select %175, %165, %176 : vector<8x128xi1>, vector<8x128xf32>
    %178 = arith.addf %136, %177 : vector<8x128xf32>
    %c32 = arith.constant 32 : index
    %c0_49 = arith.constant 0 : index
    %179 = vector.load %arg13[%c32, %c0_49] : memref<88x512xf32, #tpu.memory_space<vmem>>, vector<8x512xf32>
    %c0_50 = arith.constant 0 : index
    %c0_51 = arith.constant 0 : index
    %180 = vector.load %arg4[%c0_50, %c0_51] : memref<128x512xf32, #tpu.memory_space<vmem>>, vector<128x512xf32>
    %cst_52 = arith.constant dense<0.000000e+00> : vector<8x512xf32>
    %181 = tpu.matmul %170, %180, %cst_52 {dimension_numbers = #tpu.dot_dimension_numbers<[1], [0], [0], [1], [0, 0, 1, 1], [], []>} : vector<8x128xf32>, vector<128x512xf32>, vector<8x512xf32> -> vector<8x512xf32>
    %182 = arith.addf %179, %181 : vector<8x512xf32>
    %183 = vector.extract_strided_slice %182 {offsets = [0, 0], sizes = [8, 128], strides = [1, 1]} : vector<8x512xf32> to vector<8x128xf32>
    %184 = arith.negf %183 : vector<8x128xf32>
    %185 = math.exp %184 : vector<8x128xf32>
    %cst_53 = arith.constant 1.000000e+00 : f32
    %186 = vector.broadcast %cst_53 : f32 to vector<8x128xf32>
    %187 = arith.addf %186, %185 : vector<8x128xf32>
    %188 = arith.divf %186, %187 : vector<8x128xf32>
    %189 = vector.extract_strided_slice %182 {offsets = [0, 128], sizes = [8, 128], strides = [1, 1]} : vector<8x512xf32> to vector<8x128xf32>
    %190 = arith.negf %189 : vector<8x128xf32>
    %191 = math.exp %190 : vector<8x128xf32>
    %cst_54 = arith.constant 1.000000e+00 : f32
    %192 = vector.broadcast %cst_54 : f32 to vector<8x128xf32>
    %193 = arith.addf %192, %191 : vector<8x128xf32>
    %194 = arith.divf %192, %193 : vector<8x128xf32>
    %195 = vector.extract_strided_slice %182 {offsets = [0, 256], sizes = [8, 128], strides = [1, 1]} : vector<8x512xf32> to vector<8x128xf32>
    %196 = math.tanh %195 : vector<8x128xf32>
    %197 = vector.extract_strided_slice %182 {offsets = [0, 384], sizes = [8, 128], strides = [1, 1]} : vector<8x512xf32> to vector<8x128xf32>
    %198 = arith.negf %197 : vector<8x128xf32>
    %199 = math.exp %198 : vector<8x128xf32>
    %cst_55 = arith.constant 1.000000e+00 : f32
    %200 = vector.broadcast %cst_55 : f32 to vector<8x128xf32>
    %201 = arith.addf %200, %199 : vector<8x128xf32>
    %202 = arith.divf %200, %201 : vector<8x128xf32>
    %203 = arith.mulf %194, %173 : vector<8x128xf32>
    %204 = arith.mulf %188, %196 : vector<8x128xf32>
    %205 = arith.addf %203, %204 : vector<8x128xf32>
    %206 = math.tanh %205 : vector<8x128xf32>
    %207 = arith.mulf %202, %206 : vector<8x128xf32>
    %cst_56 = arith.constant 4.000000e+00 : f32
    %208 = vector.broadcast %cst_56 : f32 to vector<8x1xf32>
    %209 = arith.cmpf ogt, %7, %208 : vector<8x1xf32>
    %210 = vector.shape_cast %209 : vector<8x1xi1> to vector<8x1xi1>
    %211 = vector.broadcast %210 : vector<8x1xi1> to vector<8x128xi1>
    %212 = arith.select %211, %207, %170 : vector<8x128xi1>, vector<8x128xf32>
    %213 = vector.shape_cast %209 : vector<8x1xi1> to vector<8x1xi1>
    %214 = vector.broadcast %213 : vector<8x1xi1> to vector<8x128xi1>
    %215 = arith.select %214, %205, %173 : vector<8x128xi1>, vector<8x128xf32>
    %cst_57 = arith.constant 0.000000e+00 : f32
    %216 = vector.shape_cast %209 : vector<8x1xi1> to vector<8x1xi1>
    %217 = vector.broadcast %216 : vector<8x1xi1> to vector<8x128xi1>
    %218 = vector.broadcast %cst_57 : f32 to vector<8x128xf32>
    %219 = arith.select %217, %207, %218 : vector<8x128xi1>, vector<8x128xf32>
    %220 = arith.addf %178, %219 : vector<8x128xf32>
    %c40 = arith.constant 40 : index
    %c0_58 = arith.constant 0 : index
    %221 = vector.load %arg13[%c40, %c0_58] : memref<88x512xf32, #tpu.memory_space<vmem>>, vector<8x512xf32>
    %c0_59 = arith.constant 0 : index
    %c0_60 = arith.constant 0 : index
    %222 = vector.load %arg4[%c0_59, %c0_60] : memref<128x512xf32, #tpu.memory_space<vmem>>, vector<128x512xf32>
    %cst_61 = arith.constant dense<0.000000e+00> : vector<8x512xf32>
    %223 = tpu.matmul %212, %222, %cst_61 {dimension_numbers = #tpu.dot_dimension_numbers<[1], [0], [0], [1], [0, 0, 1, 1], [], []>} : vector<8x128xf32>, vector<128x512xf32>, vector<8x512xf32> -> vector<8x512xf32>
    %224 = arith.addf %221, %223 : vector<8x512xf32>
    %225 = vector.extract_strided_slice %224 {offsets = [0, 0], sizes = [8, 128], strides = [1, 1]} : vector<8x512xf32> to vector<8x128xf32>
    %226 = arith.negf %225 : vector<8x128xf32>
    %227 = math.exp %226 : vector<8x128xf32>
    %cst_62 = arith.constant 1.000000e+00 : f32
    %228 = vector.broadcast %cst_62 : f32 to vector<8x128xf32>
    %229 = arith.addf %228, %227 : vector<8x128xf32>
    %230 = arith.divf %228, %229 : vector<8x128xf32>
    %231 = vector.extract_strided_slice %224 {offsets = [0, 128], sizes = [8, 128], strides = [1, 1]} : vector<8x512xf32> to vector<8x128xf32>
    %232 = arith.negf %231 : vector<8x128xf32>
    %233 = math.exp %232 : vector<8x128xf32>
    %cst_63 = arith.constant 1.000000e+00 : f32
    %234 = vector.broadcast %cst_63 : f32 to vector<8x128xf32>
    %235 = arith.addf %234, %233 : vector<8x128xf32>
    %236 = arith.divf %234, %235 : vector<8x128xf32>
    %237 = vector.extract_strided_slice %224 {offsets = [0, 256], sizes = [8, 128], strides = [1, 1]} : vector<8x512xf32> to vector<8x128xf32>
    %238 = math.tanh %237 : vector<8x128xf32>
    %239 = vector.extract_strided_slice %224 {offsets = [0, 384], sizes = [8, 128], strides = [1, 1]} : vector<8x512xf32> to vector<8x128xf32>
    %240 = arith.negf %239 : vector<8x128xf32>
    %241 = math.exp %240 : vector<8x128xf32>
    %cst_64 = arith.constant 1.000000e+00 : f32
    %242 = vector.broadcast %cst_64 : f32 to vector<8x128xf32>
    %243 = arith.addf %242, %241 : vector<8x128xf32>
    %244 = arith.divf %242, %243 : vector<8x128xf32>
    %245 = arith.mulf %236, %215 : vector<8x128xf32>
    %246 = arith.mulf %230, %238 : vector<8x128xf32>
    %247 = arith.addf %245, %246 : vector<8x128xf32>
    %248 = math.tanh %247 : vector<8x128xf32>
    %249 = arith.mulf %244, %248 : vector<8x128xf32>
    %cst_65 = arith.constant 5.000000e+00 : f32
    %250 = vector.broadcast %cst_65 : f32 to vector<8x1xf32>
    %251 = arith.cmpf ogt, %7, %250 : vector<8x1xf32>
    %252 = vector.shape_cast %251 : vector<8x1xi1> to vector<8x1xi1>
    %253 = vector.broadcast %252 : vector<8x1xi1> to vector<8x128xi1>
    %254 = arith.select %253, %249, %212 : vector<8x128xi1>, vector<8x128xf32>
    %255 = vector.shape_cast %251 : vector<8x1xi1> to vector<8x1xi1>
    %256 = vector.broadcast %255 : vector<8x1xi1> to vector<8x128xi1>
    %257 = arith.select %256, %247, %215 : vector<8x128xi1>, vector<8x128xf32>
    %cst_66 = arith.constant 0.000000e+00 : f32
    %258 = vector.shape_cast %251 : vector<8x1xi1> to vector<8x1xi1>
    %259 = vector.broadcast %258 : vector<8x1xi1> to vector<8x128xi1>
    %260 = vector.broadcast %cst_66 : f32 to vector<8x128xf32>
    %261 = arith.select %259, %249, %260 : vector<8x128xi1>, vector<8x128xf32>
    %262 = arith.addf %220, %261 : vector<8x128xf32>
    %c48 = arith.constant 48 : index
    %c0_67 = arith.constant 0 : index
    %263 = vector.load %arg13[%c48, %c0_67] : memref<88x512xf32, #tpu.memory_space<vmem>>, vector<8x512xf32>
    %c0_68 = arith.constant 0 : index
    %c0_69 = arith.constant 0 : index
    %264 = vector.load %arg4[%c0_68, %c0_69] : memref<128x512xf32, #tpu.memory_space<vmem>>, vector<128x512xf32>
    %cst_70 = arith.constant dense<0.000000e+00> : vector<8x512xf32>
    %265 = tpu.matmul %254, %264, %cst_70 {dimension_numbers = #tpu.dot_dimension_numbers<[1], [0], [0], [1], [0, 0, 1, 1], [], []>} : vector<8x128xf32>, vector<128x512xf32>, vector<8x512xf32> -> vector<8x512xf32>
    %266 = arith.addf %263, %265 : vector<8x512xf32>
    %267 = vector.extract_strided_slice %266 {offsets = [0, 0], sizes = [8, 128], strides = [1, 1]} : vector<8x512xf32> to vector<8x128xf32>
    %268 = arith.negf %267 : vector<8x128xf32>
    %269 = math.exp %268 : vector<8x128xf32>
    %cst_71 = arith.constant 1.000000e+00 : f32
    %270 = vector.broadcast %cst_71 : f32 to vector<8x128xf32>
    %271 = arith.addf %270, %269 : vector<8x128xf32>
    %272 = arith.divf %270, %271 : vector<8x128xf32>
    %273 = vector.extract_strided_slice %266 {offsets = [0, 128], sizes = [8, 128], strides = [1, 1]} : vector<8x512xf32> to vector<8x128xf32>
    %274 = arith.negf %273 : vector<8x128xf32>
    %275 = math.exp %274 : vector<8x128xf32>
    %cst_72 = arith.constant 1.000000e+00 : f32
    %276 = vector.broadcast %cst_72 : f32 to vector<8x128xf32>
    %277 = arith.addf %276, %275 : vector<8x128xf32>
    %278 = arith.divf %276, %277 : vector<8x128xf32>
    %279 = vector.extract_strided_slice %266 {offsets = [0, 256], sizes = [8, 128], strides = [1, 1]} : vector<8x512xf32> to vector<8x128xf32>
    %280 = math.tanh %279 : vector<8x128xf32>
    %281 = vector.extract_strided_slice %266 {offsets = [0, 384], sizes = [8, 128], strides = [1, 1]} : vector<8x512xf32> to vector<8x128xf32>
    %282 = arith.negf %281 : vector<8x128xf32>
    %283 = math.exp %282 : vector<8x128xf32>
    %cst_73 = arith.constant 1.000000e+00 : f32
    %284 = vector.broadcast %cst_73 : f32 to vector<8x128xf32>
    %285 = arith.addf %284, %283 : vector<8x128xf32>
    %286 = arith.divf %284, %285 : vector<8x128xf32>
    %287 = arith.mulf %278, %257 : vector<8x128xf32>
    %288 = arith.mulf %272, %280 : vector<8x128xf32>
    %289 = arith.addf %287, %288 : vector<8x128xf32>
    %290 = math.tanh %289 : vector<8x128xf32>
    %291 = arith.mulf %286, %290 : vector<8x128xf32>
    %cst_74 = arith.constant 6.000000e+00 : f32
    %292 = vector.broadcast %cst_74 : f32 to vector<8x1xf32>
    %293 = arith.cmpf ogt, %7, %292 : vector<8x1xf32>
    %294 = vector.shape_cast %293 : vector<8x1xi1> to vector<8x1xi1>
    %295 = vector.broadcast %294 : vector<8x1xi1> to vector<8x128xi1>
    %296 = arith.select %295, %291, %254 : vector<8x128xi1>, vector<8x128xf32>
    %297 = vector.shape_cast %293 : vector<8x1xi1> to vector<8x1xi1>
    %298 = vector.broadcast %297 : vector<8x1xi1> to vector<8x128xi1>
    %299 = arith.select %298, %289, %257 : vector<8x128xi1>, vector<8x128xf32>
    %cst_75 = arith.constant 0.000000e+00 : f32
    %300 = vector.shape_cast %293 : vector<8x1xi1> to vector<8x1xi1>
    %301 = vector.broadcast %300 : vector<8x1xi1> to vector<8x128xi1>
    %302 = vector.broadcast %cst_75 : f32 to vector<8x128xf32>
    %303 = arith.select %301, %291, %302 : vector<8x128xi1>, vector<8x128xf32>
    %304 = arith.addf %262, %303 : vector<8x128xf32>
    %c56 = arith.constant 56 : index
    %c0_76 = arith.constant 0 : index
    %305 = vector.load %arg13[%c56, %c0_76] : memref<88x512xf32, #tpu.memory_space<vmem>>, vector<8x512xf32>
    %c0_77 = arith.constant 0 : index
    %c0_78 = arith.constant 0 : index
    %306 = vector.load %arg4[%c0_77, %c0_78] : memref<128x512xf32, #tpu.memory_space<vmem>>, vector<128x512xf32>
    %cst_79 = arith.constant dense<0.000000e+00> : vector<8x512xf32>
    %307 = tpu.matmul %296, %306, %cst_79 {dimension_numbers = #tpu.dot_dimension_numbers<[1], [0], [0], [1], [0, 0, 1, 1], [], []>} : vector<8x128xf32>, vector<128x512xf32>, vector<8x512xf32> -> vector<8x512xf32>
    %308 = arith.addf %305, %307 : vector<8x512xf32>
    %309 = vector.extract_strided_slice %308 {offsets = [0, 0], sizes = [8, 128], strides = [1, 1]} : vector<8x512xf32> to vector<8x128xf32>
    %310 = arith.negf %309 : vector<8x128xf32>
    %311 = math.exp %310 : vector<8x128xf32>
    %cst_80 = arith.constant 1.000000e+00 : f32
    %312 = vector.broadcast %cst_80 : f32 to vector<8x128xf32>
    %313 = arith.addf %312, %311 : vector<8x128xf32>
    %314 = arith.divf %312, %313 : vector<8x128xf32>
    %315 = vector.extract_strided_slice %308 {offsets = [0, 128], sizes = [8, 128], strides = [1, 1]} : vector<8x512xf32> to vector<8x128xf32>
    %316 = arith.negf %315 : vector<8x128xf32>
    %317 = math.exp %316 : vector<8x128xf32>
    %cst_81 = arith.constant 1.000000e+00 : f32
    %318 = vector.broadcast %cst_81 : f32 to vector<8x128xf32>
    %319 = arith.addf %318, %317 : vector<8x128xf32>
    %320 = arith.divf %318, %319 : vector<8x128xf32>
    %321 = vector.extract_strided_slice %308 {offsets = [0, 256], sizes = [8, 128], strides = [1, 1]} : vector<8x512xf32> to vector<8x128xf32>
    %322 = math.tanh %321 : vector<8x128xf32>
    %323 = vector.extract_strided_slice %308 {offsets = [0, 384], sizes = [8, 128], strides = [1, 1]} : vector<8x512xf32> to vector<8x128xf32>
    %324 = arith.negf %323 : vector<8x128xf32>
    %325 = math.exp %324 : vector<8x128xf32>
    %cst_82 = arith.constant 1.000000e+00 : f32
    %326 = vector.broadcast %cst_82 : f32 to vector<8x128xf32>
    %327 = arith.addf %326, %325 : vector<8x128xf32>
    %328 = arith.divf %326, %327 : vector<8x128xf32>
    %329 = arith.mulf %320, %299 : vector<8x128xf32>
    %330 = arith.mulf %314, %322 : vector<8x128xf32>
    %331 = arith.addf %329, %330 : vector<8x128xf32>
    %332 = math.tanh %331 : vector<8x128xf32>
    %333 = arith.mulf %328, %332 : vector<8x128xf32>
    %cst_83 = arith.constant 7.000000e+00 : f32
    %334 = vector.broadcast %cst_83 : f32 to vector<8x1xf32>
    %335 = arith.cmpf ogt, %7, %334 : vector<8x1xf32>
    %336 = vector.shape_cast %335 : vector<8x1xi1> to vector<8x1xi1>
    %337 = vector.broadcast %336 : vector<8x1xi1> to vector<8x128xi1>
    %338 = arith.select %337, %333, %296 : vector<8x128xi1>, vector<8x128xf32>
    %339 = vector.shape_cast %335 : vector<8x1xi1> to vector<8x1xi1>
    %340 = vector.broadcast %339 : vector<8x1xi1> to vector<8x128xi1>
    %341 = arith.select %340, %331, %299 : vector<8x128xi1>, vector<8x128xf32>
    %cst_84 = arith.constant 0.000000e+00 : f32
    %342 = vector.shape_cast %335 : vector<8x1xi1> to vector<8x1xi1>
    %343 = vector.broadcast %342 : vector<8x1xi1> to vector<8x128xi1>
    %344 = vector.broadcast %cst_84 : f32 to vector<8x128xf32>
    %345 = arith.select %343, %333, %344 : vector<8x128xi1>, vector<8x128xf32>
    %346 = arith.addf %304, %345 : vector<8x128xf32>
    %c64 = arith.constant 64 : index
    %c0_85 = arith.constant 0 : index
    %347 = vector.load %arg13[%c64, %c0_85] : memref<88x512xf32, #tpu.memory_space<vmem>>, vector<8x512xf32>
    %c0_86 = arith.constant 0 : index
    %c0_87 = arith.constant 0 : index
    %348 = vector.load %arg4[%c0_86, %c0_87] : memref<128x512xf32, #tpu.memory_space<vmem>>, vector<128x512xf32>
    %cst_88 = arith.constant dense<0.000000e+00> : vector<8x512xf32>
    %349 = tpu.matmul %338, %348, %cst_88 {dimension_numbers = #tpu.dot_dimension_numbers<[1], [0], [0], [1], [0, 0, 1, 1], [], []>} : vector<8x128xf32>, vector<128x512xf32>, vector<8x512xf32> -> vector<8x512xf32>
    %350 = arith.addf %347, %349 : vector<8x512xf32>
    %351 = vector.extract_strided_slice %350 {offsets = [0, 0], sizes = [8, 128], strides = [1, 1]} : vector<8x512xf32> to vector<8x128xf32>
    %352 = arith.negf %351 : vector<8x128xf32>
    %353 = math.exp %352 : vector<8x128xf32>
    %cst_89 = arith.constant 1.000000e+00 : f32
    %354 = vector.broadcast %cst_89 : f32 to vector<8x128xf32>
    %355 = arith.addf %354, %353 : vector<8x128xf32>
    %356 = arith.divf %354, %355 : vector<8x128xf32>
    %357 = vector.extract_strided_slice %350 {offsets = [0, 128], sizes = [8, 128], strides = [1, 1]} : vector<8x512xf32> to vector<8x128xf32>
    %358 = arith.negf %357 : vector<8x128xf32>
    %359 = math.exp %358 : vector<8x128xf32>
    %cst_90 = arith.constant 1.000000e+00 : f32
    %360 = vector.broadcast %cst_90 : f32 to vector<8x128xf32>
    %361 = arith.addf %360, %359 : vector<8x128xf32>
    %362 = arith.divf %360, %361 : vector<8x128xf32>
    %363 = vector.extract_strided_slice %350 {offsets = [0, 256], sizes = [8, 128], strides = [1, 1]} : vector<8x512xf32> to vector<8x128xf32>
    %364 = math.tanh %363 : vector<8x128xf32>
    %365 = vector.extract_strided_slice %350 {offsets = [0, 384], sizes = [8, 128], strides = [1, 1]} : vector<8x512xf32> to vector<8x128xf32>
    %366 = arith.negf %365 : vector<8x128xf32>
    %367 = math.exp %366 : vector<8x128xf32>
    %cst_91 = arith.constant 1.000000e+00 : f32
    %368 = vector.broadcast %cst_91 : f32 to vector<8x128xf32>
    %369 = arith.addf %368, %367 : vector<8x128xf32>
    %370 = arith.divf %368, %369 : vector<8x128xf32>
    %371 = arith.mulf %362, %341 : vector<8x128xf32>
    %372 = arith.mulf %356, %364 : vector<8x128xf32>
    %373 = arith.addf %371, %372 : vector<8x128xf32>
    %374 = math.tanh %373 : vector<8x128xf32>
    %375 = arith.mulf %370, %374 : vector<8x128xf32>
    %cst_92 = arith.constant 8.000000e+00 : f32
    %376 = vector.broadcast %cst_92 : f32 to vector<8x1xf32>
    %377 = arith.cmpf ogt, %7, %376 : vector<8x1xf32>
    %378 = vector.shape_cast %377 : vector<8x1xi1> to vector<8x1xi1>
    %379 = vector.broadcast %378 : vector<8x1xi1> to vector<8x128xi1>
    %380 = arith.select %379, %375, %338 : vector<8x128xi1>, vector<8x128xf32>
    %381 = vector.shape_cast %377 : vector<8x1xi1> to vector<8x1xi1>
    %382 = vector.broadcast %381 : vector<8x1xi1> to vector<8x128xi1>
    %383 = arith.select %382, %373, %341 : vector<8x128xi1>, vector<8x128xf32>
    %cst_93 = arith.constant 0.000000e+00 : f32
    %384 = vector.shape_cast %377 : vector<8x1xi1> to vector<8x1xi1>
    %385 = vector.broadcast %384 : vector<8x1xi1> to vector<8x128xi1>
    %386 = vector.broadcast %cst_93 : f32 to vector<8x128xf32>
    %387 = arith.select %385, %375, %386 : vector<8x128xi1>, vector<8x128xf32>
    %388 = arith.addf %346, %387 : vector<8x128xf32>
    %c72 = arith.constant 72 : index
    %c0_94 = arith.constant 0 : index
    %389 = vector.load %arg13[%c72, %c0_94] : memref<88x512xf32, #tpu.memory_space<vmem>>, vector<8x512xf32>
    %c0_95 = arith.constant 0 : index
    %c0_96 = arith.constant 0 : index
    %390 = vector.load %arg4[%c0_95, %c0_96] : memref<128x512xf32, #tpu.memory_space<vmem>>, vector<128x512xf32>
    %cst_97 = arith.constant dense<0.000000e+00> : vector<8x512xf32>
    %391 = tpu.matmul %380, %390, %cst_97 {dimension_numbers = #tpu.dot_dimension_numbers<[1], [0], [0], [1], [0, 0, 1, 1], [], []>} : vector<8x128xf32>, vector<128x512xf32>, vector<8x512xf32> -> vector<8x512xf32>
    %392 = arith.addf %389, %391 : vector<8x512xf32>
    %393 = vector.extract_strided_slice %392 {offsets = [0, 0], sizes = [8, 128], strides = [1, 1]} : vector<8x512xf32> to vector<8x128xf32>
    %394 = arith.negf %393 : vector<8x128xf32>
    %395 = math.exp %394 : vector<8x128xf32>
    %cst_98 = arith.constant 1.000000e+00 : f32
    %396 = vector.broadcast %cst_98 : f32 to vector<8x128xf32>
    %397 = arith.addf %396, %395 : vector<8x128xf32>
    %398 = arith.divf %396, %397 : vector<8x128xf32>
    %399 = vector.extract_strided_slice %392 {offsets = [0, 128], sizes = [8, 128], strides = [1, 1]} : vector<8x512xf32> to vector<8x128xf32>
    %400 = arith.negf %399 : vector<8x128xf32>
    %401 = math.exp %400 : vector<8x128xf32>
    %cst_99 = arith.constant 1.000000e+00 : f32
    %402 = vector.broadcast %cst_99 : f32 to vector<8x128xf32>
    %403 = arith.addf %402, %401 : vector<8x128xf32>
    %404 = arith.divf %402, %403 : vector<8x128xf32>
    %405 = vector.extract_strided_slice %392 {offsets = [0, 256], sizes = [8, 128], strides = [1, 1]} : vector<8x512xf32> to vector<8x128xf32>
    %406 = math.tanh %405 : vector<8x128xf32>
    %407 = vector.extract_strided_slice %392 {offsets = [0, 384], sizes = [8, 128], strides = [1, 1]} : vector<8x512xf32> to vector<8x128xf32>
    %408 = arith.negf %407 : vector<8x128xf32>
    %409 = math.exp %408 : vector<8x128xf32>
    %cst_100 = arith.constant 1.000000e+00 : f32
    %410 = vector.broadcast %cst_100 : f32 to vector<8x128xf32>
    %411 = arith.addf %410, %409 : vector<8x128xf32>
    %412 = arith.divf %410, %411 : vector<8x128xf32>
    %413 = arith.mulf %404, %383 : vector<8x128xf32>
    %414 = arith.mulf %398, %406 : vector<8x128xf32>
    %415 = arith.addf %413, %414 : vector<8x128xf32>
    %416 = math.tanh %415 : vector<8x128xf32>
    %417 = arith.mulf %412, %416 : vector<8x128xf32>
    %cst_101 = arith.constant 9.000000e+00 : f32
    %418 = vector.broadcast %cst_101 : f32 to vector<8x1xf32>
    %419 = arith.cmpf ogt, %7, %418 : vector<8x1xf32>
    %420 = vector.shape_cast %419 : vector<8x1xi1> to vector<8x1xi1>
    %421 = vector.broadcast %420 : vector<8x1xi1> to vector<8x128xi1>
    %422 = arith.select %421, %417, %380 : vector<8x128xi1>, vector<8x128xf32>
    %423 = vector.shape_cast %419 : vector<8x1xi1> to vector<8x1xi1>
    %424 = vector.broadcast %423 : vector<8x1xi1> to vector<8x128xi1>
    %425 = arith.select %424, %415, %383 : vector<8x128xi1>, vector<8x128xf32>
    %cst_102 = arith.constant 0.000000e+00 : f32
    %426 = vector.shape_cast %419 : vector<8x1xi1> to vector<8x1xi1>
    %427 = vector.broadcast %426 : vector<8x1xi1> to vector<8x128xi1>
    %428 = vector.broadcast %cst_102 : f32 to vector<8x128xf32>
    %429 = arith.select %427, %417, %428 : vector<8x128xi1>, vector<8x128xf32>
    %430 = arith.addf %388, %429 : vector<8x128xf32>
    %c80 = arith.constant 80 : index
    %c0_103 = arith.constant 0 : index
    %431 = vector.load %arg13[%c80, %c0_103] : memref<88x512xf32, #tpu.memory_space<vmem>>, vector<8x512xf32>
    %c0_104 = arith.constant 0 : index
    %c0_105 = arith.constant 0 : index
    %432 = vector.load %arg4[%c0_104, %c0_105] : memref<128x512xf32, #tpu.memory_space<vmem>>, vector<128x512xf32>
    %cst_106 = arith.constant dense<0.000000e+00> : vector<8x512xf32>
    %433 = tpu.matmul %422, %432, %cst_106 {dimension_numbers = #tpu.dot_dimension_numbers<[1], [0], [0], [1], [0, 0, 1, 1], [], []>} : vector<8x128xf32>, vector<128x512xf32>, vector<8x512xf32> -> vector<8x512xf32>
    %434 = arith.addf %431, %433 : vector<8x512xf32>
    %435 = vector.extract_strided_slice %434 {offsets = [0, 0], sizes = [8, 128], strides = [1, 1]} : vector<8x512xf32> to vector<8x128xf32>
    %436 = arith.negf %435 : vector<8x128xf32>
    %437 = math.exp %436 : vector<8x128xf32>
    %cst_107 = arith.constant 1.000000e+00 : f32
    %438 = vector.broadcast %cst_107 : f32 to vector<8x128xf32>
    %439 = arith.addf %438, %437 : vector<8x128xf32>
    %440 = arith.divf %438, %439 : vector<8x128xf32>
    %441 = vector.extract_strided_slice %434 {offsets = [0, 128], sizes = [8, 128], strides = [1, 1]} : vector<8x512xf32> to vector<8x128xf32>
    %442 = arith.negf %441 : vector<8x128xf32>
    %443 = math.exp %442 : vector<8x128xf32>
    %cst_108 = arith.constant 1.000000e+00 : f32
    %444 = vector.broadcast %cst_108 : f32 to vector<8x128xf32>
    %445 = arith.addf %444, %443 : vector<8x128xf32>
    %446 = arith.divf %444, %445 : vector<8x128xf32>
    %447 = vector.extract_strided_slice %434 {offsets = [0, 256], sizes = [8, 128], strides = [1, 1]} : vector<8x512xf32> to vector<8x128xf32>
    %448 = math.tanh %447 : vector<8x128xf32>
    %449 = vector.extract_strided_slice %434 {offsets = [0, 384], sizes = [8, 128], strides = [1, 1]} : vector<8x512xf32> to vector<8x128xf32>
    %450 = arith.negf %449 : vector<8x128xf32>
    %451 = math.exp %450 : vector<8x128xf32>
    %cst_109 = arith.constant 1.000000e+00 : f32
    %452 = vector.broadcast %cst_109 : f32 to vector<8x128xf32>
    %453 = arith.addf %452, %451 : vector<8x128xf32>
    %454 = arith.divf %452, %453 : vector<8x128xf32>
    %455 = arith.mulf %446, %425 : vector<8x128xf32>
    %456 = arith.mulf %440, %448 : vector<8x128xf32>
    %457 = arith.addf %455, %456 : vector<8x128xf32>
    %458 = math.tanh %457 : vector<8x128xf32>
    %459 = arith.mulf %454, %458 : vector<8x128xf32>
    %cst_110 = arith.constant 1.000000e+01 : f32
    %460 = vector.broadcast %cst_110 : f32 to vector<8x1xf32>
    %461 = arith.cmpf ogt, %7, %460 : vector<8x1xf32>
    %cst_111 = arith.constant 0.000000e+00 : f32
    %462 = vector.shape_cast %461 : vector<8x1xi1> to vector<8x1xi1>
    %463 = vector.broadcast %462 : vector<8x1xi1> to vector<8x128xi1>
    %464 = vector.broadcast %cst_111 : f32 to vector<8x128xf32>
    %465 = arith.select %463, %459, %464 : vector<8x128xi1>, vector<8x128xf32>
    %466 = arith.addf %430, %465 : vector<8x128xf32>
    %467 = vector.broadcast %7 : vector<8x1xf32> to vector<8x128xf32>
    %468 = arith.divf %466, %467 : vector<8x128xf32>
    %c0_112 = arith.constant 0 : index
    %c0_113 = arith.constant 0 : index
    %469 = vector.load %arg7[%c0_112, %c0_113] : memref<128x32xf32, #tpu.memory_space<vmem>>, vector<128x32xf32>
    %cst_114 = arith.constant dense<0.000000e+00> : vector<8x32xf32>
    %470 = tpu.matmul %468, %469, %cst_114 {dimension_numbers = #tpu.dot_dimension_numbers<[1], [0], [0], [1], [0, 0, 1, 1], [], []>} : vector<8x128xf32>, vector<128x32xf32>, vector<8x32xf32> -> vector<8x32xf32>
    %c0_115 = arith.constant 0 : index
    %c0_116 = arith.constant 0 : index
    %471 = vector.load %arg6[%c0_115, %c0_116] : memref<8x112xf32, #tpu.memory_space<vmem>>, vector<8x112xf32>
    %c0_117 = arith.constant 0 : index
    %c0_118 = arith.constant 0 : index
    %472 = vector.load %arg8[%c0_117, %c0_118] : memref<112x32xf32, #tpu.memory_space<vmem>>, vector<112x32xf32>
    %cst_119 = arith.constant dense<0.000000e+00> : vector<8x32xf32>
    %473 = tpu.matmul %471, %472, %cst_119 {dimension_numbers = #tpu.dot_dimension_numbers<[1], [0], [0], [1], [0, 0, 1, 1], [], []>} : vector<8x112xf32>, vector<112x32xf32>, vector<8x32xf32> -> vector<8x32xf32>
    %474 = arith.addf %470, %473 : vector<8x32xf32>
    %c0_120 = arith.constant 0 : index
    %c0_121 = arith.constant 0 : index
    %475 = vector.load %arg9[%c0_120, %c0_121] : memref<1x32xf32, #tpu.memory_space<vmem>>, vector<1x32xf32>
    %476 = vector.broadcast %475 : vector<1x32xf32> to vector<8x32xf32>
    %477 = arith.addf %474, %476 : vector<8x32xf32>
    %478 = math.tanh %477 : vector<8x32xf32>
    %c0_122 = arith.constant 0 : index
    %c0_123 = arith.constant 0 : index
    %479 = vector.load %arg10[%c0_122, %c0_123] : memref<32x2xf32, #tpu.memory_space<vmem>>, vector<32x2xf32>
    %cst_124 = arith.constant dense<0.000000e+00> : vector<8x2xf32>
    %480 = tpu.matmul %478, %479, %cst_124 {dimension_numbers = #tpu.dot_dimension_numbers<[1], [0], [0], [1], [0, 0, 1, 1], [], []>} : vector<8x32xf32>, vector<32x2xf32>, vector<8x2xf32> -> vector<8x2xf32>
    %c0_125 = arith.constant 0 : index
    %c0_126 = arith.constant 0 : index
    %481 = vector.load %arg11[%c0_125, %c0_126] : memref<1x2xf32, #tpu.memory_space<vmem>>, vector<1x2xf32>
    %482 = vector.broadcast %481 : vector<1x2xf32> to vector<8x2xf32>
    %483 = arith.addf %480, %482 : vector<8x2xf32>
    %c0_127 = arith.constant 0 : index
    %c0_128 = arith.constant 0 : index
    %484 = vector.load %arg12[%c0_127, %c0_128] : memref<8x2xf32, #tpu.memory_space<vmem>>, vector<8x2xf32>
    tpu.vector_store %arg12[%c0_127, %c0_128], %483 {strides = array<i32>} : memref<8x2xf32, #tpu.memory_space<vmem>>, vector<8x2xf32>,
    return
  }
  func.func @transform_0(%arg0: i32) -> (i32, i32) {
    %c0_i32 = arith.constant 0 : i32
    %c0_i32_0 = arith.constant 0 : i32
    %c0_i32_1 = arith.constant 0 : i32
    return %c0_i32, %c0_i32_0 : i32, i32
  }
  func.func @transform_1(%arg0: i32) -> (i32, i32) {
    %c0_i32 = arith.constant 0 : i32
    %c0_i32_0 = arith.constant 0 : i32
    %c0_i32_1 = arith.constant 0 : i32
    return %c0_i32, %c0_i32_0 : i32, i32
  }
  func.func @transform_2(%arg0: i32) -> (i32, i32) {
    %c0_i32 = arith.constant 0 : i32
    %c0_i32_0 = arith.constant 0 : i32
    %c0_i32_1 = arith.constant 0 : i32
    return %c0_i32, %c0_i32_0 : i32, i32
  }
  func.func @transform_3(%arg0: i32) -> (i32, i32) {
    %c0_i32 = arith.constant 0 : i32
    %c0_i32_0 = arith.constant 0 : i32
    %c0_i32_1 = arith.constant 0 : i32
    return %c0_i32, %c0_i32_0 : i32, i32
  }
  func.func @transform_4(%arg0: i32) -> (i32, i32) {
    %c0_i32 = arith.constant 0 : i32
    %c0_i32_0 = arith.constant 0 : i32
    %c0_i32_1 = arith.constant 0 : i32
    return %c0_i32, %c0_i32_0 : i32, i32
  }
  func.func @transform_5(%arg0: i32) -> (i32, i32) {
    %c0_i32 = arith.constant 0 : i32
    %c0_i32_0 = arith.constant 0 : i32
    %c0_i32_1 = arith.constant 0 : i32
    return %c0_i32, %c0_i32_0 : i32, i32
  }
  func.func @transform_6(%arg0: i32) -> (i32, i32) {
    %c0_i32 = arith.constant 0 : i32
    %c0_i32_0 = arith.constant 0 : i32
    %c0_i32_1 = arith.constant 0 : i32
    return %c0_i32, %c0_i32_0 : i32, i32
  }
  func.func @transform_7(%arg0: i32) -> (i32, i32) {
    %c0_i32 = arith.constant 0 : i32
    %c0_i32_0 = arith.constant 0 : i32
    %c0_i32_1 = arith.constant 0 : i32
    return %c0_i32, %c0_i32_0 : i32, i32
  }
  func.func @transform_8(%arg0: i32) -> (i32, i32) {
    %c0_i32 = arith.constant 0 : i32
    %c0_i32_0 = arith.constant 0 : i32
    %c0_i32_1 = arith.constant 0 : i32
    return %c0_i32, %c0_i32_0 : i32, i32
  }
  func.func @transform_9(%arg0: i32) -> (i32, i32) {
    %c0_i32 = arith.constant 0 : i32
    %c0_i32_0 = arith.constant 0 : i32
    %c0_i32_1 = arith.constant 0 : i32
    return %c0_i32, %c0_i32_0 : i32, i32
  }
  func.func @transform_10(%arg0: i32) -> (i32, i32) {
    %c0_i32 = arith.constant 0 : i32
    %c0_i32_0 = arith.constant 0 : i32
    %c0_i32_1 = arith.constant 0 : i32
    return %c0_i32, %c0_i32_0 : i32, i32
  }
  func.func @transform_11(%arg0: i32) -> (i32, i32) {
    %c0_i32 = arith.constant 0 : i32
    %c0_i32_0 = arith.constant 0 : i32
    %c0_i32_1 = arith.constant 0 : i32
    return %c0_i32, %c0_i32_0 : i32, i32
  }
}

</mosaic_0001>

<llo_original>
// kernel: tpu_custom_call.1
$region0: #{tpu_custom_call.1}
  #allocation0 [shape = 'u32[]', space=smem, size = 0x4, offset = 0x4, fixed_abs, tag = 'smem constant byte address 0x4 - core index']
  #allocation1 [shape = 'u32[144,128]{1,0:T(1,128)}', space=vmem, size = 0x12000, scoped, tag = 'internal scratch']
  #allocation2 [shape = 'f32[88,512]{1,0:T(8,128)}', space=vmem, size = 0x2c000, scoped, tag = 'scratch operand']
  %s0 = inlined_call_operand.vmem [shape: f32[88,32], index: 0, kind: input, shape index: {}]
  %s1 = inlined_call_operand.vmem [shape: f32[8,1], index: 1, kind: input, shape index: {}]
  %s2 = inlined_call_operand.vmem [shape: f32[32,512], index: 2, kind: input, shape index: {}]
  %s3 = inlined_call_operand.hbm [shape: f32[128,512], index: 3, kind: input, shape index: {}]
  %s4 = inlined_call_operand.vmem [shape: f32[1,512], index: 4, kind: input, shape index: {}]
  %s5 = inlined_call_operand.vmem [shape: f32[8,112], index: 5, kind: input, shape index: {}]
  %s6 = inlined_call_operand.vmem [shape: f32[128,32], index: 6, kind: input, shape index: {}]
  %s7 = inlined_call_operand.vmem [shape: f32[112,32], index: 7, kind: input, shape index: {}]
  %s8 = inlined_call_operand.vmem [shape: f32[1,32], index: 8, kind: input, shape index: {}]
  %s9 = inlined_call_operand.vmem [shape: f32[32,2], index: 9, kind: input, shape index: {}]
  %s10 = inlined_call_operand.vmem [shape: f32[1,2], index: 10, kind: input, shape index: {}]
  %s11 = inlined_call_operand.vmem [shape: f32[8,2], index: 11, kind: output, shape index: {}]
  %s12 = sld [smem:[#allocation0]]
  $region58: #{tpu_custom_call.1} parent=0
    _
  %s14 = ssub.s32 1, %s12
  %s15 = scalar_select 0, %s14, %s12
  $region1: #{tpu_custom_call.1} parent=0
    #allocation3 [shape = 'u8[262144]{0}', space=vmem, size = 0x40000, scoped, tag = 'input window, operand 3, single buffered']
    #allocation4 [shape = 's32[1]{0}', space=sflag, size = 0x4, scoped, tag = 'scoped memory for tpu_custom_call.1']
    %16 = vsyncpa [#allocation4], 0
    // Predicated region
    $region2: #{tpu_custom_call.1} parent=1 // pred_check
      _
    $region3: #{tpu_custom_call.1} parent=1 // pred_check_branch
      %18 = sbr.rel (0) target = $region5
    $region4: #{tpu_custom_call.1} parent=1 // pred_region
      _
    $region5: #{tpu_custom_call.1} parent=1 // pred_fallthru
      _
    // Predicated region
    $region6: #{tpu_custom_call.1} parent=1 // pred_check
      _
    $region7: #{tpu_custom_call.1} parent=1 // pred_check_branch
      %20 = sbr.rel (0) target = $region9
    $region8: #{tpu_custom_call.1} parent=1 // pred_region
      _
    $region9: #{tpu_custom_call.1} parent=1 // pred_fallthru
      _
    // Predicated region
    $region10: #{tpu_custom_call.1} parent=1 // pred_check
      _
    $region11: #{tpu_custom_call.1} parent=1 // pred_check_branch
      %22 = sbr.rel (0) target = $region13
    $region12: #{tpu_custom_call.1} parent=1 // pred_region
      _
    $region13: #{tpu_custom_call.1} parent=1 // pred_fallthru
      _
    // Predicated region
    $region14: #{tpu_custom_call.1} parent=1 // pred_check
      _
    $region15: #{tpu_custom_call.1} parent=1 // pred_check_branch
      %24 = sbr.rel (0) target = $region17
    $region16: #{tpu_custom_call.1} parent=1 // pred_region
      %s26 = ssub.s32 8192, 8192
      %27 = vsyncadd [#allocation4], %s26
      %s28 = sshll.u32 [#allocation3], 4
      %s29 = int_to_ptr.vmem [resolvable:$true] %s28
      %34 = dma.hbm_to_vmem [thread:$0]  %s3, 8192, %s29, [#allocation4], 512, 512, 32
    $region17: #{tpu_custom_call.1} parent=1 // pred_fallthru
      _
    // Predicated region
    $region18: #{tpu_custom_call.1} parent=1 // pred_check
      _
    $region19: #{tpu_custom_call.1} parent=1 // pred_check_branch
      %36 = sbr.rel (0) target = $region21
    $region20: #{tpu_custom_call.1} parent=1 // pred_region
      _
    $region21: #{tpu_custom_call.1} parent=1 // pred_fallthru
      _
    // Predicated region
    $region22: #{tpu_custom_call.1} parent=1 // pred_check
      _
    $region23: #{tpu_custom_call.1} parent=1 // pred_check_branch
      %38 = sbr.rel (0) target = $region25
    $region24: #{tpu_custom_call.1} parent=1 // pred_region
      _
    $region25: #{tpu_custom_call.1} parent=1 // pred_fallthru
      _
    // Predicated region
    $region26: #{tpu_custom_call.1} parent=1 // pred_check
      _
    $region27: #{tpu_custom_call.1} parent=1 // pred_check_branch
      %40 = sbr.rel (0) target = $region29
    $region28: #{tpu_custom_call.1} parent=1 // pred_region
      _
    $region29: #{tpu_custom_call.1} parent=1 // pred_fallthru
      _
    // Predicated region
    $region30: #{tpu_custom_call.1} parent=1 // pred_check
      _
    $region31: #{tpu_custom_call.1} parent=1 // pred_check_branch
      %42 = sbr.rel (0) target = $region33
    $region32: #{tpu_custom_call.1} parent=1 // pred_region
      _
    $region33: #{tpu_custom_call.1} parent=1 // pred_fallthru
      _
    // Predicated region
    $region34: #{tpu_custom_call.1} parent=1 // pred_check
      _
    $region35: #{tpu_custom_call.1} parent=1 // pred_check_branch
      %44 = sbr.rel (0) target = $region37
    $region36: #{tpu_custom_call.1} parent=1 // pred_region
      _
    $region37: #{tpu_custom_call.1} parent=1 // pred_fallthru
      _
    // Predicated region
    $region38: #{tpu_custom_call.1} parent=1 // pred_check
      _
    $region39: #{tpu_custom_call.1} parent=1 // pred_check_branch
      %46 = sbr.rel (0) target = $region41
    $region40: #{tpu_custom_call.1} parent=1 // pred_region
      _
    $region41: #{tpu_custom_call.1} parent=1 // pred_fallthru
      _
    // Predicated region
    $region42: #{tpu_custom_call.1} parent=1 // pred_check
      _
    $region43: #{tpu_custom_call.1} parent=1 // pred_check_branch
      %48 = sbr.rel (0) target = $region45
    $region44: #{tpu_custom_call.1} parent=1 // pred_region
      _
    $region45: #{tpu_custom_call.1} parent=1 // pred_fallthru
      _
    // Predicated region
    $region46: #{tpu_custom_call.1} parent=1 // pred_check
      _
    $region47: #{tpu_custom_call.1} parent=1 // pred_check_branch
      %50 = sbr.rel (0) target = $region49
    $region48: #{tpu_custom_call.1} parent=1 // pred_region
      %51 = dma.done [#allocation4], 8192
    $region49: #{tpu_custom_call.1} parent=1 // pred_fallthru
      _
    %v52 = vld [vmem:[%s0] sm:$0xff]
    %v53 = vld [vmem:[%s0 + $0x8] sm:$0xff]
    %v54 = vld [vmem:[%s0 + $0x10] sm:$0xff]
    %v55 = vld [vmem:[%s0 + $0x18] sm:$0xff]
    %v56 = vld [vmem:[%s0 + $0x20] sm:$0xff]
    %v57 = vld [vmem:[%s0 + $0x28] sm:$0xff]
    %v58 = vld [vmem:[%s0 + $0x30] sm:$0xff]
    %v59 = vld [vmem:[%s0 + $0x38] sm:$0xff]
    %v60 = vld [vmem:[%s0 + $0x40] sm:$0xff]
    %v61 = vld [vmem:[%s0 + $0x48] sm:$0xff]
    %v62 = vld [vmem:[%s0 + $0x50] sm:$0xff]
    %v63 = vld [vmem:[%s2] sm:$0xff]
    %v64 = vld [vmem:[%s2 + $0x8] sm:$0xff]
    %v65 = vld [vmem:[%s2 + $0x10] sm:$0xff]
    %v66 = vld [vmem:[%s2 + $0x18] sm:$0xff]
    %v67 = vld [vmem:[%s2 + $0x20] sm:$0xff]
    %v68 = vld [vmem:[%s2 + $0x28] sm:$0xff]
    %v69 = vld [vmem:[%s2 + $0x30] sm:$0xff]
    %v70 = vld [vmem:[%s2 + $0x38] sm:$0xff]
    %v71 = vld [vmem:[%s2 + $0x40] sm:$0xff]
    %v72 = vld [vmem:[%s2 + $0x48] sm:$0xff]
    %v73 = vld [vmem:[%s2 + $0x50] sm:$0xff]
    %v74 = vld [vmem:[%s2 + $0x58] sm:$0xff]
    %v75 = vld [vmem:[%s2 + $0x60] sm:$0xff]
    %v76 = vld [vmem:[%s2 + $0x68] sm:$0xff]
    %v77 = vld [vmem:[%s2 + $0x70] sm:$0xff]
    %v78 = vld [vmem:[%s2 + $0x78] sm:$0xff]
    %v79 = vld [vmem:[%s4] sm:$0xf]
    %v81 = vlaneseq
    %v82 = vshrl.u32 %v81, 7
    %v83 = vsub.s32 0, %v82
    %v84 = vrot.slane %v79, %v83
    %v85 = vlaneseq
    %v86 = vshrl.u32 %v85, 7
    %v87 = vsub.s32 1, %v86
    %v88 = vrot.slane %v79, %v87
    %v89 = vlaneseq
    %v90 = vshrl.u32 %v89, 7
    %v91 = vsub.s32 2, %v90
    %v92 = vrot.slane %v79, %v91
    %v93 = vlaneseq
    %v94 = vshrl.u32 %v93, 7
    %v95 = vsub.s32 3, %v94
    %v96 = vrot.slane %v79, %v95
    %vm101 = vcmask 261120
    %v103 = vsel %vm101, %v52, 0
    %v106 = vsel %vm101, %v53, 0
    %v109 = vsel %vm101, %v54, 0
    %v112 = vsel %vm101, %v55, 0
    %v115 = vsel %vm101, %v56, 0
    %v118 = vsel %vm101, %v57, 0
    %v121 = vsel %vm101, %v58, 0
    %v124 = vsel %vm101, %v59, 0
    %v127 = vsel %vm101, %v60, 0
    %v130 = vsel %vm101, %v61, 0
    %v133 = vsel %vm101, %v62, 0
    %135 = vmatprep.subr.mxu0 %v64
    %136 = vmatpush1.msra.mxu0 %v63
    %137 = vmatprep.subr.mxu0 %v68
    %138 = vmatpush1.msra.mxu0 %v67
    %139 = vmatprep.subr.mxu0 %v72
    %140 = vmatpush1.msra.mxu0 %v71
    %141 = vmatprep.subr.mxu0 %v76
    %142 = vmatpush1.msra.mxu0 %v75
    %143 = vmatprep.subr.mxu0 0.0
    %144 = vmatpush1.msra.mxu0 0.0
    %145 = vmatprep.subr.mxu0 0.0
    %146 = vmatpush1.msra.mxu0 0.0
    %147 = vmatprep.subr.mxu0 0.0
    %148 = vmatpush1.msra.mxu0 0.0
    %149 = vmatprep.subr.mxu0 0.0
    %150 = vmatpush1.msra.mxu0 0.0
    %151 = vmatprep.subr.mxu0 0.0
    %152 = vmatpush1.msra.mxu0 0.0
    %153 = vmatprep.subr.mxu0 0.0
    %154 = vmatpush1.msra.mxu0 0.0
    %155 = vmatprep.subr.mxu0 0.0
    %156 = vmatpush1.msra.mxu0 0.0
    %157 = vmatprep.subr.mxu0 0.0
    %158 = vmatpush1.msra.mxu0 0.0
    %159 = vmatprep.subr.mxu0 0.0
    %160 = vmatpush1.msra.mxu0 0.0
    %161 = vmatprep.subr.mxu0 0.0
    %162 = vmatpush1.msra.mxu0 0.0
    %163 = vmatprep.subr.mxu0 0.0
    %164 = vmatpush1.msra.mxu0 0.0
    %165 = vmatprep.subr.mxu0 0.0
    %166 = vmatpush1.msra.mxu0 0.0
    %167 = vmatprep.subr.mxu0 0.0
    %168 = vmatpush1.msra.mxu0 0.0
    %169 = vmatprep.subr.mxu0 0.0
    %170 = vmatpush1.msra.mxu0 0.0
    %171 = vmatprep.subr.mxu0 0.0
    %172 = vmatpush1.msra.mxu0 0.0
    %173 = vmatprep.subr.mxu0 0.0
    %174 = vmatpush1.msra.mxu0 0.0
    %175 = vmatprep.subr.mxu0 0.0
    %176 = vmatpush1.msra.mxu0 0.0
    %177 = vmatprep.subr.mxu0 0.0
    %178 = vmatpush1.msra.mxu0 0.0
    %179 = vmatprep.subr.mxu0 0.0
    %180 = vmatpush1.msra.mxu0 0.0
    %181 = vmatprep.subr.mxu0 0.0
    %182 = vmatpush1.msra.mxu0 0.0
    %183 = vmatprep.subr.mxu0 0.0
    %184 = vmatpush1.msra.mxu0 0.0
    %185 = vmatprep.subr.mxu0 0.0
    %186 = vmatpush1.msra.mxu0 0.0
    %187 = vmatprep.subr.mxu0 0.0
    %188 = vmatpush1.msra.mxu0 0.0
    %189 = vmatprep.subr.mxu0 0.0
    %190 = vmatpush1.msra.mxu0 0.0
    %191 = vmatprep.subr.mxu0 0.0
    %192 = vmatpush1.msra.mxu0 0.0
    %193 = vmatprep.subr.mxu0 0.0
    %194 = vmatpush1.msra.mxu0 0.0
    %195 = vmatprep.subr.mxu0 0.0
    %196 = vmatpush1.msra.mxu0 0.0
    %197 = vmatprep.subr.mxu0 0.0
    %198 = vmatpush1.msra.mxu0 0.0
    %199 = vmatprep.mubr.f32.mxu0 0.0
    %200 = vmatmul.mubr.f32.gmra.mrb[0].mxu0 %v103
    %v201 = vpop.f32.mrb[0].mxu0
    %v202 = vadd.f32 %v84, %v201
    %v203 = vpop.f32.mrb[0].mxu0
    %v204 = vadd.f32 %v88, %v203
    %205 = vmatprep.mubr.f32.mxu0 0.0
    %206 = vmatmul.mubr.f32.gmra.mrb[0].mxu0 %v106
    %v207 = vpop.f32.mrb[0].mxu0
    %v208 = vadd.f32 %v84, %v207
    %v209 = vpop.f32.mrb[0].mxu0
    %v210 = vadd.f32 %v88, %v209
    %211 = vmatprep.mubr.f32.mxu0 0.0
    %212 = vmatmul.mubr.f32.gmra.mrb[0].mxu0 %v109
    %v213 = vpop.f32.mrb[0].mxu0
    %v214 = vadd.f32 %v84, %v213
    %v215 = vpop.f32.mrb[0].mxu0
    %v216 = vadd.f32 %v88, %v215
    %217 = vmatprep.mubr.f32.mxu0 0.0
    %218 = vmatmul.mubr.f32.gmra.mrb[0].mxu0 %v112
    %v219 = vpop.f32.mrb[0].mxu0
    %v220 = vadd.f32 %v84, %v219
    %v221 = vpop.f32.mrb[0].mxu0
    %v222 = vadd.f32 %v88, %v221
    %223 = vmatprep.mubr.f32.mxu0 0.0
    %224 = vmatmul.mubr.f32.gmra.mrb[0].mxu0 %v115
    %v225 = vpop.f32.mrb[0].mxu0
    %v226 = vadd.f32 %v84, %v225
    %v227 = vpop.f32.mrb[0].mxu0
    %v228 = vadd.f32 %v88, %v227
    %229 = vmatprep.mubr.f32.mxu0 0.0
    %230 = vmatmul.mubr.f32.gmra.mrb[0].mxu0 %v118
    %v231 = vpop.f32.mrb[0].mxu0
    %v232 = vadd.f32 %v84, %v231
    %v233 = vpop.f32.mrb[0].mxu0
    %v234 = vadd.f32 %v88, %v233
    %235 = vmatprep.mubr.f32.mxu0 0.0
    %236 = vmatmul.mubr.f32.gmra.mrb[0].mxu0 %v121
    %v237 = vpop.f32.mrb[0].mxu0
    %v238 = vadd.f32 %v84, %v237
    %v239 = vpop.f32.mrb[0].mxu0
    %v240 = vadd.f32 %v88, %v239
    %241 = vmatprep.mubr.f32.mxu0 0.0
    %242 = vmatmul.mubr.f32.gmra.mrb[0].mxu0 %v124
    %v243 = vpop.f32.mrb[0].mxu0
    %v244 = vadd.f32 %v84, %v243
    %v245 = vpop.f32.mrb[0].mxu0
    %v246 = vadd.f32 %v88, %v245
    %247 = vmatprep.mubr.f32.mxu0 0.0
    %248 = vmatmul.mubr.f32.gmra.mrb[0].mxu0 %v127
    %v249 = vpop.f32.mrb[0].mxu0
    %v250 = vadd.f32 %v84, %v249
    %v251 = vpop.f32.mrb[0].mxu0
    %v252 = vadd.f32 %v88, %v251
    %253 = vmatprep.mubr.f32.mxu0 0.0
    %254 = vmatmul.mubr.f32.gmra.mrb[0].mxu0 %v130
    %v255 = vpop.f32.mrb[0].mxu0
    %v256 = vadd.f32 %v84, %v255
    %v257 = vpop.f32.mrb[0].mxu0
    %v258 = vadd.f32 %v88, %v257
    %259 = vmatprep.mubr.f32.mxu0 0.0
    %260 = vmatmul.mubr.f32.gmra.mrb[0].mxu0 %v133
    %v261 = vpop.f32.mrb[0].mxu0
    %v262 = vadd.f32 %v84, %v261
    %v263 = vpop.f32.mrb[0].mxu0
    %v264 = vadd.f32 %v88, %v263
    %265 = vdwg.mxu0
    %266 = vmatprep.subr.mxu0 %v66
    %267 = vmatpush1.msra.mxu0 %v65
    %268 = vmatprep.subr.mxu0 %v70
    %269 = vmatpush1.msra.mxu0 %v69
    %270 = vmatprep.subr.mxu0 %v74
    %271 = vmatpush1.msra.mxu0 %v73
    %272 = vmatprep.subr.mxu0 %v78
    %273 = vmatpush1.msra.mxu0 %v77
    %274 = vmatprep.subr.mxu0 0.0
    %275 = vmatpush1.msra.mxu0 0.0
    %276 = vmatprep.subr.mxu0 0.0
    %277 = vmatpush1.msra.mxu0 0.0
    %278 = vmatprep.subr.mxu0 0.0
    %279 = vmatpush1.msra.mxu0 0.0
    %280 = vmatprep.subr.mxu0 0.0
    %281 = vmatpush1.msra.mxu0 0.0
    %282 = vmatprep.subr.mxu0 0.0
    %283 = vmatpush1.msra.mxu0 0.0
    %284 = vmatprep.subr.mxu0 0.0
    %285 = vmatpush1.msra.mxu0 0.0
    %286 = vmatprep.subr.mxu0 0.0
    %287 = vmatpush1.msra.mxu0 0.0
    %288 = vmatprep.subr.mxu0 0.0
    %289 = vmatpush1.msra.mxu0 0.0
    %290 = vmatprep.subr.mxu0 0.0
    %291 = vmatpush1.msra.mxu0 0.0
    %292 = vmatprep.subr.mxu0 0.0
    %293 = vmatpush1.msra.mxu0 0.0
    %294 = vmatprep.subr.mxu0 0.0
    %295 = vmatpush1.msra.mxu0 0.0
    %296 = vmatprep.subr.mxu0 0.0
    %297 = vmatpush1.msra.mxu0 0.0
    %298 = vmatprep.subr.mxu0 0.0
    %299 = vmatpush1.msra.mxu0 0.0
    %300 = vmatprep.subr.mxu0 0.0
    %301 = vmatpush1.msra.mxu0 0.0
    %302 = vmatprep.subr.mxu0 0.0
    %303 = vmatpush1.msra.mxu0 0.0
    %304 = vmatprep.subr.mxu0 0.0
    %305 = vmatpush1.msra.mxu0 0.0
    %306 = vmatprep.subr.mxu0 0.0
    %307 = vmatpush1.msra.mxu0 0.0
    %308 = vmatprep.subr.mxu0 0.0
    %309 = vmatpush1.msra.mxu0 0.0
    %310 = vmatprep.subr.mxu0 0.0
    %311 = vmatpush1.msra.mxu0 0.0
    %312 = vmatprep.subr.mxu0 0.0
    %313 = vmatpush1.msra.mxu0 0.0
    %314 = vmatprep.subr.mxu0 0.0
    %315 = vmatpush1.msra.mxu0 0.0
    %316 = vmatprep.subr.mxu0 0.0
    %317 = vmatpush1.msra.mxu0 0.0
    %318 = vmatprep.subr.mxu0 0.0
    %319 = vmatpush1.msra.mxu0 0.0
    %320 = vmatprep.subr.mxu0 0.0
    %321 = vmatpush1.msra.mxu0 0.0
    %322 = vmatprep.subr.mxu0 0.0
    %323 = vmatpush1.msra.mxu0 0.0
    %324 = vmatprep.subr.mxu0 0.0
    %325 = vmatpush1.msra.mxu0 0.0
    %326 = vmatprep.subr.mxu0 0.0
    %327 = vmatpush1.msra.mxu0 0.0
    %328 = vmatprep.subr.mxu0 0.0
    %329 = vmatpush1.msra.mxu0 0.0
    %330 = vmatprep.mubr.f32.mxu0 0.0
    %331 = vmatmul.mubr.f32.gmra.mrb[0].mxu0 %v103
    %v332 = vpop.f32.mrb[0].mxu0
    %v333 = vadd.f32 %v92, %v332
    %v334 = vpop.f32.mrb[0].mxu0
    %v335 = vadd.f32 %v96, %v334
    %336 = vmatprep.mubr.f32.mxu0 0.0
    %337 = vmatmul.mubr.f32.gmra.mrb[0].mxu0 %v106
    %v338 = vpop.f32.mrb[0].mxu0
    %v339 = vadd.f32 %v92, %v338
    %v340 = vpop.f32.mrb[0].mxu0
    %v341 = vadd.f32 %v96, %v340
    %342 = vmatprep.mubr.f32.mxu0 0.0
    %343 = vmatmul.mubr.f32.gmra.mrb[0].mxu0 %v109
    %v344 = vpop.f32.mrb[0].mxu0
    %v345 = vadd.f32 %v92, %v344
    %v346 = vpop.f32.mrb[0].mxu0
    %v347 = vadd.f32 %v96, %v346
    %348 = vmatprep.mubr.f32.mxu0 0.0
    %349 = vmatmul.mubr.f32.gmra.mrb[0].mxu0 %v112
    %v350 = vpop.f32.mrb[0].mxu0
    %v351 = vadd.f32 %v92, %v350
    %v352 = vpop.f32.mrb[0].mxu0
    %v353 = vadd.f32 %v96, %v352
    %354 = vmatprep.mubr.f32.mxu0 0.0
    %355 = vmatmul.mubr.f32.gmra.mrb[0].mxu0 %v115
    %v356 = vpop.f32.mrb[0].mxu0
    %v357 = vadd.f32 %v92, %v356
    %v358 = vpop.f32.mrb[0].mxu0
    %v359 = vadd.f32 %v96, %v358
    %360 = vmatprep.mubr.f32.mxu0 0.0
    %361 = vmatmul.mubr.f32.gmra.mrb[0].mxu0 %v118
    %v362 = vpop.f32.mrb[0].mxu0
    %v363 = vadd.f32 %v92, %v362
    %v364 = vpop.f32.mrb[0].mxu0
    %v365 = vadd.f32 %v96, %v364
    %366 = vmatprep.mubr.f32.mxu0 0.0
    %367 = vmatmul.mubr.f32.gmra.mrb[0].mxu0 %v121
    %v368 = vpop.f32.mrb[0].mxu0
    %v369 = vadd.f32 %v92, %v368
    %v370 = vpop.f32.mrb[0].mxu0
    %v371 = vadd.f32 %v96, %v370
    %372 = vmatprep.mubr.f32.mxu0 0.0
    %373 = vmatmul.mubr.f32.gmra.mrb[0].mxu0 %v124
    %v374 = vpop.f32.mrb[0].mxu0
    %v375 = vadd.f32 %v92, %v374
    %v376 = vpop.f32.mrb[0].mxu0
    %v377 = vadd.f32 %v96, %v376
    %378 = vmatprep.mubr.f32.mxu0 0.0
    %379 = vmatmul.mubr.f32.gmra.mrb[0].mxu0 %v127
    %v380 = vpop.f32.mrb[0].mxu0
    %v381 = vadd.f32 %v92, %v380
    %v382 = vpop.f32.mrb[0].mxu0
    %v383 = vadd.f32 %v96, %v382
    %384 = vmatprep.mubr.f32.mxu0 0.0
    %385 = vmatmul.mubr.f32.gmra.mrb[0].mxu0 %v130
    %v386 = vpop.f32.mrb[0].mxu0
    %v387 = vadd.f32 %v92, %v386
    %v388 = vpop.f32.mrb[0].mxu0
    %v389 = vadd.f32 %v96, %v388
    %390 = vmatprep.mubr.f32.mxu0 0.0
    %391 = vmatmul.mubr.f32.gmra.mrb[0].mxu0 %v133
    %v392 = vpop.f32.mrb[0].mxu0
    %v393 = vadd.f32 %v92, %v392
    %v394 = vpop.f32.mrb[0].mxu0
    %v395 = vadd.f32 %v96, %v394
    %396 = vdwg.mxu0
    %397 = vst [vmem:[#allocation2] sm:$0xff] %v202
    %398 = vst [vmem:[#allocation2 + $0x8] sm:$0xff] %v204
    %399 = vst [vmem:[#allocation2 + $0x10] sm:$0xff] %v333
    %400 = vst [vmem:[#allocation2 + $0x18] sm:$0xff] %v335
    %401 = vst [vmem:[#allocation2 + $0x20] sm:$0xff] %v208
    %402 = vst [vmem:[#allocation2 + $0x28] sm:$0xff] %v210
    %403 = vst [vmem:[#allocation2 + $0x30] sm:$0xff] %v339
    %404 = vst [vmem:[#allocation2 + $0x38] sm:$0xff] %v341
    %405 = vst [vmem:[#allocation2 + $0x40] sm:$0xff] %v214
    %406 = vst [vmem:[#allocation2 + $0x48] sm:$0xff] %v216
    %407 = vst [vmem:[#allocation2 + $0x50] sm:$0xff] %v345
    %408 = vst [vmem:[#allocation2 + $0x58] sm:$0xff] %v347
    %409 = vst [vmem:[#allocation2 + $0x60] sm:$0xff] %v220
    %410 = vst [vmem:[#allocation2 + $0x68] sm:$0xff] %v222
    %411 = vst [vmem:[#allocation2 + $0x70] sm:$0xff] %v351
    %412 = vst [vmem:[#allocation2 + $0x78] sm:$0xff] %v353
    %413 = vst [vmem:[#allocation2 + $0x80] sm:$0xff] %v226
    %414 = vst [vmem:[#allocation2 + $0x88] sm:$0xff] %v228
    %415 = vst [vmem:[#allocation2 + $0x90] sm:$0xff] %v357
    %416 = vst [vmem:[#allocation2 + $0x98] sm:$0xff] %v359
    %417 = vst [vmem:[#allocation2 + $0xa0] sm:$0xff] %v232
    %418 = vst [vmem:[#allocation2 + $0xa8] sm:$0xff] %v234
    %419 = vst [vmem:[#allocation2 + $0xb0] sm:$0xff] %v363
    %420 = vst [vmem:[#allocation2 + $0xb8] sm:$0xff] %v365
    %421 = vst [vmem:[#allocation2 + $0xc0] sm:$0xff] %v238
    %422 = vst [vmem:[#allocation2 + $0xc8] sm:$0xff] %v240
    %423 = vst [vmem:[#allocation2 + $0xd0] sm:$0xff] %v369
    %424 = vst [vmem:[#allocation2 + $0xd8] sm:$0xff] %v371
    %425 = vst [vmem:[#allocation2 + $0xe0] sm:$0xff] %v244
    %426 = vst [vmem:[#allocation2 + $0xe8] sm:$0xff] %v246
    %427 = vst [vmem:[#allocation2 + $0xf0] sm:$0xff] %v375
    %428 = vst [vmem:[#allocation2 + $0xf8] sm:$0xff] %v377
    %429 = vst [vmem:[#allocation2 + $0x100] sm:$0xff] %v250
    %430 = vst [vmem:[#allocation2 + $0x108] sm:$0xff] %v252
    %431 = vst [vmem:[#allocation2 + $0x110] sm:$0xff] %v381
    %432 = vst [vmem:[#allocation2 + $0x118] sm:$0xff] %v383
    %433 = vst [vmem:[#allocation2 + $0x120] sm:$0xff] %v256
    %434 = vst [vmem:[#allocation2 + $0x128] sm:$0xff] %v258
    %435 = vst [vmem:[#allocation2 + $0x130] sm:$0xff] %v387
    %436 = vst [vmem:[#allocation2 + $0x138] sm:$0xff] %v389
    %437 = vst [vmem:[#allocation2 + $0x140] sm:$0xff] %v262
    %438 = vst [vmem:[#allocation2 + $0x148] sm:$0xff] %v264
    %439 = vst [vmem:[#allocation2 + $0x150] sm:$0xff] %v393
    %440 = vst [vmem:[#allocation2 + $0x158] sm:$0xff] %v395
    %v441 = vld [vmem:[%s1] sm:$0xff]
    %v442 = vld [vmem:[#allocation2] sm:$0xff]
    %v443 = vld [vmem:[#allocation2 + $0x8] sm:$0xff]
    %v444 = vld [vmem:[#allocation2 + $0x10] sm:$0xff]
    %v445 = vld [vmem:[#allocation2 + $0x18] sm:$0xff]
    %v446 = vld [vmem:[#allocation3] sm:$0xff]
    %v447 = vld [vmem:[#allocation3 + $0x8] sm:$0xff]
    %v448 = vld [vmem:[#allocation3 + $0x10] sm:$0xff]
    %v449 = vld [vmem:[#allocation3 + $0x18] sm:$0xff]
    %v450 = vld [vmem:[#allocation3 + $0x20] sm:$0xff]
    %v451 = vld [vmem:[#allocation3 + $0x28] sm:$0xff]
    %v452 = vld [vmem:[#allocation3 + $0x30] sm:$0xff]
    %v453 = vld [vmem:[#allocation3 + $0x38] sm:$0xff]
    %v454 = vld [vmem:[#allocation3 + $0x40] sm:$0xff]
    %v455 = vld [vmem:[#allocation3 + $0x48] sm:$0xff]
    %v456 = vld [vmem:[#allocation3 + $0x50] sm:$0xff]
    %v457 = vld [vmem:[#allocation3 + $0x58] sm:$0xff]
    %v458 = vld [vmem:[#allocation3 + $0x60] sm:$0xff]
    %v459 = vld [vmem:[#allocation3 + $0x68] sm:$0xff]
    %v460 = vld [vmem:[#allocation3 + $0x70] sm:$0xff]
    %v461 = vld [vmem:[#allocation3 + $0x78] sm:$0xff]
    %v462 = vld [vmem:[#allocation3 + $0x80] sm:$0xff]
    %v463 = vld [vmem:[#allocation3 + $0x88] sm:$0xff]
    %v464 = vld [vmem:[#allocation3 + $0x90] sm:$0xff]
    %v465 = vld [vmem:[#allocation3 + $0x98] sm:$0xff]
    %v466 = vld [vmem:[#allocation3 + $0xa0] sm:$0xff]
    %v467 = vld [vmem:[#allocation3 + $0xa8] sm:$0xff]
    %v468 = vld [vmem:[#allocation3 + $0xb0] sm:$0xff]
    %v469 = vld [vmem:[#allocation3 + $0xb8] sm:$0xff]
    %v470 = vld [vmem:[#allocation3 + $0xc0] sm:$0xff]
    %v471 = vld [vmem:[#allocation3 + $0xc8] sm:$0xff]
    %v472 = vld [vmem:[#allocation3 + $0xd0] sm:$0xff]
    %v473 = vld [vmem:[#allocation3 + $0xd8] sm:$0xff]
    %v474 = vld [vmem:[#allocation3 + $0xe0] sm:$0xff]
    %v475 = vld [vmem:[#allocation3 + $0xe8] sm:$0xff]
    %v476 = vld [vmem:[#allocation3 + $0xf0] sm:$0xff]
    %v477 = vld [vmem:[#allocation3 + $0xf8] sm:$0xff]
    %v478 = vld [vmem:[#allocation3 + $0x100] sm:$0xff]
    %v479 = vld [vmem:[#allocation3 + $0x108] sm:$0xff]
    %v480 = vld [vmem:[#allocation3 + $0x110] sm:$0xff]
    %v481 = vld [vmem:[#allocation3 + $0x118] sm:$0xff]
    %v482 = vld [vmem:[#allocation3 + $0x120] sm:$0xff]
    %v483 = vld [vmem:[#allocation3 + $0x128] sm:$0xff]
    %v484 = vld [vmem:[#allocation3 + $0x130] sm:$0xff]
    %v485 = vld [vmem:[#allocation3 + $0x138] sm:$0xff]
    %v486 = vld [vmem:[#allocation3 + $0x140] sm:$0xff]
    %v487 = vld [vmem:[#allocation3 + $0x148] sm:$0xff]
    %v488 = vld [vmem:[#allocation3 + $0x150] sm:$0xff]
    %v489 = vld [vmem:[#allocation3 + $0x158] sm:$0xff]
    %v490 = vld [vmem:[#allocation3 + $0x160] sm:$0xff]
    %v491 = vld [vmem:[#allocation3 + $0x168] sm:$0xff]
    %v492 = vld [vmem:[#allocation3 + $0x170] sm:$0xff]
    %v493 = vld [vmem:[#allocation3 + $0x178] sm:$0xff]
    %v494 = vld [vmem:[#allocation3 + $0x180] sm:$0xff]
    %v495 = vld [vmem:[#allocation3 + $0x188] sm:$0xff]
    %v496 = vld [vmem:[#allocation3 + $0x190] sm:$0xff]
    %v497 = vld [vmem:[#allocation3 + $0x198] sm:$0xff]
    %v498 = vld [vmem:[#allocation3 + $0x1a0] sm:$0xff]
    %v499 = vld [vmem:[#allocation3 + $0x1a8] sm:$0xff]
    %v500 = vld [vmem:[#allocation3 + $0x1b0] sm:$0xff]
    %v501 = vld [vmem:[#allocation3 + $0x1b8] sm:$0xff]
    %v502 = vld [vmem:[#allocation3 + $0x1c0] sm:$0xff]
    %v503 = vld [vmem:[#allocation3 + $0x1c8] sm:$0xff]
    %v504 = vld [vmem:[#allocation3 + $0x1d0] sm:$0xff]
    %v505 = vld [vmem:[#allocation3 + $0x1d8] sm:$0xff]
    %v506 = vld [vmem:[#allocation3 + $0x1e0] sm:$0xff]
    %v507 = vld [vmem:[#allocation3 + $0x1e8] sm:$0xff]
    %v508 = vld [vmem:[#allocation3 + $0x1f0] sm:$0xff]
    %v509 = vld [vmem:[#allocation3 + $0x1f8] sm:$0xff]
    %510 = vmatprep.subr.mxu0 %v447
    %511 = vmatpush1.msra.mxu0 %v446
    %512 = vmatprep.subr.mxu0 %v451
    %513 = vmatpush1.msra.mxu0 %v450
    %514 = vmatprep.subr.mxu0 %v455
    %515 = vmatpush1.msra.mxu0 %v454
    %516 = vmatprep.subr.mxu0 %v459
    %517 = vmatpush1.msra.mxu0 %v458
    %518 = vmatprep.subr.mxu0 %v463
    %519 = vmatpush1.msra.mxu0 %v462
    %520 = vmatprep.subr.mxu0 %v467
    %521 = vmatpush1.msra.mxu0 %v466
    %522 = vmatprep.subr.mxu0 %v471
    %523 = vmatpush1.msra.mxu0 %v470
    %524 = vmatprep.subr.mxu0 %v475
    %525 = vmatpush1.msra.mxu0 %v474
    %526 = vmatprep.subr.mxu0 %v479
    %527 = vmatpush1.msra.mxu0 %v478
    %528 = vmatprep.subr.mxu0 %v483
    %529 = vmatpush1.msra.mxu0 %v482
    %530 = vmatprep.subr.mxu0 %v487
    %531 = vmatpush1.msra.mxu0 %v486
    %532 = vmatprep.subr.mxu0 %v491
    %533 = vmatpush1.msra.mxu0 %v490
    %534 = vmatprep.subr.mxu0 %v495
    %535 = vmatpush1.msra.mxu0 %v494
    %536 = vmatprep.subr.mxu0 %v499
    %537 = vmatpush1.msra.mxu0 %v498
    %538 = vmatprep.subr.mxu0 %v503
    %539 = vmatpush1.msra.mxu0 %v502
    %540 = vmatprep.subr.mxu0 %v507
    %541 = vmatpush1.msra.mxu0 %v506
    %542 = vmatprep.subr.mxu0 0.0
    %543 = vmatpush1.msra.mxu0 0.0
    %544 = vmatprep.subr.mxu0 0.0
    %545 = vmatpush1.msra.mxu0 0.0
    %546 = vmatprep.subr.mxu0 0.0
    %547 = vmatpush1.msra.mxu0 0.0
    %548 = vmatprep.subr.mxu0 0.0
    %549 = vmatpush1.msra.mxu0 0.0
    %550 = vmatprep.subr.mxu0 0.0
    %551 = vmatpush1.msra.mxu0 0.0
    %552 = vmatprep.subr.mxu0 0.0
    %553 = vmatpush1.msra.mxu0 0.0
    %554 = vmatprep.subr.mxu0 0.0
    %555 = vmatpush1.msra.mxu0 0.0
    %556 = vmatprep.subr.mxu0 0.0
    %557 = vmatpush1.msra.mxu0 0.0
    %558 = vmatprep.subr.mxu0 0.0
    %559 = vmatpush1.msra.mxu0 0.0
    %560 = vmatprep.subr.mxu0 0.0
    %561 = vmatpush1.msra.mxu0 0.0
    %562 = vmatprep.subr.mxu0 0.0
    %563 = vmatpush1.msra.mxu0 0.0
    %564 = vmatprep.subr.mxu0 0.0
    %565 = vmatpush1.msra.mxu0 0.0
    %566 = vmatprep.subr.mxu0 0.0
    %567 = vmatpush1.msra.mxu0 0.0
    %568 = vmatprep.subr.mxu0 0.0
    %569 = vmatpush1.msra.mxu0 0.0
    %570 = vmatprep.subr.mxu0 0.0
    %571 = vmatpush1.msra.mxu0 0.0
    %572 = vmatprep.subr.mxu0 0.0
    %573 = vmatpush1.msra.mxu0 0.0
    %574 = vmatprep.mubr.f32.mxu0 0.0
    %575 = vmatmul.mubr.f32.gmra.mrb[0].mxu0 0.0
    %v576 = vpop.f32.mrb[0].mxu0
    %v577 = vadd.f32 0.0, %v576
    %v578 = vpop.f32.mrb[0].mxu0
    %v579 = vadd.f32 0.0, %v578
    %580 = vdwg.mxu0
    %581 = vmatprep.subr.mxu0 %v449
    %582 = vmatpush1.msra.mxu0 %v448
    %583 = vmatprep.subr.mxu0 %v453
    %584 = vmatpush1.msra.mxu0 %v452
    %585 = vmatprep.subr.mxu0 %v457
    %586 = vmatpush1.msra.mxu0 %v456
    %587 = vmatprep.subr.mxu0 %v461
    %588 = vmatpush1.msra.mxu0 %v460
    %589 = vmatprep.subr.mxu0 %v465
    %590 = vmatpush1.msra.mxu0 %v464
    %591 = vmatprep.subr.mxu0 %v469
    %592 = vmatpush1.msra.mxu0 %v468
    %593 = vmatprep.subr.mxu0 %v473
    %594 = vmatpush1.msra.mxu0 %v472
    %595 = vmatprep.subr.mxu0 %v477
    %596 = vmatpush1.msra.mxu0 %v476
    %597 = vmatprep.subr.mxu0 %v481
    %598 = vmatpush1.msra.mxu0 %v480
    %599 = vmatprep.subr.mxu0 %v485
    %600 = vmatpush1.msra.mxu0 %v484
    %601 = vmatprep.subr.mxu0 %v489
    %602 = vmatpush1.msra.mxu0 %v488
    %603 = vmatprep.subr.mxu0 %v493
    %604 = vmatpush1.msra.mxu0 %v492
    %605 = vmatprep.subr.mxu0 %v497
    %606 = vmatpush1.msra.mxu0 %v496
    %607 = vmatprep.subr.mxu0 %v501
    %608 = vmatpush1.msra.mxu0 %v500
    %609 = vmatprep.subr.mxu0 %v505
    %610 = vmatpush1.msra.mxu0 %v504
    %611 = vmatprep.subr.mxu0 %v509
    %612 = vmatpush1.msra.mxu0 %v508
    %613 = vmatprep.subr.mxu0 0.0
    %614 = vmatpush1.msra.mxu0 0.0
    %615 = vmatprep.subr.mxu0 0.0
    %616 = vmatpush1.msra.mxu0 0.0
    %617 = vmatprep.subr.mxu0 0.0
    %618 = vmatpush1.msra.mxu0 0.0
    %619 = vmatprep.subr.mxu0 0.0
    %620 = vmatpush1.msra.mxu0 0.0
    %621 = vmatprep.subr.mxu0 0.0
    %622 = vmatpush1.msra.mxu0 0.0
    %623 = vmatprep.subr.mxu0 0.0
    %624 = vmatpush1.msra.mxu0 0.0
    %625 = vmatprep.subr.mxu0 0.0
    %626 = vmatpush1.msra.mxu0 0.0
    %627 = vmatprep.subr.mxu0 0.0
    %628 = vmatpush1.msra.mxu0 0.0
    %629 = vmatprep.subr.mxu0 0.0
    %630 = vmatpush1.msra.mxu0 0.0
    %631 = vmatprep.subr.mxu0 0.0
    %632 = vmatpush1.msra.mxu0 0.0
    %633 = vmatprep.subr.mxu0 0.0
    %634 = vmatpush1.msra.mxu0 0.0
    %635 = vmatprep.subr.mxu0 0.0
    %636 = vmatpush1.msra.mxu0 0.0
    %637 = vmatprep.subr.mxu0 0.0
    %638 = vmatpush1.msra.mxu0 0.0
    %639 = vmatprep.subr.mxu0 0.0
    %640 = vmatpush1.msra.mxu0 0.0
    %641 = vmatprep.subr.mxu0 0.0
    %642 = vmatpush1.msra.mxu0 0.0
    %643 = vmatprep.subr.mxu0 0.0
    %644 = vmatpush1.msra.mxu0 0.0
    %645 = vmatprep.mubr.f32.mxu0 0.0
    %646 = vmatmul.mubr.f32.gmra.mrb[0].mxu0 0.0
    %v647 = vpop.f32.mrb[0].mxu0
    %v648 = vadd.f32 0.0, %v647
    %v649 = vpop.f32.mrb[0].mxu0
    %v650 = vadd.f32 0.0, %v649
    %651 = vdwg.mxu0
    %v652 = vadd.f32 %v442, %v577
    %v653 = vadd.f32 %v443, %v579
    %v654 = vadd.f32 %v444, %v648
    %v655 = vadd.f32 %v445, %v650
    %v656 = vxor.u32 %v652, 2147483648
    %v657 = vmul.f32 %v656, 1.442695
    %v658 = vpow.pop %v657
    %v659 = vadd.f32 %v658, 1.0
    %v660 = vrcp.pop %v659
    %v661 = vmul.f32 1.0, %v660
    %v662 = vxor.u32 %v653, 2147483648
    %v663 = vmul.f32 %v662, 1.442695
    %v664 = vpow.pop %v663
    %v665 = vadd.f32 %v664, 1.0
    %v666 = vrcp.pop %v665
    %v667 = vmul.f32 1.0, %v666
    %v668 = vtanh.pop %v654
    %v669 = vxor.u32 %v655, 2147483648
    %v670 = vmul.f32 %v669, 1.442695
    %v671 = vpow.pop %v670
    %v672 = vadd.f32 %v671, 1.0
    %v673 = vrcp.pop %v672
    %v674 = vmul.f32 1.0, %v673
    %v675 = vmul.f32 %v667, 0.0
    %v676 = vmul.f32 %v661, %v668
    %v677 = vadd.f32 %v675, %v676
    %v678 = vtanh.pop %v677
    %v679 = vmul.f32 %v674, %v678
    %vm680 = vcmp.gt.f32.partialorder %v441, 0.0
    %v681 = vsel %vm680, 1, 0
    %682 = vset.pattern.permute.xlu0 0
    %683 = vperm.xlu0 %682, %v681
    %v684 = vpop.permute.xlu0 %683
    %vm685 = vcmp.eq.s32.totalorder %v684, 1
    %v686 = vsel %vm685, %v679, 0.0
    %v687 = vsel %vm685, %v677, 0.0
    %v688 = vadd.f32 %v686, 0.0
    %v689 = vld [vmem:[#allocation2 + $0x20] sm:$0xff]
    %v690 = vld [vmem:[#allocation2 + $0x28] sm:$0xff]
    %v691 = vld [vmem:[#allocation2 + $0x30] sm:$0xff]
    %v692 = vld [vmem:[#allocation2 + $0x38] sm:$0xff]
    %693 = vmatprep.subr.mxu0 %v447
    %694 = vmatpush1.msra.mxu0 %v446
    %695 = vmatprep.subr.mxu0 %v451
    %696 = vmatpush1.msra.mxu0 %v450
    %697 = vmatprep.subr.mxu0 %v455
    %698 = vmatpush1.msra.mxu0 %v454
    %699 = vmatprep.subr.mxu0 %v459
    %700 = vmatpush1.msra.mxu0 %v458
    %701 = vmatprep.subr.mxu0 %v463
    %702 = vmatpush1.msra.mxu0 %v462
    %703 = vmatprep.subr.mxu0 %v467
    %704 = vmatpush1.msra.mxu0 %v466
    %705 = vmatprep.subr.mxu0 %v471
    %706 = vmatpush1.msra.mxu0 %v470
    %707 = vmatprep.subr.mxu0 %v475
    %708 = vmatpush1.msra.mxu0 %v474
    %709 = vmatprep.subr.mxu0 %v479
    %710 = vmatpush1.msra.mxu0 %v478
    %711 = vmatprep.subr.mxu0 %v483
    %712 = vmatpush1.msra.mxu0 %v482
    %713 = vmatprep.subr.mxu0 %v487
    %714 = vmatpush1.msra.mxu0 %v486
    %715 = vmatprep.subr.mxu0 %v491
    %716 = vmatpush1.msra.mxu0 %v490
    %717 = vmatprep.subr.mxu0 %v495
    %718 = vmatpush1.msra.mxu0 %v494
    %719 = vmatprep.subr.mxu0 %v499
    %720 = vmatpush1.msra.mxu0 %v498
    %721 = vmatprep.subr.mxu0 %v503
    %722 = vmatpush1.msra.mxu0 %v502
    %723 = vmatprep.subr.mxu0 %v507
    %724 = vmatpush1.msra.mxu0 %v506
    %725 = vmatprep.subr.mxu0 0.0
    %726 = vmatpush1.msra.mxu0 0.0
    %727 = vmatprep.subr.mxu0 0.0
    %728 = vmatpush1.msra.mxu0 0.0
    %729 = vmatprep.subr.mxu0 0.0
    %730 = vmatpush1.msra.mxu0 0.0
    %731 = vmatprep.subr.mxu0 0.0
    %732 = vmatpush1.msra.mxu0 0.0
    %733 = vmatprep.subr.mxu0 0.0
    %734 = vmatpush1.msra.mxu0 0.0
    %735 = vmatprep.subr.mxu0 0.0
    %736 = vmatpush1.msra.mxu0 0.0
    %737 = vmatprep.subr.mxu0 0.0
    %738 = vmatpush1.msra.mxu0 0.0
    %739 = vmatprep.subr.mxu0 0.0
    %740 = vmatpush1.msra.mxu0 0.0
    %741 = vmatprep.subr.mxu0 0.0
    %742 = vmatpush1.msra.mxu0 0.0
    %743 = vmatprep.subr.mxu0 0.0
    %744 = vmatpush1.msra.mxu0 0.0
    %745 = vmatprep.subr.mxu0 0.0
    %746 = vmatpush1.msra.mxu0 0.0
    %747 = vmatprep.subr.mxu0 0.0
    %748 = vmatpush1.msra.mxu0 0.0
    %749 = vmatprep.subr.mxu0 0.0
    %750 = vmatpush1.msra.mxu0 0.0
    %751 = vmatprep.subr.mxu0 0.0
    %752 = vmatpush1.msra.mxu0 0.0
    %753 = vmatprep.subr.mxu0 0.0
    %754 = vmatpush1.msra.mxu0 0.0
    %755 = vmatprep.subr.mxu0 0.0
    %756 = vmatpush1.msra.mxu0 0.0
    %757 = vmatprep.mubr.f32.mxu0 0.0
    %758 = vmatmul.mubr.f32.gmra.mrb[0].mxu0 %v686
    %v759 = vpop.f32.mrb[0].mxu0
    %v760 = vadd.f32 0.0, %v759
    %v761 = vpop.f32.mrb[0].mxu0
    %v762 = vadd.f32 0.0, %v761
    %763 = vdwg.mxu0
    %764 = vmatprep.subr.mxu0 %v449
    %765 = vmatpush1.msra.mxu0 %v448
    %766 = vmatprep.subr.mxu0 %v453
    %767 = vmatpush1.msra.mxu0 %v452
    %768 = vmatprep.subr.mxu0 %v457
    %769 = vmatpush1.msra.mxu0 %v456
    %770 = vmatprep.subr.mxu0 %v461
    %771 = vmatpush1.msra.mxu0 %v460
    %772 = vmatprep.subr.mxu0 %v465
    %773 = vmatpush1.msra.mxu0 %v464
    %774 = vmatprep.subr.mxu0 %v469
    %775 = vmatpush1.msra.mxu0 %v468
    %776 = vmatprep.subr.mxu0 %v473
    %777 = vmatpush1.msra.mxu0 %v472
    %778 = vmatprep.subr.mxu0 %v477
    %779 = vmatpush1.msra.mxu0 %v476
    %780 = vmatprep.subr.mxu0 %v481
    %781 = vmatpush1.msra.mxu0 %v480
    %782 = vmatprep.subr.mxu0 %v485
    %783 = vmatpush1.msra.mxu0 %v484
    %784 = vmatprep.subr.mxu0 %v489
    %785 = vmatpush1.msra.mxu0 %v488
    %786 = vmatprep.subr.mxu0 %v493
    %787 = vmatpush1.msra.mxu0 %v492
    %788 = vmatprep.subr.mxu0 %v497
    %789 = vmatpush1.msra.mxu0 %v496
    %790 = vmatprep.subr.mxu0 %v501
    %791 = vmatpush1.msra.mxu0 %v500
    %792 = vmatprep.subr.mxu0 %v505
    %793 = vmatpush1.msra.mxu0 %v504
    %794 = vmatprep.subr.mxu0 %v509
    %795 = vmatpush1.msra.mxu0 %v508
    %796 = vmatprep.subr.mxu0 0.0
    %797 = vmatpush1.msra.mxu0 0.0
    %798 = vmatprep.subr.mxu0 0.0
    %799 = vmatpush1.msra.mxu0 0.0
    %800 = vmatprep.subr.mxu0 0.0
    %801 = vmatpush1.msra.mxu0 0.0
    %802 = vmatprep.subr.mxu0 0.0
    %803 = vmatpush1.msra.mxu0 0.0
    %804 = vmatprep.subr.mxu0 0.0
    %805 = vmatpush1.msra.mxu0 0.0
    %806 = vmatprep.subr.mxu0 0.0
    %807 = vmatpush1.msra.mxu0 0.0
    %808 = vmatprep.subr.mxu0 0.0
    %809 = vmatpush1.msra.mxu0 0.0
    %810 = vmatprep.subr.mxu0 0.0
    %811 = vmatpush1.msra.mxu0 0.0
    %812 = vmatprep.subr.mxu0 0.0
    %813 = vmatpush1.msra.mxu0 0.0
    %814 = vmatprep.subr.mxu0 0.0
    %815 = vmatpush1.msra.mxu0 0.0
    %816 = vmatprep.subr.mxu0 0.0
    %817 = vmatpush1.msra.mxu0 0.0
    %818 = vmatprep.subr.mxu0 0.0
    %819 = vmatpush1.msra.mxu0 0.0
    %820 = vmatprep.subr.mxu0 0.0
    %821 = vmatpush1.msra.mxu0 0.0
    %822 = vmatprep.subr.mxu0 0.0
    %823 = vmatpush1.msra.mxu0 0.0
    %824 = vmatprep.subr.mxu0 0.0
    %825 = vmatpush1.msra.mxu0 0.0
    %826 = vmatprep.subr.mxu0 0.0
    %827 = vmatpush1.msra.mxu0 0.0
    %828 = vmatprep.mubr.f32.mxu0 0.0
    %829 = vmatmul.mubr.f32.gmra.mrb[0].mxu0 %v686
    %v830 = vpop.f32.mrb[0].mxu0
    %v831 = vadd.f32 0.0, %v830
    %v832 = vpop.f32.mrb[0].mxu0
    %v833 = vadd.f32 0.0, %v832
    %834 = vdwg.mxu0
    %v835 = vadd.f32 %v689, %v760
    %v836 = vadd.f32 %v690, %v762
    %v837 = vadd.f32 %v691, %v831
    %v838 = vadd.f32 %v692, %v833
    %v839 = vxor.u32 %v835, 2147483648
    %v840 = vmul.f32 %v839, 1.442695
    %v841 = vpow.pop %v840
    %v842 = vadd.f32 %v841, 1.0
    %v843 = vrcp.pop %v842
    %v844 = vmul.f32 1.0, %v843
    %v845 = vxor.u32 %v836, 2147483648
    %v846 = vmul.f32 %v845, 1.442695
    %v847 = vpow.pop %v846
    %v848 = vadd.f32 %v847, 1.0
    %v849 = vrcp.pop %v848
    %v850 = vmul.f32 1.0, %v849
    %v851 = vtanh.pop %v837
    %v852 = vxor.u32 %v838, 2147483648
    %v853 = vmul.f32 %v852, 1.442695
    %v854 = vpow.pop %v853
    %v855 = vadd.f32 %v854, 1.0
    %v856 = vrcp.pop %v855
    %v857 = vmul.f32 1.0, %v856
    %v858 = vmul.f32 %v850, %v687
    %v859 = vmul.f32 %v844, %v851
    %v860 = vadd.f32 %v858, %v859
    %v861 = vtanh.pop %v860
    %v862 = vmul.f32 %v857, %v861
    %vm863 = vcmp.gt.f32.partialorder %v441, 1.0
    %v864 = vsel %vm863, 1, 0
    %865 = vset.pattern.permute.xlu0 0
    %866 = vperm.xlu0 %865, %v864
    %v867 = vpop.permute.xlu0 %866
    %vm868 = vcmp.eq.s32.totalorder %v867, 1
    %v869 = vsel %vm868, %v862, %v686
    %v870 = vsel %vm868, %v860, %v687
    %v871 = vsel %vm868, %v862, 0.0
    %v872 = vadd.f32 %v688, %v871
    %v873 = vld [vmem:[#allocation2 + $0x40] sm:$0xff]
    %v874 = vld [vmem:[#allocation2 + $0x48] sm:$0xff]
    %v875 = vld [vmem:[#allocation2 + $0x50] sm:$0xff]
    %v876 = vld [vmem:[#allocation2 + $0x58] sm:$0xff]
    %877 = vmatprep.subr.mxu0 %v447
    %878 = vmatpush1.msra.mxu0 %v446
    %879 = vmatprep.subr.mxu0 %v451
    %880 = vmatpush1.msra.mxu0 %v450
    %881 = vmatprep.subr.mxu0 %v455
    %882 = vmatpush1.msra.mxu0 %v454
    %883 = vmatprep.subr.mxu0 %v459
    %884 = vmatpush1.msra.mxu0 %v458
    %885 = vmatprep.subr.mxu0 %v463
    %886 = vmatpush1.msra.mxu0 %v462
    %887 = vmatprep.subr.mxu0 %v467
    %888 = vmatpush1.msra.mxu0 %v466
    %889 = vmatprep.subr.mxu0 %v471
    %890 = vmatpush1.msra.mxu0 %v470
    %891 = vmatprep.subr.mxu0 %v475
    %892 = vmatpush1.msra.mxu0 %v474
    %893 = vmatprep.subr.mxu0 %v479
    %894 = vmatpush1.msra.mxu0 %v478
    %895 = vmatprep.subr.mxu0 %v483
    %896 = vmatpush1.msra.mxu0 %v482
    %897 = vmatprep.subr.mxu0 %v487
    %898 = vmatpush1.msra.mxu0 %v486
    %899 = vmatprep.subr.mxu0 %v491
    %900 = vmatpush1.msra.mxu0 %v490
    %901 = vmatprep.subr.mxu0 %v495
    %902 = vmatpush1.msra.mxu0 %v494
    %903 = vmatprep.subr.mxu0 %v499
    %904 = vmatpush1.msra.mxu0 %v498
    %905 = vmatprep.subr.mxu0 %v503
    %906 = vmatpush1.msra.mxu0 %v502
    %907 = vmatprep.subr.mxu0 %v507
    %908 = vmatpush1.msra.mxu0 %v506
    %909 = vmatprep.subr.mxu0 0.0
    %910 = vmatpush1.msra.mxu0 0.0
    %911 = vmatprep.subr.mxu0 0.0
    %912 = vmatpush1.msra.mxu0 0.0
    %913 = vmatprep.subr.mxu0 0.0
    %914 = vmatpush1.msra.mxu0 0.0
    %915 = vmatprep.subr.mxu0 0.0
    %916 = vmatpush1.msra.mxu0 0.0
    %917 = vmatprep.subr.mxu0 0.0
    %918 = vmatpush1.msra.mxu0 0.0
    %919 = vmatprep.subr.mxu0 0.0
    %920 = vmatpush1.msra.mxu0 0.0
    %921 = vmatprep.subr.mxu0 0.0
    %922 = vmatpush1.msra.mxu0 0.0
    %923 = vmatprep.subr.mxu0 0.0
    %924 = vmatpush1.msra.mxu0 0.0
    %925 = vmatprep.subr.mxu0 0.0
    %926 = vmatpush1.msra.mxu0 0.0
    %927 = vmatprep.subr.mxu0 0.0
    %928 = vmatpush1.msra.mxu0 0.0
    %929 = vmatprep.subr.mxu0 0.0
    %930 = vmatpush1.msra.mxu0 0.0
    %931 = vmatprep.subr.mxu0 0.0
    %932 = vmatpush1.msra.mxu0 0.0
    %933 = vmatprep.subr.mxu0 0.0
    %934 = vmatpush1.msra.mxu0 0.0
    %935 = vmatprep.subr.mxu0 0.0
    %936 = vmatpush1.msra.mxu0 0.0
    %937 = vmatprep.subr.mxu0 0.0
    %938 = vmatpush1.msra.mxu0 0.0
    %939 = vmatprep.subr.mxu0 0.0
    %940 = vmatpush1.msra.mxu0 0.0
    %941 = vmatprep.mubr.f32.mxu0 0.0
    %942 = vmatmul.mubr.f32.gmra.mrb[0].mxu0 %v869
    %v943 = vpop.f32.mrb[0].mxu0
    %v944 = vadd.f32 0.0, %v943
    %v945 = vpop.f32.mrb[0].mxu0
    %v946 = vadd.f32 0.0, %v945
    %947 = vdwg.mxu0
    %948 = vmatprep.subr.mxu0 %v449
    %949 = vmatpush1.msra.mxu0 %v448
    %950 = vmatprep.subr.mxu0 %v453
    %951 = vmatpush1.msra.mxu0 %v452
    %952 = vmatprep.subr.mxu0 %v457
    %953 = vmatpush1.msra.mxu0 %v456
    %954 = vmatprep.subr.mxu0 %v461
    %955 = vmatpush1.msra.mxu0 %v460
    %956 = vmatprep.subr.mxu0 %v465
    %957 = vmatpush1.msra.mxu0 %v464
    %958 = vmatprep.subr.mxu0 %v469
    %959 = vmatpush1.msra.mxu0 %v468
    %960 = vmatprep.subr.mxu0 %v473
    %961 = vmatpush1.msra.mxu0 %v472
    %962 = vmatprep.subr.mxu0 %v477
    %963 = vmatpush1.msra.mxu0 %v476
    %964 = vmatprep.subr.mxu0 %v481
    %965 = vmatpush1.msra.mxu0 %v480
    %966 = vmatprep.subr.mxu0 %v485
    %967 = vmatpush1.msra.mxu0 %v484
    %968 = vmatprep.subr.mxu0 %v489
    %969 = vmatpush1.msra.mxu0 %v488
    %970 = vmatprep.subr.mxu0 %v493
    %971 = vmatpush1.msra.mxu0 %v492
    %972 = vmatprep.subr.mxu0 %v497
    %973 = vmatpush1.msra.mxu0 %v496
    %974 = vmatprep.subr.mxu0 %v501
    %975 = vmatpush1.msra.mxu0 %v500
    %976 = vmatprep.subr.mxu0 %v505
    %977 = vmatpush1.msra.mxu0 %v504
    %978 = vmatprep.subr.mxu0 %v509
    %979 = vmatpush1.msra.mxu0 %v508
    %980 = vmatprep.subr.mxu0 0.0
    %981 = vmatpush1.msra.mxu0 0.0
    %982 = vmatprep.subr.mxu0 0.0
    %983 = vmatpush1.msra.mxu0 0.0
    %984 = vmatprep.subr.mxu0 0.0
    %985 = vmatpush1.msra.mxu0 0.0
    %986 = vmatprep.subr.mxu0 0.0
    %987 = vmatpush1.msra.mxu0 0.0
    %988 = vmatprep.subr.mxu0 0.0
    %989 = vmatpush1.msra.mxu0 0.0
    %990 = vmatprep.subr.mxu0 0.0
    %991 = vmatpush1.msra.mxu0 0.0
    %992 = vmatprep.subr.mxu0 0.0
    %993 = vmatpush1.msra.mxu0 0.0
    %994 = vmatprep.subr.mxu0 0.0
    %995 = vmatpush1.msra.mxu0 0.0
    %996 = vmatprep.subr.mxu0 0.0
    %997 = vmatpush1.msra.mxu0 0.0
    %998 = vmatprep.subr.mxu0 0.0
    %999 = vmatpush1.msra.mxu0 0.0
    %1000 = vmatprep.subr.mxu0 0.0
    %1001 = vmatpush1.msra.mxu0 0.0
    %1002 = vmatprep.subr.mxu0 0.0
    %1003 = vmatpush1.msra.mxu0 0.0
    %1004 = vmatprep.subr.mxu0 0.0
    %1005 = vmatpush1.msra.mxu0 0.0
    %1006 = vmatprep.subr.mxu0 0.0
    %1007 = vmatpush1.msra.mxu0 0.0
    %1008 = vmatprep.subr.mxu0 0.0
    %1009 = vmatpush1.msra.mxu0 0.0
    %1010 = vmatprep.subr.mxu0 0.0
    %1011 = vmatpush1.msra.mxu0 0.0
    %1012 = vmatprep.mubr.f32.mxu0 0.0
    %1013 = vmatmul.mubr.f32.gmra.mrb[0].mxu0 %v869
    %v1014 = vpop.f32.mrb[0].mxu0
    %v1015 = vadd.f32 0.0, %v1014
    %v1016 = vpop.f32.mrb[0].mxu0
    %v1017 = vadd.f32 0.0, %v1016
    %1018 = vdwg.mxu0
    %v1019 = vadd.f32 %v873, %v944
    %v1020 = vadd.f32 %v874, %v946
    %v1021 = vadd.f32 %v875, %v1015
    %v1022 = vadd.f32 %v876, %v1017
    %v1023 = vxor.u32 %v1019, 2147483648
    %v1024 = vmul.f32 %v1023, 1.442695
    %v1025 = vpow.pop %v1024
    %v1026 = vadd.f32 %v1025, 1.0
    %v1027 = vrcp.pop %v1026
    %v1028 = vmul.f32 1.0, %v1027
    %v1029 = vxor.u32 %v1020, 2147483648
    %v1030 = vmul.f32 %v1029, 1.442695
    %v1031 = vpow.pop %v1030
    %v1032 = vadd.f32 %v1031, 1.0
    %v1033 = vrcp.pop %v1032
    %v1034 = vmul.f32 1.0, %v1033
    %v1035 = vtanh.pop %v1021
    %v1036 = vxor.u32 %v1022, 2147483648
    %v1037 = vmul.f32 %v1036, 1.442695
    %v1038 = vpow.pop %v1037
    %v1039 = vadd.f32 %v1038, 1.0
    %v1040 = vrcp.pop %v1039
    %v1041 = vmul.f32 1.0, %v1040
    %v1042 = vmul.f32 %v1034, %v870
    %v1043 = vmul.f32 %v1028, %v1035
    %v1044 = vadd.f32 %v1042, %v1043
    %v1045 = vtanh.pop %v1044
    %v1046 = vmul.f32 %v1041, %v1045
    %vm1047 = vcmp.gt.f32.partialorder %v441, 2.0
    %v1048 = vsel %vm1047, 1, 0
    %1049 = vset.pattern.permute.xlu0 0
    %1050 = vperm.xlu0 %1049, %v1048
    %v1051 = vpop.permute.xlu0 %1050
    %vm1052 = vcmp.eq.s32.totalorder %v1051, 1
    %v1053 = vsel %vm1052, %v1046, %v869
    %v1054 = vsel %vm1052, %v1044, %v870
    %v1055 = vsel %vm1052, %v1046, 0.0
    %v1056 = vadd.f32 %v872, %v1055
    %v1057 = vld [vmem:[#allocation2 + $0x60] sm:$0xff]
    %v1058 = vld [vmem:[#allocation2 + $0x68] sm:$0xff]
    %v1059 = vld [vmem:[#allocation2 + $0x70] sm:$0xff]
    %v1060 = vld [vmem:[#allocation2 + $0x78] sm:$0xff]
    %1061 = vmatprep.subr.mxu0 %v447
    %1062 = vmatpush1.msra.mxu0 %v446
    %1063 = vmatprep.subr.mxu0 %v451
    %1064 = vmatpush1.msra.mxu0 %v450
    %1065 = vmatprep.subr.mxu0 %v455
    %1066 = vmatpush1.msra.mxu0 %v454
    %1067 = vmatprep.subr.mxu0 %v459
    %1068 = vmatpush1.msra.mxu0 %v458
    %1069 = vmatprep.subr.mxu0 %v463
    %1070 = vmatpush1.msra.mxu0 %v462
    %1071 = vmatprep.subr.mxu0 %v467
    %1072 = vmatpush1.msra.mxu0 %v466
    %1073 = vmatprep.subr.mxu0 %v471
    %1074 = vmatpush1.msra.mxu0 %v470
    %1075 = vmatprep.subr.mxu0 %v475
    %1076 = vmatpush1.msra.mxu0 %v474
    %1077 = vmatprep.subr.mxu0 %v479
    %1078 = vmatpush1.msra.mxu0 %v478
    %1079 = vmatprep.subr.mxu0 %v483
    %1080 = vmatpush1.msra.mxu0 %v482
    %1081 = vmatprep.subr.mxu0 %v487
    %1082 = vmatpush1.msra.mxu0 %v486
    %1083 = vmatprep.subr.mxu0 %v491
    %1084 = vmatpush1.msra.mxu0 %v490
    %1085 = vmatprep.subr.mxu0 %v495
    %1086 = vmatpush1.msra.mxu0 %v494
    %1087 = vmatprep.subr.mxu0 %v499
    %1088 = vmatpush1.msra.mxu0 %v498
    %1089 = vmatprep.subr.mxu0 %v503
    %1090 = vmatpush1.msra.mxu0 %v502
    %1091 = vmatprep.subr.mxu0 %v507
    %1092 = vmatpush1.msra.mxu0 %v506
    %1093 = vmatprep.subr.mxu0 0.0
    %1094 = vmatpush1.msra.mxu0 0.0
    %1095 = vmatprep.subr.mxu0 0.0
    %1096 = vmatpush1.msra.mxu0 0.0
    %1097 = vmatprep.subr.mxu0 0.0
    %1098 = vmatpush1.msra.mxu0 0.0
    %1099 = vmatprep.subr.mxu0 0.0
    %1100 = vmatpush1.msra.mxu0 0.0
    %1101 = vmatprep.subr.mxu0 0.0
    %1102 = vmatpush1.msra.mxu0 0.0
    %1103 = vmatprep.subr.mxu0 0.0
    %1104 = vmatpush1.msra.mxu0 0.0
    %1105 = vmatprep.subr.mxu0 0.0
    %1106 = vmatpush1.msra.mxu0 0.0
    %1107 = vmatprep.subr.mxu0 0.0
    %1108 = vmatpush1.msra.mxu0 0.0
    %1109 = vmatprep.subr.mxu0 0.0
    %1110 = vmatpush1.msra.mxu0 0.0
    %1111 = vmatprep.subr.mxu0 0.0
    %1112 = vmatpush1.msra.mxu0 0.0
    %1113 = vmatprep.subr.mxu0 0.0
    %1114 = vmatpush1.msra.mxu0 0.0
    %1115 = vmatprep.subr.mxu0 0.0
    %1116 = vmatpush1.msra.mxu0 0.0
    %1117 = vmatprep.subr.mxu0 0.0
    %1118 = vmatpush1.msra.mxu0 0.0
    %1119 = vmatprep.subr.mxu0 0.0
    %1120 = vmatpush1.msra.mxu0 0.0
    %1121 = vmatprep.subr.mxu0 0.0
    %1122 = vmatpush1.msra.mxu0 0.0
    %1123 = vmatprep.subr.mxu0 0.0
    %1124 = vmatpush1.msra.mxu0 0.0
    %1125 = vmatprep.mubr.f32.mxu0 0.0
    %1126 = vmatmul.mubr.f32.gmra.mrb[0].mxu0 %v1053
    %v1127 = vpop.f32.mrb[0].mxu0
    %v1128 = vadd.f32 0.0, %v1127
    %v1129 = vpop.f32.mrb[0].mxu0
    %v1130 = vadd.f32 0.0, %v1129
    %1131 = vdwg.mxu0
    %1132 = vmatprep.subr.mxu0 %v449
    %1133 = vmatpush1.msra.mxu0 %v448
    %1134 = vmatprep.subr.mxu0 %v453
    %1135 = vmatpush1.msra.mxu0 %v452
    %1136 = vmatprep.subr.mxu0 %v457
    %1137 = vmatpush1.msra.mxu0 %v456
    %1138 = vmatprep.subr.mxu0 %v461
    %1139 = vmatpush1.msra.mxu0 %v460
    %1140 = vmatprep.subr.mxu0 %v465
    %1141 = vmatpush1.msra.mxu0 %v464
    %1142 = vmatprep.subr.mxu0 %v469
    %1143 = vmatpush1.msra.mxu0 %v468
    %1144 = vmatprep.subr.mxu0 %v473
    %1145 = vmatpush1.msra.mxu0 %v472
    %1146 = vmatprep.subr.mxu0 %v477
    %1147 = vmatpush1.msra.mxu0 %v476
    %1148 = vmatprep.subr.mxu0 %v481
    %1149 = vmatpush1.msra.mxu0 %v480
    %1150 = vmatprep.subr.mxu0 %v485
    %1151 = vmatpush1.msra.mxu0 %v484
    %1152 = vmatprep.subr.mxu0 %v489
    %1153 = vmatpush1.msra.mxu0 %v488
    %1154 = vmatprep.subr.mxu0 %v493
    %1155 = vmatpush1.msra.mxu0 %v492
    %1156 = vmatprep.subr.mxu0 %v497
    %1157 = vmatpush1.msra.mxu0 %v496
    %1158 = vmatprep.subr.mxu0 %v501
    %1159 = vmatpush1.msra.mxu0 %v500
    %1160 = vmatprep.subr.mxu0 %v505
    %1161 = vmatpush1.msra.mxu0 %v504
    %1162 = vmatprep.subr.mxu0 %v509
    %1163 = vmatpush1.msra.mxu0 %v508
    %1164 = vmatprep.subr.mxu0 0.0
    %1165 = vmatpush1.msra.mxu0 0.0
    %1166 = vmatprep.subr.mxu0 0.0
    %1167 = vmatpush1.msra.mxu0 0.0
    %1168 = vmatprep.subr.mxu0 0.0
    %1169 = vmatpush1.msra.mxu0 0.0
    %1170 = vmatprep.subr.mxu0 0.0
    %1171 = vmatpush1.msra.mxu0 0.0
    %1172 = vmatprep.subr.mxu0 0.0
    %1173 = vmatpush1.msra.mxu0 0.0
    %1174 = vmatprep.subr.mxu0 0.0
    %1175 = vmatpush1.msra.mxu0 0.0
    %1176 = vmatprep.subr.mxu0 0.0
    %1177 = vmatpush1.msra.mxu0 0.0
    %1178 = vmatprep.subr.mxu0 0.0
    %1179 = vmatpush1.msra.mxu0 0.0
    %1180 = vmatprep.subr.mxu0 0.0
    %1181 = vmatpush1.msra.mxu0 0.0
    %1182 = vmatprep.subr.mxu0 0.0
    %1183 = vmatpush1.msra.mxu0 0.0
    %1184 = vmatprep.subr.mxu0 0.0
    %1185 = vmatpush1.msra.mxu0 0.0
    %1186 = vmatprep.subr.mxu0 0.0
    %1187 = vmatpush1.msra.mxu0 0.0
    %1188 = vmatprep.subr.mxu0 0.0
    %1189 = vmatpush1.msra.mxu0 0.0
    %1190 = vmatprep.subr.mxu0 0.0
    %1191 = vmatpush1.msra.mxu0 0.0
    %1192 = vmatprep.subr.mxu0 0.0
    %1193 = vmatpush1.msra.mxu0 0.0
    %1194 = vmatprep.subr.mxu0 0.0
    %1195 = vmatpush1.msra.mxu0 0.0
    %1196 = vmatprep.mubr.f32.mxu0 0.0
    %1197 = vmatmul.mubr.f32.gmra.mrb[0].mxu0 %v1053
    %v1198 = vpop.f32.mrb[0].mxu0
    %v1199 = vadd.f32 0.0, %v1198
    %v1200 = vpop.f32.mrb[0].mxu0
    %v1201 = vadd.f32 0.0, %v1200
    %1202 = vdwg.mxu0
    %v1203 = vadd.f32 %v1057, %v1128
    %v1204 = vadd.f32 %v1058, %v1130
    %v1205 = vadd.f32 %v1059, %v1199
    %v1206 = vadd.f32 %v1060, %v1201
    %v1207 = vxor.u32 %v1203, 2147483648
    %v1208 = vmul.f32 %v1207, 1.442695
    %v1209 = vpow.pop %v1208
    %v1210 = vadd.f32 %v1209, 1.0
    %v1211 = vrcp.pop %v1210
    %v1212 = vmul.f32 1.0, %v1211
    %v1213 = vxor.u32 %v1204, 2147483648
    %v1214 = vmul.f32 %v1213, 1.442695
    %v1215 = vpow.pop %v1214
    %v1216 = vadd.f32 %v1215, 1.0
    %v1217 = vrcp.pop %v1216
    %v1218 = vmul.f32 1.0, %v1217
    %v1219 = vtanh.pop %v1205
    %v1220 = vxor.u32 %v1206, 2147483648
    %v1221 = vmul.f32 %v1220, 1.442695
    %v1222 = vpow.pop %v1221
    %v1223 = vadd.f32 %v1222, 1.0
    %v1224 = vrcp.pop %v1223
    %v1225 = vmul.f32 1.0, %v1224
    %v1226 = vmul.f32 %v1218, %v1054
    %v1227 = vmul.f32 %v1212, %v1219
    %v1228 = vadd.f32 %v1226, %v1227
    %v1229 = vtanh.pop %v1228
    %v1230 = vmul.f32 %v1225, %v1229
    %vm1231 = vcmp.gt.f32.partialorder %v441, 3.0
    %v1232 = vsel %vm1231, 1, 0
    %1233 = vset.pattern.permute.xlu0 0
    %1234 = vperm.xlu0 %1233, %v1232
    %v1235 = vpop.permute.xlu0 %1234
    %vm1236 = vcmp.eq.s32.totalorder %v1235, 1
    %v1237 = vsel %vm1236, %v1230, %v1053
    %v1238 = vsel %vm1236, %v1228, %v1054
    %v1239 = vsel %vm1236, %v1230, 0.0
    %v1240 = vadd.f32 %v1056, %v1239
    %v1241 = vld [vmem:[#allocation2 + $0x80] sm:$0xff]
    %v1242 = vld [vmem:[#allocation2 + $0x88] sm:$0xff]
    %v1243 = vld [vmem:[#allocation2 + $0x90] sm:$0xff]
    %v1244 = vld [vmem:[#allocation2 + $0x98] sm:$0xff]
    %1245 = vmatprep.subr.mxu0 %v447
    %1246 = vmatpush1.msra.mxu0 %v446
    %1247 = vmatprep.subr.mxu0 %v451
    %1248 = vmatpush1.msra.mxu0 %v450
    %1249 = vmatprep.subr.mxu0 %v455
    %1250 = vmatpush1.msra.mxu0 %v454
    %1251 = vmatprep.subr.mxu0 %v459
    %1252 = vmatpush1.msra.mxu0 %v458
    %1253 = vmatprep.subr.mxu0 %v463
    %1254 = vmatpush1.msra.mxu0 %v462
    %1255 = vmatprep.subr.mxu0 %v467
    %1256 = vmatpush1.msra.mxu0 %v466
    %1257 = vmatprep.subr.mxu0 %v471
    %1258 = vmatpush1.msra.mxu0 %v470
    %1259 = vmatprep.subr.mxu0 %v475
    %1260 = vmatpush1.msra.mxu0 %v474
    %1261 = vmatprep.subr.mxu0 %v479
    %1262 = vmatpush1.msra.mxu0 %v478
    %1263 = vmatprep.subr.mxu0 %v483
    %1264 = vmatpush1.msra.mxu0 %v482
    %1265 = vmatprep.subr.mxu0 %v487
    %1266 = vmatpush1.msra.mxu0 %v486
    %1267 = vmatprep.subr.mxu0 %v491
    %1268 = vmatpush1.msra.mxu0 %v490
    %1269 = vmatprep.subr.mxu0 %v495
    %1270 = vmatpush1.msra.mxu0 %v494
    %1271 = vmatprep.subr.mxu0 %v499
    %1272 = vmatpush1.msra.mxu0 %v498
    %1273 = vmatprep.subr.mxu0 %v503
    %1274 = vmatpush1.msra.mxu0 %v502
    %1275 = vmatprep.subr.mxu0 %v507
    %1276 = vmatpush1.msra.mxu0 %v506
    %1277 = vmatprep.subr.mxu0 0.0
    %1278 = vmatpush1.msra.mxu0 0.0
    %1279 = vmatprep.subr.mxu0 0.0
    %1280 = vmatpush1.msra.mxu0 0.0
    %1281 = vmatprep.subr.mxu0 0.0
    %1282 = vmatpush1.msra.mxu0 0.0
    %1283 = vmatprep.subr.mxu0 0.0
    %1284 = vmatpush1.msra.mxu0 0.0
    %1285 = vmatprep.subr.mxu0 0.0
    %1286 = vmatpush1.msra.mxu0 0.0
    %1287 = vmatprep.subr.mxu0 0.0
    %1288 = vmatpush1.msra.mxu0 0.0
    %1289 = vmatprep.subr.mxu0 0.0
    %1290 = vmatpush1.msra.mxu0 0.0
    %1291 = vmatprep.subr.mxu0 0.0
    %1292 = vmatpush1.msra.mxu0 0.0
    %1293 = vmatprep.subr.mxu0 0.0
    %1294 = vmatpush1.msra.mxu0 0.0
    %1295 = vmatprep.subr.mxu0 0.0
    %1296 = vmatpush1.msra.mxu0 0.0
    %1297 = vmatprep.subr.mxu0 0.0
    %1298 = vmatpush1.msra.mxu0 0.0
    %1299 = vmatprep.subr.mxu0 0.0
    %1300 = vmatpush1.msra.mxu0 0.0
    %1301 = vmatprep.subr.mxu0 0.0
    %1302 = vmatpush1.msra.mxu0 0.0
    %1303 = vmatprep.subr.mxu0 0.0
    %1304 = vmatpush1.msra.mxu0 0.0
    %1305 = vmatprep.subr.mxu0 0.0
    %1306 = vmatpush1.msra.mxu0 0.0
    %1307 = vmatprep.subr.mxu0 0.0
    %1308 = vmatpush1.msra.mxu0 0.0
    %1309 = vmatprep.mubr.f32.mxu0 0.0
    %1310 = vmatmul.mubr.f32.gmra.mrb[0].mxu0 %v1237
    %v1311 = vpop.f32.mrb[0].mxu0
    %v1312 = vadd.f32 0.0, %v1311
    %v1313 = vpop.f32.mrb[0].mxu0
    %v1314 = vadd.f32 0.0, %v1313
    %1315 = vdwg.mxu0
    %1316 = vmatprep.subr.mxu0 %v449
    %1317 = vmatpush1.msra.mxu0 %v448
    %1318 = vmatprep.subr.mxu0 %v453
    %1319 = vmatpush1.msra.mxu0 %v452
    %1320 = vmatprep.subr.mxu0 %v457
    %1321 = vmatpush1.msra.mxu0 %v456
    %1322 = vmatprep.subr.mxu0 %v461
    %1323 = vmatpush1.msra.mxu0 %v460
    %1324 = vmatprep.subr.mxu0 %v465
    %1325 = vmatpush1.msra.mxu0 %v464
    %1326 = vmatprep.subr.mxu0 %v469
    %1327 = vmatpush1.msra.mxu0 %v468
    %1328 = vmatprep.subr.mxu0 %v473
    %1329 = vmatpush1.msra.mxu0 %v472
    %1330 = vmatprep.subr.mxu0 %v477
    %1331 = vmatpush1.msra.mxu0 %v476
    %1332 = vmatprep.subr.mxu0 %v481
    %1333 = vmatpush1.msra.mxu0 %v480
    %1334 = vmatprep.subr.mxu0 %v485
    %1335 = vmatpush1.msra.mxu0 %v484
    %1336 = vmatprep.subr.mxu0 %v489
    %1337 = vmatpush1.msra.mxu0 %v488
    %1338 = vmatprep.subr.mxu0 %v493
    %1339 = vmatpush1.msra.mxu0 %v492
    %1340 = vmatprep.subr.mxu0 %v497
    %1341 = vmatpush1.msra.mxu0 %v496
    %1342 = vmatprep.subr.mxu0 %v501
    %1343 = vmatpush1.msra.mxu0 %v500
    %1344 = vmatprep.subr.mxu0 %v505
    %1345 = vmatpush1.msra.mxu0 %v504
    %1346 = vmatprep.subr.mxu0 %v509
    %1347 = vmatpush1.msra.mxu0 %v508
    %1348 = vmatprep.subr.mxu0 0.0
    %1349 = vmatpush1.msra.mxu0 0.0
    %1350 = vmatprep.subr.mxu0 0.0
    %1351 = vmatpush1.msra.mxu0 0.0
    %1352 = vmatprep.subr.mxu0 0.0
    %1353 = vmatpush1.msra.mxu0 0.0
    %1354 = vmatprep.subr.mxu0 0.0
    %1355 = vmatpush1.msra.mxu0 0.0
    %1356 = vmatprep.subr.mxu0 0.0
    %1357 = vmatpush1.msra.mxu0 0.0
    %1358 = vmatprep.subr.mxu0 0.0
    %1359 = vmatpush1.msra.mxu0 0.0
    %1360 = vmatprep.subr.mxu0 0.0
    %1361 = vmatpush1.msra.mxu0 0.0
    %1362 = vmatprep.subr.mxu0 0.0
    %1363 = vmatpush1.msra.mxu0 0.0
    %1364 = vmatprep.subr.mxu0 0.0
    %1365 = vmatpush1.msra.mxu0 0.0
    %1366 = vmatprep.subr.mxu0 0.0
    %1367 = vmatpush1.msra.mxu0 0.0
    %1368 = vmatprep.subr.mxu0 0.0
    %1369 = vmatpush1.msra.mxu0 0.0
    %1370 = vmatprep.subr.mxu0 0.0
    %1371 = vmatpush1.msra.mxu0 0.0
    %1372 = vmatprep.subr.mxu0 0.0
    %1373 = vmatpush1.msra.mxu0 0.0
    %1374 = vmatprep.subr.mxu0 0.0
    %1375 = vmatpush1.msra.mxu0 0.0
    %1376 = vmatprep.subr.mxu0 0.0
    %1377 = vmatpush1.msra.mxu0 0.0
    %1378 = vmatprep.subr.mxu0 0.0
    %1379 = vmatpush1.msra.mxu0 0.0
    %1380 = vmatprep.mubr.f32.mxu0 0.0
    %1381 = vmatmul.mubr.f32.gmra.mrb[0].mxu0 %v1237
    %v1382 = vpop.f32.mrb[0].mxu0
    %v1383 = vadd.f32 0.0, %v1382
    %v1384 = vpop.f32.mrb[0].mxu0
    %v1385 = vadd.f32 0.0, %v1384
    %1386 = vdwg.mxu0
    %v1387 = vadd.f32 %v1241, %v1312
    %v1388 = vadd.f32 %v1242, %v1314
    %v1389 = vadd.f32 %v1243, %v1383
    %v1390 = vadd.f32 %v1244, %v1385
    %v1391 = vxor.u32 %v1387, 2147483648
    %v1392 = vmul.f32 %v1391, 1.442695
    %v1393 = vpow.pop %v1392
    %v1394 = vadd.f32 %v1393, 1.0
    %v1395 = vrcp.pop %v1394
    %v1396 = vmul.f32 1.0, %v1395
    %v1397 = vxor.u32 %v1388, 2147483648
    %v1398 = vmul.f32 %v1397, 1.442695
    %v1399 = vpow.pop %v1398
    %v1400 = vadd.f32 %v1399, 1.0
    %v1401 = vrcp.pop %v1400
    %v1402 = vmul.f32 1.0, %v1401
    %v1403 = vtanh.pop %v1389
    %v1404 = vxor.u32 %v1390, 2147483648
    %v1405 = vmul.f32 %v1404, 1.442695
    %v1406 = vpow.pop %v1405
    %v1407 = vadd.f32 %v1406, 1.0
    %v1408 = vrcp.pop %v1407
    %v1409 = vmul.f32 1.0, %v1408
    %v1410 = vmul.f32 %v1402, %v1238
    %v1411 = vmul.f32 %v1396, %v1403
    %v1412 = vadd.f32 %v1410, %v1411
    %v1413 = vtanh.pop %v1412
    %v1414 = vmul.f32 %v1409, %v1413
    %vm1415 = vcmp.gt.f32.partialorder %v441, 4.0
    %v1416 = vsel %vm1415, 1, 0
    %1417 = vset.pattern.permute.xlu0 0
    %1418 = vperm.xlu0 %1417, %v1416
    %v1419 = vpop.permute.xlu0 %1418
    %vm1420 = vcmp.eq.s32.totalorder %v1419, 1
    %v1421 = vsel %vm1420, %v1414, %v1237
    %v1422 = vsel %vm1420, %v1412, %v1238
    %v1423 = vsel %vm1420, %v1414, 0.0
    %v1424 = vadd.f32 %v1240, %v1423
    %v1425 = vld [vmem:[#allocation2 + $0xa0] sm:$0xff]
    %v1426 = vld [vmem:[#allocation2 + $0xa8] sm:$0xff]
    %v1427 = vld [vmem:[#allocation2 + $0xb0] sm:$0xff]
    %v1428 = vld [vmem:[#allocation2 + $0xb8] sm:$0xff]
    %1429 = vmatprep.subr.mxu0 %v447
    %1430 = vmatpush1.msra.mxu0 %v446
    %1431 = vmatprep.subr.mxu0 %v451
    %1432 = vmatpush1.msra.mxu0 %v450
    %1433 = vmatprep.subr.mxu0 %v455
    %1434 = vmatpush1.msra.mxu0 %v454
    %1435 = vmatprep.subr.mxu0 %v459
    %1436 = vmatpush1.msra.mxu0 %v458
    %1437 = vmatprep.subr.mxu0 %v463
    %1438 = vmatpush1.msra.mxu0 %v462
    %1439 = vmatprep.subr.mxu0 %v467
    %1440 = vmatpush1.msra.mxu0 %v466
    %1441 = vmatprep.subr.mxu0 %v471
    %1442 = vmatpush1.msra.mxu0 %v470
    %1443 = vmatprep.subr.mxu0 %v475
    %1444 = vmatpush1.msra.mxu0 %v474
    %1445 = vmatprep.subr.mxu0 %v479
    %1446 = vmatpush1.msra.mxu0 %v478
    %1447 = vmatprep.subr.mxu0 %v483
    %1448 = vmatpush1.msra.mxu0 %v482
    %1449 = vmatprep.subr.mxu0 %v487
    %1450 = vmatpush1.msra.mxu0 %v486
    %1451 = vmatprep.subr.mxu0 %v491
    %1452 = vmatpush1.msra.mxu0 %v490
    %1453 = vmatprep.subr.mxu0 %v495
    %1454 = vmatpush1.msra.mxu0 %v494
    %1455 = vmatprep.subr.mxu0 %v499
    %1456 = vmatpush1.msra.mxu0 %v498
    %1457 = vmatprep.subr.mxu0 %v503
    %1458 = vmatpush1.msra.mxu0 %v502
    %1459 = vmatprep.subr.mxu0 %v507
    %1460 = vmatpush1.msra.mxu0 %v506
    %1461 = vmatprep.subr.mxu0 0.0
    %1462 = vmatpush1.msra.mxu0 0.0
    %1463 = vmatprep.subr.mxu0 0.0
    %1464 = vmatpush1.msra.mxu0 0.0
    %1465 = vmatprep.subr.mxu0 0.0
    %1466 = vmatpush1.msra.mxu0 0.0
    %1467 = vmatprep.subr.mxu0 0.0
    %1468 = vmatpush1.msra.mxu0 0.0
    %1469 = vmatprep.subr.mxu0 0.0
    %1470 = vmatpush1.msra.mxu0 0.0
    %1471 = vmatprep.subr.mxu0 0.0
    %1472 = vmatpush1.msra.mxu0 0.0
    %1473 = vmatprep.subr.mxu0 0.0
    %1474 = vmatpush1.msra.mxu0 0.0
    %1475 = vmatprep.subr.mxu0 0.0
    %1476 = vmatpush1.msra.mxu0 0.0
    %1477 = vmatprep.subr.mxu0 0.0
    %1478 = vmatpush1.msra.mxu0 0.0
    %1479 = vmatprep.subr.mxu0 0.0
    %1480 = vmatpush1.msra.mxu0 0.0
    %1481 = vmatprep.subr.mxu0 0.0
    %1482 = vmatpush1.msra.mxu0 0.0
    %1483 = vmatprep.subr.mxu0 0.0
    %1484 = vmatpush1.msra.mxu0 0.0
    %1485 = vmatprep.subr.mxu0 0.0
    %1486 = vmatpush1.msra.mxu0 0.0
    %1487 = vmatprep.subr.mxu0 0.0
    %1488 = vmatpush1.msra.mxu0 0.0
    %1489 = vmatprep.subr.mxu0 0.0
    %1490 = vmatpush1.msra.mxu0 0.0
    %1491 = vmatprep.subr.mxu0 0.0
    %1492 = vmatpush1.msra.mxu0 0.0
    %1493 = vmatprep.mubr.f32.mxu0 0.0
    %1494 = vmatmul.mubr.f32.gmra.mrb[0].mxu0 %v1421
    %v1495 = vpop.f32.mrb[0].mxu0
    %v1496 = vadd.f32 0.0, %v1495
    %v1497 = vpop.f32.mrb[0].mxu0
    %v1498 = vadd.f32 0.0, %v1497
    %1499 = vdwg.mxu0
    %1500 = vmatprep.subr.mxu0 %v449
    %1501 = vmatpush1.msra.mxu0 %v448
    %1502 = vmatprep.subr.mxu0 %v453
    %1503 = vmatpush1.msra.mxu0 %v452
    %1504 = vmatprep.subr.mxu0 %v457
    %1505 = vmatpush1.msra.mxu0 %v456
    %1506 = vmatprep.subr.mxu0 %v461
    %1507 = vmatpush1.msra.mxu0 %v460
    %1508 = vmatprep.subr.mxu0 %v465
    %1509 = vmatpush1.msra.mxu0 %v464
    %1510 = vmatprep.subr.mxu0 %v469
    %1511 = vmatpush1.msra.mxu0 %v468
    %1512 = vmatprep.subr.mxu0 %v473
    %1513 = vmatpush1.msra.mxu0 %v472
    %1514 = vmatprep.subr.mxu0 %v477
    %1515 = vmatpush1.msra.mxu0 %v476
    %1516 = vmatprep.subr.mxu0 %v481
    %1517 = vmatpush1.msra.mxu0 %v480
    %1518 = vmatprep.subr.mxu0 %v485
    %1519 = vmatpush1.msra.mxu0 %v484
    %1520 = vmatprep.subr.mxu0 %v489
    %1521 = vmatpush1.msra.mxu0 %v488
    %1522 = vmatprep.subr.mxu0 %v493
    %1523 = vmatpush1.msra.mxu0 %v492
    %1524 = vmatprep.subr.mxu0 %v497
    %1525 = vmatpush1.msra.mxu0 %v496
    %1526 = vmatprep.subr.mxu0 %v501
    %1527 = vmatpush1.msra.mxu0 %v500
    %1528 = vmatprep.subr.mxu0 %v505
    %1529 = vmatpush1.msra.mxu0 %v504
    %1530 = vmatprep.subr.mxu0 %v509
    %1531 = vmatpush1.msra.mxu0 %v508
    %1532 = vmatprep.subr.mxu0 0.0
    %1533 = vmatpush1.msra.mxu0 0.0
    %1534 = vmatprep.subr.mxu0 0.0
    %1535 = vmatpush1.msra.mxu0 0.0
    %1536 = vmatprep.subr.mxu0 0.0
    %1537 = vmatpush1.msra.mxu0 0.0
    %1538 = vmatprep.subr.mxu0 0.0
    %1539 = vmatpush1.msra.mxu0 0.0
    %1540 = vmatprep.subr.mxu0 0.0
    %1541 = vmatpush1.msra.mxu0 0.0
    %1542 = vmatprep.subr.mxu0 0.0
    %1543 = vmatpush1.msra.mxu0 0.0
    %1544 = vmatprep.subr.mxu0 0.0
    %1545 = vmatpush1.msra.mxu0 0.0
    %1546 = vmatprep.subr.mxu0 0.0
    %1547 = vmatpush1.msra.mxu0 0.0
    %1548 = vmatprep.subr.mxu0 0.0
    %1549 = vmatpush1.msra.mxu0 0.0
    %1550 = vmatprep.subr.mxu0 0.0
    %1551 = vmatpush1.msra.mxu0 0.0
    %1552 = vmatprep.subr.mxu0 0.0
    %1553 = vmatpush1.msra.mxu0 0.0
    %1554 = vmatprep.subr.mxu0 0.0
    %1555 = vmatpush1.msra.mxu0 0.0
    %1556 = vmatprep.subr.mxu0 0.0
    %1557 = vmatpush1.msra.mxu0 0.0
    %1558 = vmatprep.subr.mxu0 0.0
    %1559 = vmatpush1.msra.mxu0 0.0
    %1560 = vmatprep.subr.mxu0 0.0
    %1561 = vmatpush1.msra.mxu0 0.0
    %1562 = vmatprep.subr.mxu0 0.0
    %1563 = vmatpush1.msra.mxu0 0.0
    %1564 = vmatprep.mubr.f32.mxu0 0.0
    %1565 = vmatmul.mubr.f32.gmra.mrb[0].mxu0 %v1421
    %v1566 = vpop.f32.mrb[0].mxu0
    %v1567 = vadd.f32 0.0, %v1566
    %v1568 = vpop.f32.mrb[0].mxu0
    %v1569 = vadd.f32 0.0, %v1568
    %1570 = vdwg.mxu0
    %v1571 = vadd.f32 %v1425, %v1496
    %v1572 = vadd.f32 %v1426, %v1498
    %v1573 = vadd.f32 %v1427, %v1567
    %v1574 = vadd.f32 %v1428, %v1569
    %v1575 = vxor.u32 %v1571, 2147483648
    %v1576 = vmul.f32 %v1575, 1.442695
    %v1577 = vpow.pop %v1576
    %v1578 = vadd.f32 %v1577, 1.0
    %v1579 = vrcp.pop %v1578
    %v1580 = vmul.f32 1.0, %v1579
    %v1581 = vxor.u32 %v1572, 2147483648
    %v1582 = vmul.f32 %v1581, 1.442695
    %v1583 = vpow.pop %v1582
    %v1584 = vadd.f32 %v1583, 1.0
    %v1585 = vrcp.pop %v1584
    %v1586 = vmul.f32 1.0, %v1585
    %v1587 = vtanh.pop %v1573
    %v1588 = vxor.u32 %v1574, 2147483648
    %v1589 = vmul.f32 %v1588, 1.442695
    %v1590 = vpow.pop %v1589
    %v1591 = vadd.f32 %v1590, 1.0
    %v1592 = vrcp.pop %v1591
    %v1593 = vmul.f32 1.0, %v1592
    %v1594 = vmul.f32 %v1586, %v1422
    %v1595 = vmul.f32 %v1580, %v1587
    %v1596 = vadd.f32 %v1594, %v1595
    %v1597 = vtanh.pop %v1596
    %v1598 = vmul.f32 %v1593, %v1597
    %vm1599 = vcmp.gt.f32.partialorder %v441, 5.0
    %v1600 = vsel %vm1599, 1, 0
    %1601 = vset.pattern.permute.xlu0 0
    %1602 = vperm.xlu0 %1601, %v1600
    %v1603 = vpop.permute.xlu0 %1602
    %vm1604 = vcmp.eq.s32.totalorder %v1603, 1
    %v1605 = vsel %vm1604, %v1598, %v1421
    %v1606 = vsel %vm1604, %v1596, %v1422
    %v1607 = vsel %vm1604, %v1598, 0.0
    %v1608 = vadd.f32 %v1424, %v1607
    %v1609 = vld [vmem:[#allocation2 + $0xc0] sm:$0xff]
    %v1610 = vld [vmem:[#allocation2 + $0xc8] sm:$0xff]
    %v1611 = vld [vmem:[#allocation2 + $0xd0] sm:$0xff]
    %v1612 = vld [vmem:[#allocation2 + $0xd8] sm:$0xff]
    %1613 = vmatprep.subr.mxu0 %v447
    %1614 = vmatpush1.msra.mxu0 %v446
    %1615 = vmatprep.subr.mxu0 %v451
    %1616 = vmatpush1.msra.mxu0 %v450
    %1617 = vmatprep.subr.mxu0 %v455
    %1618 = vmatpush1.msra.mxu0 %v454
    %1619 = vmatprep.subr.mxu0 %v459
    %1620 = vmatpush1.msra.mxu0 %v458
    %1621 = vmatprep.subr.mxu0 %v463
    %1622 = vmatpush1.msra.mxu0 %v462
    %1623 = vmatprep.subr.mxu0 %v467
    %1624 = vmatpush1.msra.mxu0 %v466
    %1625 = vmatprep.subr.mxu0 %v471
    %1626 = vmatpush1.msra.mxu0 %v470
    %1627 = vmatprep.subr.mxu0 %v475
    %1628 = vmatpush1.msra.mxu0 %v474
    %1629 = vmatprep.subr.mxu0 %v479
    %1630 = vmatpush1.msra.mxu0 %v478
    %1631 = vmatprep.subr.mxu0 %v483
    %1632 = vmatpush1.msra.mxu0 %v482
    %1633 = vmatprep.subr.mxu0 %v487
    %1634 = vmatpush1.msra.mxu0 %v486
    %1635 = vmatprep.subr.mxu0 %v491
    %1636 = vmatpush1.msra.mxu0 %v490
    %1637 = vmatprep.subr.mxu0 %v495
    %1638 = vmatpush1.msra.mxu0 %v494
    %1639 = vmatprep.subr.mxu0 %v499
    %1640 = vmatpush1.msra.mxu0 %v498
    %1641 = vmatprep.subr.mxu0 %v503
    %1642 = vmatpush1.msra.mxu0 %v502
    %1643 = vmatprep.subr.mxu0 %v507
    %1644 = vmatpush1.msra.mxu0 %v506
    %1645 = vmatprep.subr.mxu0 0.0
    %1646 = vmatpush1.msra.mxu0 0.0
    %1647 = vmatprep.subr.mxu0 0.0
    %1648 = vmatpush1.msra.mxu0 0.0
    %1649 = vmatprep.subr.mxu0 0.0
    %1650 = vmatpush1.msra.mxu0 0.0
    %1651 = vmatprep.subr.mxu0 0.0
    %1652 = vmatpush1.msra.mxu0 0.0
    %1653 = vmatprep.subr.mxu0 0.0
    %1654 = vmatpush1.msra.mxu0 0.0
    %1655 = vmatprep.subr.mxu0 0.0
    %1656 = vmatpush1.msra.mxu0 0.0
    %1657 = vmatprep.subr.mxu0 0.0
    %1658 = vmatpush1.msra.mxu0 0.0
    %1659 = vmatprep.subr.mxu0 0.0
    %1660 = vmatpush1.msra.mxu0 0.0
    %1661 = vmatprep.subr.mxu0 0.0
    %1662 = vmatpush1.msra.mxu0 0.0
    %1663 = vmatprep.subr.mxu0 0.0
    %1664 = vmatpush1.msra.mxu0 0.0
    %1665 = vmatprep.subr.mxu0 0.0
    %1666 = vmatpush1.msra.mxu0 0.0
    %1667 = vmatprep.subr.mxu0 0.0
    %1668 = vmatpush1.msra.mxu0 0.0
    %1669 = vmatprep.subr.mxu0 0.0
    %1670 = vmatpush1.msra.mxu0 0.0
    %1671 = vmatprep.subr.mxu0 0.0
    %1672 = vmatpush1.msra.mxu0 0.0
    %1673 = vmatprep.subr.mxu0 0.0
    %1674 = vmatpush1.msra.mxu0 0.0
    %1675 = vmatprep.subr.mxu0 0.0
    %1676 = vmatpush1.msra.mxu0 0.0
    %1677 = vmatprep.mubr.f32.mxu0 0.0
    %1678 = vmatmul.mubr.f32.gmra.mrb[0].mxu0 %v1605
    %v1679 = vpop.f32.mrb[0].mxu0
    %v1680 = vadd.f32 0.0, %v1679
    %v1681 = vpop.f32.mrb[0].mxu0
    %v1682 = vadd.f32 0.0, %v1681
    %1683 = vdwg.mxu0
    %1684 = vmatprep.subr.mxu0 %v449
    %1685 = vmatpush1.msra.mxu0 %v448
    %1686 = vmatprep.subr.mxu0 %v453
    %1687 = vmatpush1.msra.mxu0 %v452
    %1688 = vmatprep.subr.mxu0 %v457
    %1689 = vmatpush1.msra.mxu0 %v456
    %1690 = vmatprep.subr.mxu0 %v461
    %1691 = vmatpush1.msra.mxu0 %v460
    %1692 = vmatprep.subr.mxu0 %v465
    %1693 = vmatpush1.msra.mxu0 %v464
    %1694 = vmatprep.subr.mxu0 %v469
    %1695 = vmatpush1.msra.mxu0 %v468
    %1696 = vmatprep.subr.mxu0 %v473
    %1697 = vmatpush1.msra.mxu0 %v472
    %1698 = vmatprep.subr.mxu0 %v477
    %1699 = vmatpush1.msra.mxu0 %v476
    %1700 = vmatprep.subr.mxu0 %v481
    %1701 = vmatpush1.msra.mxu0 %v480
    %1702 = vmatprep.subr.mxu0 %v485
    %1703 = vmatpush1.msra.mxu0 %v484
    %1704 = vmatprep.subr.mxu0 %v489
    %1705 = vmatpush1.msra.mxu0 %v488
    %1706 = vmatprep.subr.mxu0 %v493
    %1707 = vmatpush1.msra.mxu0 %v492
    %1708 = vmatprep.subr.mxu0 %v497
    %1709 = vmatpush1.msra.mxu0 %v496
    %1710 = vmatprep.subr.mxu0 %v501
    %1711 = vmatpush1.msra.mxu0 %v500
    %1712 = vmatprep.subr.mxu0 %v505
    %1713 = vmatpush1.msra.mxu0 %v504
    %1714 = vmatprep.subr.mxu0 %v509
    %1715 = vmatpush1.msra.mxu0 %v508
    %1716 = vmatprep.subr.mxu0 0.0
    %1717 = vmatpush1.msra.mxu0 0.0
    %1718 = vmatprep.subr.mxu0 0.0
    %1719 = vmatpush1.msra.mxu0 0.0
    %1720 = vmatprep.subr.mxu0 0.0
    %1721 = vmatpush1.msra.mxu0 0.0
    %1722 = vmatprep.subr.mxu0 0.0
    %1723 = vmatpush1.msra.mxu0 0.0
    %1724 = vmatprep.subr.mxu0 0.0
    %1725 = vmatpush1.msra.mxu0 0.0
    %1726 = vmatprep.subr.mxu0 0.0
    %1727 = vmatpush1.msra.mxu0 0.0
    %1728 = vmatprep.subr.mxu0 0.0
    %1729 = vmatpush1.msra.mxu0 0.0
    %1730 = vmatprep.subr.mxu0 0.0
    %1731 = vmatpush1.msra.mxu0 0.0
    %1732 = vmatprep.subr.mxu0 0.0
    %1733 = vmatpush1.msra.mxu0 0.0
    %1734 = vmatprep.subr.mxu0 0.0
    %1735 = vmatpush1.msra.mxu0 0.0
    %1736 = vmatprep.subr.mxu0 0.0
    %1737 = vmatpush1.msra.mxu0 0.0
    %1738 = vmatprep.subr.mxu0 0.0
    %1739 = vmatpush1.msra.mxu0 0.0
    %1740 = vmatprep.subr.mxu0 0.0
    %1741 = vmatpush1.msra.mxu0 0.0
    %1742 = vmatprep.subr.mxu0 0.0
    %1743 = vmatpush1.msra.mxu0 0.0
    %1744 = vmatprep.subr.mxu0 0.0
    %1745 = vmatpush1.msra.mxu0 0.0
    %1746 = vmatprep.subr.mxu0 0.0
    %1747 = vmatpush1.msra.mxu0 0.0
    %1748 = vmatprep.mubr.f32.mxu0 0.0
    %1749 = vmatmul.mubr.f32.gmra.mrb[0].mxu0 %v1605
    %v1750 = vpop.f32.mrb[0].mxu0
    %v1751 = vadd.f32 0.0, %v1750
    %v1752 = vpop.f32.mrb[0].mxu0
    %v1753 = vadd.f32 0.0, %v1752
    %1754 = vdwg.mxu0
    %v1755 = vadd.f32 %v1609, %v1680
    %v1756 = vadd.f32 %v1610, %v1682
    %v1757 = vadd.f32 %v1611, %v1751
    %v1758 = vadd.f32 %v1612, %v1753
    %v1759 = vxor.u32 %v1755, 2147483648
    %v1760 = vmul.f32 %v1759, 1.442695
    %v1761 = vpow.pop %v1760
    %v1762 = vadd.f32 %v1761, 1.0
    %v1763 = vrcp.pop %v1762
    %v1764 = vmul.f32 1.0, %v1763
    %v1765 = vxor.u32 %v1756, 2147483648
    %v1766 = vmul.f32 %v1765, 1.442695
    %v1767 = vpow.pop %v1766
    %v1768 = vadd.f32 %v1767, 1.0
    %v1769 = vrcp.pop %v1768
    %v1770 = vmul.f32 1.0, %v1769
    %v1771 = vtanh.pop %v1757
    %v1772 = vxor.u32 %v1758, 2147483648
    %v1773 = vmul.f32 %v1772, 1.442695
    %v1774 = vpow.pop %v1773
    %v1775 = vadd.f32 %v1774, 1.0
    %v1776 = vrcp.pop %v1775
    %v1777 = vmul.f32 1.0, %v1776
    %v1778 = vmul.f32 %v1770, %v1606
    %v1779 = vmul.f32 %v1764, %v1771
    %v1780 = vadd.f32 %v1778, %v1779
    %v1781 = vtanh.pop %v1780
    %v1782 = vmul.f32 %v1777, %v1781
    %vm1783 = vcmp.gt.f32.partialorder %v441, 6.0
    %v1784 = vsel %vm1783, 1, 0
    %1785 = vset.pattern.permute.xlu0 0
    %1786 = vperm.xlu0 %1785, %v1784
    %v1787 = vpop.permute.xlu0 %1786
    %vm1788 = vcmp.eq.s32.totalorder %v1787, 1
    %v1789 = vsel %vm1788, %v1782, %v1605
    %v1790 = vsel %vm1788, %v1780, %v1606
    %v1791 = vsel %vm1788, %v1782, 0.0
    %v1792 = vadd.f32 %v1608, %v1791
    %v1793 = vld [vmem:[#allocation2 + $0xe0] sm:$0xff]
    %v1794 = vld [vmem:[#allocation2 + $0xe8] sm:$0xff]
    %v1795 = vld [vmem:[#allocation2 + $0xf0] sm:$0xff]
    %v1796 = vld [vmem:[#allocation2 + $0xf8] sm:$0xff]
    %1797 = vmatprep.subr.mxu0 %v447
    %1798 = vmatpush1.msra.mxu0 %v446
    %1799 = vmatprep.subr.mxu0 %v451
    %1800 = vmatpush1.msra.mxu0 %v450
    %1801 = vmatprep.subr.mxu0 %v455
    %1802 = vmatpush1.msra.mxu0 %v454
    %1803 = vmatprep.subr.mxu0 %v459
    %1804 = vmatpush1.msra.mxu0 %v458
    %1805 = vmatprep.subr.mxu0 %v463
    %1806 = vmatpush1.msra.mxu0 %v462
    %1807 = vmatprep.subr.mxu0 %v467
    %1808 = vmatpush1.msra.mxu0 %v466
    %1809 = vmatprep.subr.mxu0 %v471
    %1810 = vmatpush1.msra.mxu0 %v470
    %1811 = vmatprep.subr.mxu0 %v475
    %1812 = vmatpush1.msra.mxu0 %v474
    %1813 = vmatprep.subr.mxu0 %v479
    %1814 = vmatpush1.msra.mxu0 %v478
    %1815 = vmatprep.subr.mxu0 %v483
    %1816 = vmatpush1.msra.mxu0 %v482
    %1817 = vmatprep.subr.mxu0 %v487
    %1818 = vmatpush1.msra.mxu0 %v486
    %1819 = vmatprep.subr.mxu0 %v491
    %1820 = vmatpush1.msra.mxu0 %v490
    %1821 = vmatprep.subr.mxu0 %v495
    %1822 = vmatpush1.msra.mxu0 %v494
    %1823 = vmatprep.subr.mxu0 %v499
    %1824 = vmatpush1.msra.mxu0 %v498
    %1825 = vmatprep.subr.mxu0 %v503
    %1826 = vmatpush1.msra.mxu0 %v502
    %1827 = vmatprep.subr.mxu0 %v507
    %1828 = vmatpush1.msra.mxu0 %v506
    %1829 = vmatprep.subr.mxu0 0.0
    %1830 = vmatpush1.msra.mxu0 0.0
    %1831 = vmatprep.subr.mxu0 0.0
    %1832 = vmatpush1.msra.mxu0 0.0
    %1833 = vmatprep.subr.mxu0 0.0
    %1834 = vmatpush1.msra.mxu0 0.0
    %1835 = vmatprep.subr.mxu0 0.0
    %1836 = vmatpush1.msra.mxu0 0.0
    %1837 = vmatprep.subr.mxu0 0.0
    %1838 = vmatpush1.msra.mxu0 0.0
    %1839 = vmatprep.subr.mxu0 0.0
    %1840 = vmatpush1.msra.mxu0 0.0
    %1841 = vmatprep.subr.mxu0 0.0
    %1842 = vmatpush1.msra.mxu0 0.0
    %1843 = vmatprep.subr.mxu0 0.0
    %1844 = vmatpush1.msra.mxu0 0.0
    %1845 = vmatprep.subr.mxu0 0.0
    %1846 = vmatpush1.msra.mxu0 0.0
    %1847 = vmatprep.subr.mxu0 0.0
    %1848 = vmatpush1.msra.mxu0 0.0
    %1849 = vmatprep.subr.mxu0 0.0
    %1850 = vmatpush1.msra.mxu0 0.0
    %1851 = vmatprep.subr.mxu0 0.0
    %1852 = vmatpush1.msra.mxu0 0.0
    %1853 = vmatprep.subr.mxu0 0.0
    %1854 = vmatpush1.msra.mxu0 0.0
    %1855 = vmatprep.subr.mxu0 0.0
    %1856 = vmatpush1.msra.mxu0 0.0
    %1857 = vmatprep.subr.mxu0 0.0
    %1858 = vmatpush1.msra.mxu0 0.0
    %1859 = vmatprep.subr.mxu0 0.0
    %1860 = vmatpush1.msra.mxu0 0.0
    %1861 = vmatprep.mubr.f32.mxu0 0.0
    %1862 = vmatmul.mubr.f32.gmra.mrb[0].mxu0 %v1789
    %v1863 = vpop.f32.mrb[0].mxu0
    %v1864 = vadd.f32 0.0, %v1863
    %v1865 = vpop.f32.mrb[0].mxu0
    %v1866 = vadd.f32 0.0, %v1865
    %1867 = vdwg.mxu0
    %1868 = vmatprep.subr.mxu0 %v449
    %1869 = vmatpush1.msra.mxu0 %v448
    %1870 = vmatprep.subr.mxu0 %v453
    %1871 = vmatpush1.msra.mxu0 %v452
    %1872 = vmatprep.subr.mxu0 %v457
    %1873 = vmatpush1.msra.mxu0 %v456
    %1874 = vmatprep.subr.mxu0 %v461
    %1875 = vmatpush1.msra.mxu0 %v460
    %1876 = vmatprep.subr.mxu0 %v465
    %1877 = vmatpush1.msra.mxu0 %v464
    %1878 = vmatprep.subr.mxu0 %v469
    %1879 = vmatpush1.msra.mxu0 %v468
    %1880 = vmatprep.subr.mxu0 %v473
    %1881 = vmatpush1.msra.mxu0 %v472
    %1882 = vmatprep.subr.mxu0 %v477
    %1883 = vmatpush1.msra.mxu0 %v476
    %1884 = vmatprep.subr.mxu0 %v481
    %1885 = vmatpush1.msra.mxu0 %v480
    %1886 = vmatprep.subr.mxu0 %v485
    %1887 = vmatpush1.msra.mxu0 %v484
    %1888 = vmatprep.subr.mxu0 %v489
    %1889 = vmatpush1.msra.mxu0 %v488
    %1890 = vmatprep.subr.mxu0 %v493
    %1891 = vmatpush1.msra.mxu0 %v492
    %1892 = vmatprep.subr.mxu0 %v497
    %1893 = vmatpush1.msra.mxu0 %v496
    %1894 = vmatprep.subr.mxu0 %v501
    %1895 = vmatpush1.msra.mxu0 %v500
    %1896 = vmatprep.subr.mxu0 %v505
    %1897 = vmatpush1.msra.mxu0 %v504
    %1898 = vmatprep.subr.mxu0 %v509
    %1899 = vmatpush1.msra.mxu0 %v508
    %1900 = vmatprep.subr.mxu0 0.0
    %1901 = vmatpush1.msra.mxu0 0.0
    %1902 = vmatprep.subr.mxu0 0.0
    %1903 = vmatpush1.msra.mxu0 0.0
    %1904 = vmatprep.subr.mxu0 0.0
    %1905 = vmatpush1.msra.mxu0 0.0
    %1906 = vmatprep.subr.mxu0 0.0
    %1907 = vmatpush1.msra.mxu0 0.0
    %1908 = vmatprep.subr.mxu0 0.0
    %1909 = vmatpush1.msra.mxu0 0.0
    %1910 = vmatprep.subr.mxu0 0.0
    %1911 = vmatpush1.msra.mxu0 0.0
    %1912 = vmatprep.subr.mxu0 0.0
    %1913 = vmatpush1.msra.mxu0 0.0
    %1914 = vmatprep.subr.mxu0 0.0
    %1915 = vmatpush1.msra.mxu0 0.0
    %1916 = vmatprep.subr.mxu0 0.0
    %1917 = vmatpush1.msra.mxu0 0.0
    %1918 = vmatprep.subr.mxu0 0.0
    %1919 = vmatpush1.msra.mxu0 0.0
    %1920 = vmatprep.subr.mxu0 0.0
    %1921 = vmatpush1.msra.mxu0 0.0
    %1922 = vmatprep.subr.mxu0 0.0
    %1923 = vmatpush1.msra.mxu0 0.0
    %1924 = vmatprep.subr.mxu0 0.0
    %1925 = vmatpush1.msra.mxu0 0.0
    %1926 = vmatprep.subr.mxu0 0.0
    %1927 = vmatpush1.msra.mxu0 0.0
    %1928 = vmatprep.subr.mxu0 0.0
    %1929 = vmatpush1.msra.mxu0 0.0
    %1930 = vmatprep.subr.mxu0 0.0
    %1931 = vmatpush1.msra.mxu0 0.0
    %1932 = vmatprep.mubr.f32.mxu0 0.0
    %1933 = vmatmul.mubr.f32.gmra.mrb[0].mxu0 %v1789
    %v1934 = vpop.f32.mrb[0].mxu0
    %v1935 = vadd.f32 0.0, %v1934
    %v1936 = vpop.f32.mrb[0].mxu0
    %v1937 = vadd.f32 0.0, %v1936
    %1938 = vdwg.mxu0
    %v1939 = vadd.f32 %v1793, %v1864
    %v1940 = vadd.f32 %v1794, %v1866
    %v1941 = vadd.f32 %v1795, %v1935
    %v1942 = vadd.f32 %v1796, %v1937
    %v1943 = vxor.u32 %v1939, 2147483648
    %v1944 = vmul.f32 %v1943, 1.442695
    %v1945 = vpow.pop %v1944
    %v1946 = vadd.f32 %v1945, 1.0
    %v1947 = vrcp.pop %v1946
    %v1948 = vmul.f32 1.0, %v1947
    %v1949 = vxor.u32 %v1940, 2147483648
    %v1950 = vmul.f32 %v1949, 1.442695
    %v1951 = vpow.pop %v1950
    %v1952 = vadd.f32 %v1951, 1.0
    %v1953 = vrcp.pop %v1952
    %v1954 = vmul.f32 1.0, %v1953
    %v1955 = vtanh.pop %v1941
    %v1956 = vxor.u32 %v1942, 2147483648
    %v1957 = vmul.f32 %v1956, 1.442695
    %v1958 = vpow.pop %v1957
    %v1959 = vadd.f32 %v1958, 1.0
    %v1960 = vrcp.pop %v1959
    %v1961 = vmul.f32 1.0, %v1960
    %v1962 = vmul.f32 %v1954, %v1790
    %v1963 = vmul.f32 %v1948, %v1955
    %v1964 = vadd.f32 %v1962, %v1963
    %v1965 = vtanh.pop %v1964
    %v1966 = vmul.f32 %v1961, %v1965
    %vm1967 = vcmp.gt.f32.partialorder %v441, 7.0
    %v1968 = vsel %vm1967, 1, 0
    %1969 = vset.pattern.permute.xlu0 0
    %1970 = vperm.xlu0 %1969, %v1968
    %v1971 = vpop.permute.xlu0 %1970
    %vm1972 = vcmp.eq.s32.totalorder %v1971, 1
    %v1973 = vsel %vm1972, %v1966, %v1789
    %v1974 = vsel %vm1972, %v1964, %v1790
    %v1975 = vsel %vm1972, %v1966, 0.0
    %v1976 = vadd.f32 %v1792, %v1975
    %v1977 = vld [vmem:[#allocation2 + $0x100] sm:$0xff]
    %v1978 = vld [vmem:[#allocation2 + $0x108] sm:$0xff]
    %v1979 = vld [vmem:[#allocation2 + $0x110] sm:$0xff]
    %v1980 = vld [vmem:[#allocation2 + $0x118] sm:$0xff]
    %1981 = vmatprep.subr.mxu0 %v447
    %1982 = vmatpush1.msra.mxu0 %v446
    %1983 = vmatprep.subr.mxu0 %v451
    %1984 = vmatpush1.msra.mxu0 %v450
    %1985 = vmatprep.subr.mxu0 %v455
    %1986 = vmatpush1.msra.mxu0 %v454
    %1987 = vmatprep.subr.mxu0 %v459
    %1988 = vmatpush1.msra.mxu0 %v458
    %1989 = vmatprep.subr.mxu0 %v463
    %1990 = vmatpush1.msra.mxu0 %v462
    %1991 = vmatprep.subr.mxu0 %v467
    %1992 = vmatpush1.msra.mxu0 %v466
    %1993 = vmatprep.subr.mxu0 %v471
    %1994 = vmatpush1.msra.mxu0 %v470
    %1995 = vmatprep.subr.mxu0 %v475
    %1996 = vmatpush1.msra.mxu0 %v474
    %1997 = vmatprep.subr.mxu0 %v479
    %1998 = vmatpush1.msra.mxu0 %v478
    %1999 = vmatprep.subr.mxu0 %v483
    %2000 = vmatpush1.msra.mxu0 %v482
    %2001 = vmatprep.subr.mxu0 %v487
    %2002 = vmatpush1.msra.mxu0 %v486
    %2003 = vmatprep.subr.mxu0 %v491
    %2004 = vmatpush1.msra.mxu0 %v490
    %2005 = vmatprep.subr.mxu0 %v495
    %2006 = vmatpush1.msra.mxu0 %v494
    %2007 = vmatprep.subr.mxu0 %v499
    %2008 = vmatpush1.msra.mxu0 %v498
    %2009 = vmatprep.subr.mxu0 %v503
    %2010 = vmatpush1.msra.mxu0 %v502
    %2011 = vmatprep.subr.mxu0 %v507
    %2012 = vmatpush1.msra.mxu0 %v506
    %2013 = vmatprep.subr.mxu0 0.0
    %2014 = vmatpush1.msra.mxu0 0.0
    %2015 = vmatprep.subr.mxu0 0.0
    %2016 = vmatpush1.msra.mxu0 0.0
    %2017 = vmatprep.subr.mxu0 0.0
    %2018 = vmatpush1.msra.mxu0 0.0
    %2019 = vmatprep.subr.mxu0 0.0
    %2020 = vmatpush1.msra.mxu0 0.0
    %2021 = vmatprep.subr.mxu0 0.0
    %2022 = vmatpush1.msra.mxu0 0.0
    %2023 = vmatprep.subr.mxu0 0.0
    %2024 = vmatpush1.msra.mxu0 0.0
    %2025 = vmatprep.subr.mxu0 0.0
    %2026 = vmatpush1.msra.mxu0 0.0
    %2027 = vmatprep.subr.mxu0 0.0
    %2028 = vmatpush1.msra.mxu0 0.0
    %2029 = vmatprep.subr.mxu0 0.0
    %2030 = vmatpush1.msra.mxu0 0.0
    %2031 = vmatprep.subr.mxu0 0.0
    %2032 = vmatpush1.msra.mxu0 0.0
    %2033 = vmatprep.subr.mxu0 0.0
    %2034 = vmatpush1.msra.mxu0 0.0
    %2035 = vmatprep.subr.mxu0 0.0
    %2036 = vmatpush1.msra.mxu0 0.0
    %2037 = vmatprep.subr.mxu0 0.0
    %2038 = vmatpush1.msra.mxu0 0.0
    %2039 = vmatprep.subr.mxu0 0.0
    %2040 = vmatpush1.msra.mxu0 0.0
    %2041 = vmatprep.subr.mxu0 0.0
    %2042 = vmatpush1.msra.mxu0 0.0
    %2043 = vmatprep.subr.mxu0 0.0
    %2044 = vmatpush1.msra.mxu0 0.0
    %2045 = vmatprep.mubr.f32.mxu0 0.0
    %2046 = vmatmul.mubr.f32.gmra.mrb[0].mxu0 %v1973
    %v2047 = vpop.f32.mrb[0].mxu0
    %v2048 = vadd.f32 0.0, %v2047
    %v2049 = vpop.f32.mrb[0].mxu0
    %v2050 = vadd.f32 0.0, %v2049
    %2051 = vdwg.mxu0
    %2052 = vmatprep.subr.mxu0 %v449
    %2053 = vmatpush1.msra.mxu0 %v448
    %2054 = vmatprep.subr.mxu0 %v453
    %2055 = vmatpush1.msra.mxu0 %v452
    %2056 = vmatprep.subr.mxu0 %v457
    %2057 = vmatpush1.msra.mxu0 %v456
    %2058 = vmatprep.subr.mxu0 %v461
    %2059 = vmatpush1.msra.mxu0 %v460
    %2060 = vmatprep.subr.mxu0 %v465
    %2061 = vmatpush1.msra.mxu0 %v464
    %2062 = vmatprep.subr.mxu0 %v469
    %2063 = vmatpush1.msra.mxu0 %v468
    %2064 = vmatprep.subr.mxu0 %v473
    %2065 = vmatpush1.msra.mxu0 %v472
    %2066 = vmatprep.subr.mxu0 %v477
    %2067 = vmatpush1.msra.mxu0 %v476
    %2068 = vmatprep.subr.mxu0 %v481
    %2069 = vmatpush1.msra.mxu0 %v480
    %2070 = vmatprep.subr.mxu0 %v485
    %2071 = vmatpush1.msra.mxu0 %v484
    %2072 = vmatprep.subr.mxu0 %v489
    %2073 = vmatpush1.msra.mxu0 %v488
    %2074 = vmatprep.subr.mxu0 %v493
    %2075 = vmatpush1.msra.mxu0 %v492
    %2076 = vmatprep.subr.mxu0 %v497
    %2077 = vmatpush1.msra.mxu0 %v496
    %2078 = vmatprep.subr.mxu0 %v501
    %2079 = vmatpush1.msra.mxu0 %v500
    %2080 = vmatprep.subr.mxu0 %v505
    %2081 = vmatpush1.msra.mxu0 %v504
    %2082 = vmatprep.subr.mxu0 %v509
    %2083 = vmatpush1.msra.mxu0 %v508
    %2084 = vmatprep.subr.mxu0 0.0
    %2085 = vmatpush1.msra.mxu0 0.0
    %2086 = vmatprep.subr.mxu0 0.0
    %2087 = vmatpush1.msra.mxu0 0.0
    %2088 = vmatprep.subr.mxu0 0.0
    %2089 = vmatpush1.msra.mxu0 0.0
    %2090 = vmatprep.subr.mxu0 0.0
    %2091 = vmatpush1.msra.mxu0 0.0
    %2092 = vmatprep.subr.mxu0 0.0
    %2093 = vmatpush1.msra.mxu0 0.0
    %2094 = vmatprep.subr.mxu0 0.0
    %2095 = vmatpush1.msra.mxu0 0.0
    %2096 = vmatprep.subr.mxu0 0.0
    %2097 = vmatpush1.msra.mxu0 0.0
    %2098 = vmatprep.subr.mxu0 0.0
    %2099 = vmatpush1.msra.mxu0 0.0
    %2100 = vmatprep.subr.mxu0 0.0
    %2101 = vmatpush1.msra.mxu0 0.0
    %2102 = vmatprep.subr.mxu0 0.0
    %2103 = vmatpush1.msra.mxu0 0.0
    %2104 = vmatprep.subr.mxu0 0.0
    %2105 = vmatpush1.msra.mxu0 0.0
    %2106 = vmatprep.subr.mxu0 0.0
    %2107 = vmatpush1.msra.mxu0 0.0
    %2108 = vmatprep.subr.mxu0 0.0
    %2109 = vmatpush1.msra.mxu0 0.0
    %2110 = vmatprep.subr.mxu0 0.0
    %2111 = vmatpush1.msra.mxu0 0.0
    %2112 = vmatprep.subr.mxu0 0.0
    %2113 = vmatpush1.msra.mxu0 0.0
    %2114 = vmatprep.subr.mxu0 0.0
    %2115 = vmatpush1.msra.mxu0 0.0
    %2116 = vmatprep.mubr.f32.mxu0 0.0
    %2117 = vmatmul.mubr.f32.gmra.mrb[0].mxu0 %v1973
    %v2118 = vpop.f32.mrb[0].mxu0
    %v2119 = vadd.f32 0.0, %v2118
    %v2120 = vpop.f32.mrb[0].mxu0
    %v2121 = vadd.f32 0.0, %v2120
    %2122 = vdwg.mxu0
    %v2123 = vadd.f32 %v1977, %v2048
    %v2124 = vadd.f32 %v1978, %v2050
    %v2125 = vadd.f32 %v1979, %v2119
    %v2126 = vadd.f32 %v1980, %v2121
    %v2127 = vxor.u32 %v2123, 2147483648
    %v2128 = vmul.f32 %v2127, 1.442695
    %v2129 = vpow.pop %v2128
    %v2130 = vadd.f32 %v2129, 1.0
    %v2131 = vrcp.pop %v2130
    %v2132 = vmul.f32 1.0, %v2131
    %v2133 = vxor.u32 %v2124, 2147483648
    %v2134 = vmul.f32 %v2133, 1.442695
    %v2135 = vpow.pop %v2134
    %v2136 = vadd.f32 %v2135, 1.0
    %v2137 = vrcp.pop %v2136
    %v2138 = vmul.f32 1.0, %v2137
    %v2139 = vtanh.pop %v2125
    %v2140 = vxor.u32 %v2126, 2147483648
    %v2141 = vmul.f32 %v2140, 1.442695
    %v2142 = vpow.pop %v2141
    %v2143 = vadd.f32 %v2142, 1.0
    %v2144 = vrcp.pop %v2143
    %v2145 = vmul.f32 1.0, %v2144
    %v2146 = vmul.f32 %v2138, %v1974
    %v2147 = vmul.f32 %v2132, %v2139
    %v2148 = vadd.f32 %v2146, %v2147
    %v2149 = vtanh.pop %v2148
    %v2150 = vmul.f32 %v2145, %v2149
    %vm2151 = vcmp.gt.f32.partialorder %v441, 8.0
    %v2152 = vsel %vm2151, 1, 0
    %2153 = vset.pattern.permute.xlu0 0
    %2154 = vperm.xlu0 %2153, %v2152
    %v2155 = vpop.permute.xlu0 %2154
    %vm2156 = vcmp.eq.s32.totalorder %v2155, 1
    %v2157 = vsel %vm2156, %v2150, %v1973
    %v2158 = vsel %vm2156, %v2148, %v1974
    %v2159 = vsel %vm2156, %v2150, 0.0
    %v2160 = vadd.f32 %v1976, %v2159
    %v2161 = vld [vmem:[#allocation2 + $0x120] sm:$0xff]
    %v2162 = vld [vmem:[#allocation2 + $0x128] sm:$0xff]
    %v2163 = vld [vmem:[#allocation2 + $0x130] sm:$0xff]
    %v2164 = vld [vmem:[#allocation2 + $0x138] sm:$0xff]
    %2165 = vmatprep.subr.mxu0 %v447
    %2166 = vmatpush1.msra.mxu0 %v446
    %2167 = vmatprep.subr.mxu0 %v451
    %2168 = vmatpush1.msra.mxu0 %v450
    %2169 = vmatprep.subr.mxu0 %v455
    %2170 = vmatpush1.msra.mxu0 %v454
    %2171 = vmatprep.subr.mxu0 %v459
    %2172 = vmatpush1.msra.mxu0 %v458
    %2173 = vmatprep.subr.mxu0 %v463
    %2174 = vmatpush1.msra.mxu0 %v462
    %2175 = vmatprep.subr.mxu0 %v467
    %2176 = vmatpush1.msra.mxu0 %v466
    %2177 = vmatprep.subr.mxu0 %v471
    %2178 = vmatpush1.msra.mxu0 %v470
    %2179 = vmatprep.subr.mxu0 %v475
    %2180 = vmatpush1.msra.mxu0 %v474
    %2181 = vmatprep.subr.mxu0 %v479
    %2182 = vmatpush1.msra.mxu0 %v478
    %2183 = vmatprep.subr.mxu0 %v483
    %2184 = vmatpush1.msra.mxu0 %v482
    %2185 = vmatprep.subr.mxu0 %v487
    %2186 = vmatpush1.msra.mxu0 %v486
    %2187 = vmatprep.subr.mxu0 %v491
    %2188 = vmatpush1.msra.mxu0 %v490
    %2189 = vmatprep.subr.mxu0 %v495
    %2190 = vmatpush1.msra.mxu0 %v494
    %2191 = vmatprep.subr.mxu0 %v499
    %2192 = vmatpush1.msra.mxu0 %v498
    %2193 = vmatprep.subr.mxu0 %v503
    %2194 = vmatpush1.msra.mxu0 %v502
    %2195 = vmatprep.subr.mxu0 %v507
    %2196 = vmatpush1.msra.mxu0 %v506
    %2197 = vmatprep.subr.mxu0 0.0
    %2198 = vmatpush1.msra.mxu0 0.0
    %2199 = vmatprep.subr.mxu0 0.0
    %2200 = vmatpush1.msra.mxu0 0.0
    %2201 = vmatprep.subr.mxu0 0.0
    %2202 = vmatpush1.msra.mxu0 0.0
    %2203 = vmatprep.subr.mxu0 0.0
    %2204 = vmatpush1.msra.mxu0 0.0
    %2205 = vmatprep.subr.mxu0 0.0
    %2206 = vmatpush1.msra.mxu0 0.0
    %2207 = vmatprep.subr.mxu0 0.0
    %2208 = vmatpush1.msra.mxu0 0.0
    %2209 = vmatprep.subr.mxu0 0.0
    %2210 = vmatpush1.msra.mxu0 0.0
    %2211 = vmatprep.subr.mxu0 0.0
    %2212 = vmatpush1.msra.mxu0 0.0
    %2213 = vmatprep.subr.mxu0 0.0
    %2214 = vmatpush1.msra.mxu0 0.0
    %2215 = vmatprep.subr.mxu0 0.0
    %2216 = vmatpush1.msra.mxu0 0.0
    %2217 = vmatprep.subr.mxu0 0.0
    %2218 = vmatpush1.msra.mxu0 0.0
    %2219 = vmatprep.subr.mxu0 0.0
    %2220 = vmatpush1.msra.mxu0 0.0
    %2221 = vmatprep.subr.mxu0 0.0
    %2222 = vmatpush1.msra.mxu0 0.0
    %2223 = vmatprep.subr.mxu0 0.0
    %2224 = vmatpush1.msra.mxu0 0.0
    %2225 = vmatprep.subr.mxu0 0.0
    %2226 = vmatpush1.msra.mxu0 0.0
    %2227 = vmatprep.subr.mxu0 0.0
    %2228 = vmatpush1.msra.mxu0 0.0
    %2229 = vmatprep.mubr.f32.mxu0 0.0
    %2230 = vmatmul.mubr.f32.gmra.mrb[0].mxu0 %v2157
    %v2231 = vpop.f32.mrb[0].mxu0
    %v2232 = vadd.f32 0.0, %v2231
    %v2233 = vpop.f32.mrb[0].mxu0
    %v2234 = vadd.f32 0.0, %v2233
    %2235 = vdwg.mxu0
    %2236 = vmatprep.subr.mxu0 %v449
    %2237 = vmatpush1.msra.mxu0 %v448
    %2238 = vmatprep.subr.mxu0 %v453
    %2239 = vmatpush1.msra.mxu0 %v452
    %2240 = vmatprep.subr.mxu0 %v457
    %2241 = vmatpush1.msra.mxu0 %v456
    %2242 = vmatprep.subr.mxu0 %v461
    %2243 = vmatpush1.msra.mxu0 %v460
    %2244 = vmatprep.subr.mxu0 %v465
    %2245 = vmatpush1.msra.mxu0 %v464
    %2246 = vmatprep.subr.mxu0 %v469
    %2247 = vmatpush1.msra.mxu0 %v468
    %2248 = vmatprep.subr.mxu0 %v473
    %2249 = vmatpush1.msra.mxu0 %v472
    %2250 = vmatprep.subr.mxu0 %v477
    %2251 = vmatpush1.msra.mxu0 %v476
    %2252 = vmatprep.subr.mxu0 %v481
    %2253 = vmatpush1.msra.mxu0 %v480
    %2254 = vmatprep.subr.mxu0 %v485
    %2255 = vmatpush1.msra.mxu0 %v484
    %2256 = vmatprep.subr.mxu0 %v489
    %2257 = vmatpush1.msra.mxu0 %v488
    %2258 = vmatprep.subr.mxu0 %v493
    %2259 = vmatpush1.msra.mxu0 %v492
    %2260 = vmatprep.subr.mxu0 %v497
    %2261 = vmatpush1.msra.mxu0 %v496
    %2262 = vmatprep.subr.mxu0 %v501
    %2263 = vmatpush1.msra.mxu0 %v500
    %2264 = vmatprep.subr.mxu0 %v505
    %2265 = vmatpush1.msra.mxu0 %v504
    %2266 = vmatprep.subr.mxu0 %v509
    %2267 = vmatpush1.msra.mxu0 %v508
    %2268 = vmatprep.subr.mxu0 0.0
    %2269 = vmatpush1.msra.mxu0 0.0
    %2270 = vmatprep.subr.mxu0 0.0
    %2271 = vmatpush1.msra.mxu0 0.0
    %2272 = vmatprep.subr.mxu0 0.0
    %2273 = vmatpush1.msra.mxu0 0.0
    %2274 = vmatprep.subr.mxu0 0.0
    %2275 = vmatpush1.msra.mxu0 0.0
    %2276 = vmatprep.subr.mxu0 0.0
    %2277 = vmatpush1.msra.mxu0 0.0
    %2278 = vmatprep.subr.mxu0 0.0
    %2279 = vmatpush1.msra.mxu0 0.0
    %2280 = vmatprep.subr.mxu0 0.0
    %2281 = vmatpush1.msra.mxu0 0.0
    %2282 = vmatprep.subr.mxu0 0.0
    %2283 = vmatpush1.msra.mxu0 0.0
    %2284 = vmatprep.subr.mxu0 0.0
    %2285 = vmatpush1.msra.mxu0 0.0
    %2286 = vmatprep.subr.mxu0 0.0
    %2287 = vmatpush1.msra.mxu0 0.0
    %2288 = vmatprep.subr.mxu0 0.0
    %2289 = vmatpush1.msra.mxu0 0.0
    %2290 = vmatprep.subr.mxu0 0.0
    %2291 = vmatpush1.msra.mxu0 0.0
    %2292 = vmatprep.subr.mxu0 0.0
    %2293 = vmatpush1.msra.mxu0 0.0
    %2294 = vmatprep.subr.mxu0 0.0
    %2295 = vmatpush1.msra.mxu0 0.0
    %2296 = vmatprep.subr.mxu0 0.0
    %2297 = vmatpush1.msra.mxu0 0.0
    %2298 = vmatprep.subr.mxu0 0.0
    %2299 = vmatpush1.msra.mxu0 0.0
    %2300 = vmatprep.mubr.f32.mxu0 0.0
    %2301 = vmatmul.mubr.f32.gmra.mrb[0].mxu0 %v2157
    %v2302 = vpop.f32.mrb[0].mxu0
    %v2303 = vadd.f32 0.0, %v2302
    %v2304 = vpop.f32.mrb[0].mxu0
    %v2305 = vadd.f32 0.0, %v2304
    %2306 = vdwg.mxu0
    %v2307 = vadd.f32 %v2161, %v2232
    %v2308 = vadd.f32 %v2162, %v2234
    %v2309 = vadd.f32 %v2163, %v2303
    %v2310 = vadd.f32 %v2164, %v2305
    %v2311 = vxor.u32 %v2307, 2147483648
    %v2312 = vmul.f32 %v2311, 1.442695
    %v2313 = vpow.pop %v2312
    %v2314 = vadd.f32 %v2313, 1.0
    %v2315 = vrcp.pop %v2314
    %v2316 = vmul.f32 1.0, %v2315
    %v2317 = vxor.u32 %v2308, 2147483648
    %v2318 = vmul.f32 %v2317, 1.442695
    %v2319 = vpow.pop %v2318
    %v2320 = vadd.f32 %v2319, 1.0
    %v2321 = vrcp.pop %v2320
    %v2322 = vmul.f32 1.0, %v2321
    %v2323 = vtanh.pop %v2309
    %v2324 = vxor.u32 %v2310, 2147483648
    %v2325 = vmul.f32 %v2324, 1.442695
    %v2326 = vpow.pop %v2325
    %v2327 = vadd.f32 %v2326, 1.0
    %v2328 = vrcp.pop %v2327
    %v2329 = vmul.f32 1.0, %v2328
    %v2330 = vmul.f32 %v2322, %v2158
    %v2331 = vmul.f32 %v2316, %v2323
    %v2332 = vadd.f32 %v2330, %v2331
    %v2333 = vtanh.pop %v2332
    %v2334 = vmul.f32 %v2329, %v2333
    %vm2335 = vcmp.gt.f32.partialorder %v441, 9.0
    %v2336 = vsel %vm2335, 1, 0
    %2337 = vset.pattern.permute.xlu0 0
    %2338 = vperm.xlu0 %2337, %v2336
    %v2339 = vpop.permute.xlu0 %2338
    %vm2340 = vcmp.eq.s32.totalorder %v2339, 1
    %v2341 = vsel %vm2340, %v2334, %v2157
    %v2342 = vsel %vm2340, %v2332, %v2158
    %v2343 = vsel %vm2340, %v2334, 0.0
    %v2344 = vadd.f32 %v2160, %v2343
    %v2345 = vld [vmem:[#allocation2 + $0x140] sm:$0xff]
    %v2346 = vld [vmem:[#allocation2 + $0x148] sm:$0xff]
    %v2347 = vld [vmem:[#allocation2 + $0x150] sm:$0xff]
    %v2348 = vld [vmem:[#allocation2 + $0x158] sm:$0xff]
    %2349 = vmatprep.subr.mxu0 %v447
    %2350 = vmatpush1.msra.mxu0 %v446
    %2351 = vmatprep.subr.mxu0 %v451
    %2352 = vmatpush1.msra.mxu0 %v450
    %2353 = vmatprep.subr.mxu0 %v455
    %2354 = vmatpush1.msra.mxu0 %v454
    %2355 = vmatprep.subr.mxu0 %v459
    %2356 = vmatpush1.msra.mxu0 %v458
    %2357 = vmatprep.subr.mxu0 %v463
    %2358 = vmatpush1.msra.mxu0 %v462
    %2359 = vmatprep.subr.mxu0 %v467
    %2360 = vmatpush1.msra.mxu0 %v466
    %2361 = vmatprep.subr.mxu0 %v471
    %2362 = vmatpush1.msra.mxu0 %v470
    %2363 = vmatprep.subr.mxu0 %v475
    %2364 = vmatpush1.msra.mxu0 %v474
    %2365 = vmatprep.subr.mxu0 %v479
    %2366 = vmatpush1.msra.mxu0 %v478
    %2367 = vmatprep.subr.mxu0 %v483
    %2368 = vmatpush1.msra.mxu0 %v482
    %2369 = vmatprep.subr.mxu0 %v487
    %2370 = vmatpush1.msra.mxu0 %v486
    %2371 = vmatprep.subr.mxu0 %v491
    %2372 = vmatpush1.msra.mxu0 %v490
    %2373 = vmatprep.subr.mxu0 %v495
    %2374 = vmatpush1.msra.mxu0 %v494
    %2375 = vmatprep.subr.mxu0 %v499
    %2376 = vmatpush1.msra.mxu0 %v498
    %2377 = vmatprep.subr.mxu0 %v503
    %2378 = vmatpush1.msra.mxu0 %v502
    %2379 = vmatprep.subr.mxu0 %v507
    %2380 = vmatpush1.msra.mxu0 %v506
    %2381 = vmatprep.subr.mxu0 0.0
    %2382 = vmatpush1.msra.mxu0 0.0
    %2383 = vmatprep.subr.mxu0 0.0
    %2384 = vmatpush1.msra.mxu0 0.0
    %2385 = vmatprep.subr.mxu0 0.0
    %2386 = vmatpush1.msra.mxu0 0.0
    %2387 = vmatprep.subr.mxu0 0.0
    %2388 = vmatpush1.msra.mxu0 0.0
    %2389 = vmatprep.subr.mxu0 0.0
    %2390 = vmatpush1.msra.mxu0 0.0
    %2391 = vmatprep.subr.mxu0 0.0
    %2392 = vmatpush1.msra.mxu0 0.0
    %2393 = vmatprep.subr.mxu0 0.0
    %2394 = vmatpush1.msra.mxu0 0.0
    %2395 = vmatprep.subr.mxu0 0.0
    %2396 = vmatpush1.msra.mxu0 0.0
    %2397 = vmatprep.subr.mxu0 0.0
    %2398 = vmatpush1.msra.mxu0 0.0
    %2399 = vmatprep.subr.mxu0 0.0
    %2400 = vmatpush1.msra.mxu0 0.0
    %2401 = vmatprep.subr.mxu0 0.0
    %2402 = vmatpush1.msra.mxu0 0.0
    %2403 = vmatprep.subr.mxu0 0.0
    %2404 = vmatpush1.msra.mxu0 0.0
    %2405 = vmatprep.subr.mxu0 0.0
    %2406 = vmatpush1.msra.mxu0 0.0
    %2407 = vmatprep.subr.mxu0 0.0
    %2408 = vmatpush1.msra.mxu0 0.0
    %2409 = vmatprep.subr.mxu0 0.0
    %2410 = vmatpush1.msra.mxu0 0.0
    %2411 = vmatprep.subr.mxu0 0.0
    %2412 = vmatpush1.msra.mxu0 0.0
    %2413 = vmatprep.mubr.f32.mxu0 0.0
    %2414 = vmatmul.mubr.f32.gmra.mrb[0].mxu0 %v2341
    %v2415 = vpop.f32.mrb[0].mxu0
    %v2416 = vadd.f32 0.0, %v2415
    %v2417 = vpop.f32.mrb[0].mxu0
    %v2418 = vadd.f32 0.0, %v2417
    %2419 = vdwg.mxu0
    %2420 = vmatprep.subr.mxu0 %v449
    %2421 = vmatpush1.msra.mxu0 %v448
    %2422 = vmatprep.subr.mxu0 %v453
    %2423 = vmatpush1.msra.mxu0 %v452
    %2424 = vmatprep.subr.mxu0 %v457
    %2425 = vmatpush1.msra.mxu0 %v456
    %2426 = vmatprep.subr.mxu0 %v461
    %2427 = vmatpush1.msra.mxu0 %v460
    %2428 = vmatprep.subr.mxu0 %v465
    %2429 = vmatpush1.msra.mxu0 %v464
    %2430 = vmatprep.subr.mxu0 %v469
    %2431 = vmatpush1.msra.mxu0 %v468
    %2432 = vmatprep.subr.mxu0 %v473
    %2433 = vmatpush1.msra.mxu0 %v472
    %2434 = vmatprep.subr.mxu0 %v477
    %2435 = vmatpush1.msra.mxu0 %v476
    %2436 = vmatprep.subr.mxu0 %v481
    %2437 = vmatpush1.msra.mxu0 %v480
    %2438 = vmatprep.subr.mxu0 %v485
    %2439 = vmatpush1.msra.mxu0 %v484
    %2440 = vmatprep.subr.mxu0 %v489
    %2441 = vmatpush1.msra.mxu0 %v488
    %2442 = vmatprep.subr.mxu0 %v493
    %2443 = vmatpush1.msra.mxu0 %v492
    %2444 = vmatprep.subr.mxu0 %v497
    %2445 = vmatpush1.msra.mxu0 %v496
    %2446 = vmatprep.subr.mxu0 %v501
    %2447 = vmatpush1.msra.mxu0 %v500
    %2448 = vmatprep.subr.mxu0 %v505
    %2449 = vmatpush1.msra.mxu0 %v504
    %2450 = vmatprep.subr.mxu0 %v509
    %2451 = vmatpush1.msra.mxu0 %v508
    %2452 = vmatprep.subr.mxu0 0.0
    %2453 = vmatpush1.msra.mxu0 0.0
    %2454 = vmatprep.subr.mxu0 0.0
    %2455 = vmatpush1.msra.mxu0 0.0
    %2456 = vmatprep.subr.mxu0 0.0
    %2457 = vmatpush1.msra.mxu0 0.0
    %2458 = vmatprep.subr.mxu0 0.0
    %2459 = vmatpush1.msra.mxu0 0.0
    %2460 = vmatprep.subr.mxu0 0.0
    %2461 = vmatpush1.msra.mxu0 0.0
    %2462 = vmatprep.subr.mxu0 0.0
    %2463 = vmatpush1.msra.mxu0 0.0
    %2464 = vmatprep.subr.mxu0 0.0
    %2465 = vmatpush1.msra.mxu0 0.0
    %2466 = vmatprep.subr.mxu0 0.0
    %2467 = vmatpush1.msra.mxu0 0.0
    %2468 = vmatprep.subr.mxu0 0.0
    %2469 = vmatpush1.msra.mxu0 0.0
    %2470 = vmatprep.subr.mxu0 0.0
    %2471 = vmatpush1.msra.mxu0 0.0
    %2472 = vmatprep.subr.mxu0 0.0
    %2473 = vmatpush1.msra.mxu0 0.0
    %2474 = vmatprep.subr.mxu0 0.0
    %2475 = vmatpush1.msra.mxu0 0.0
    %2476 = vmatprep.subr.mxu0 0.0
    %2477 = vmatpush1.msra.mxu0 0.0
    %2478 = vmatprep.subr.mxu0 0.0
    %2479 = vmatpush1.msra.mxu0 0.0
    %2480 = vmatprep.subr.mxu0 0.0
    %2481 = vmatpush1.msra.mxu0 0.0
    %2482 = vmatprep.subr.mxu0 0.0
    %2483 = vmatpush1.msra.mxu0 0.0
    %2484 = vmatprep.mubr.f32.mxu0 0.0
    %2485 = vmatmul.mubr.f32.gmra.mrb[0].mxu0 %v2341
    %v2486 = vpop.f32.mrb[0].mxu0
    %v2487 = vadd.f32 0.0, %v2486
    %v2488 = vpop.f32.mrb[0].mxu0
    %v2489 = vadd.f32 0.0, %v2488
    %2490 = vdwg.mxu0
    %v2491 = vadd.f32 %v2345, %v2416
    %v2492 = vadd.f32 %v2346, %v2418
    %v2493 = vadd.f32 %v2347, %v2487
    %v2494 = vadd.f32 %v2348, %v2489
    %v2495 = vxor.u32 %v2491, 2147483648
    %v2496 = vmul.f32 %v2495, 1.442695
    %v2497 = vpow.pop %v2496
    %v2498 = vadd.f32 %v2497, 1.0
    %v2499 = vrcp.pop %v2498
    %v2500 = vmul.f32 1.0, %v2499
    %v2501 = vxor.u32 %v2492, 2147483648
    %v2502 = vmul.f32 %v2501, 1.442695
    %v2503 = vpow.pop %v2502
    %v2504 = vadd.f32 %v2503, 1.0
    %v2505 = vrcp.pop %v2504
    %v2506 = vmul.f32 1.0, %v2505
    %v2507 = vtanh.pop %v2493
    %v2508 = vxor.u32 %v2494, 2147483648
    %v2509 = vmul.f32 %v2508, 1.442695
    %v2510 = vpow.pop %v2509
    %v2511 = vadd.f32 %v2510, 1.0
    %v2512 = vrcp.pop %v2511
    %v2513 = vmul.f32 1.0, %v2512
    %v2514 = vmul.f32 %v2506, %v2342
    %v2515 = vmul.f32 %v2500, %v2507
    %v2516 = vadd.f32 %v2514, %v2515
    %v2517 = vtanh.pop %v2516
    %v2518 = vmul.f32 %v2513, %v2517
    %vm2519 = vcmp.gt.f32.partialorder %v441, 10.0
    %v2520 = vsel %vm2519, 1, 0
    %2521 = vset.pattern.permute.xlu0 0
    %2522 = vperm.xlu0 %2521, %v2520
    %v2523 = vpop.permute.xlu0 %2522
    %vm2524 = vcmp.eq.s32.totalorder %v2523, 1
    %v2525 = vsel %vm2524, %v2518, 0.0
    %v2526 = vadd.f32 %v2344, %v2525
    %2528 = vset.pattern.permute.xlu0 0
    %2529 = vperm.xlu0 %2528, %v441
    %v2530 = vpop.permute.xlu0 %2529
    %v2532 = vrcp.pop %v2530
    %v2533 = vmul.f32 %v2526, %v2532
    %v2534 = vld [vmem:[%s6] sm:$0xff]
    %v2535 = vld [vmem:[%s6 + $0x8] sm:$0xff]
    %v2536 = vld [vmem:[%s6 + $0x10] sm:$0xff]
    %v2537 = vld [vmem:[%s6 + $0x18] sm:$0xff]
    %v2538 = vld [vmem:[%s6 + $0x20] sm:$0xff]
    %v2539 = vld [vmem:[%s6 + $0x28] sm:$0xff]
    %v2540 = vld [vmem:[%s6 + $0x30] sm:$0xff]
    %v2541 = vld [vmem:[%s6 + $0x38] sm:$0xff]
    %v2542 = vld [vmem:[%s6 + $0x40] sm:$0xff]
    %v2543 = vld [vmem:[%s6 + $0x48] sm:$0xff]
    %v2544 = vld [vmem:[%s6 + $0x50] sm:$0xff]
    %v2545 = vld [vmem:[%s6 + $0x58] sm:$0xff]
    %v2546 = vld [vmem:[%s6 + $0x60] sm:$0xff]
    %v2547 = vld [vmem:[%s6 + $0x68] sm:$0xff]
    %v2548 = vld [vmem:[%s6 + $0x70] sm:$0xff]
    %v2549 = vld [vmem:[%s6 + $0x78] sm:$0xff]
    %v2550 = vld [vmem:[%s5] sm:$0xff]
    %v2551 = vld [vmem:[%s7] sm:$0xff]
    %v2552 = vld [vmem:[%s7 + $0x8] sm:$0xff]
    %v2553 = vld [vmem:[%s7 + $0x10] sm:$0xff]
    %v2554 = vld [vmem:[%s7 + $0x18] sm:$0xff]
    %v2555 = vld [vmem:[%s7 + $0x20] sm:$0xff]
    %v2556 = vld [vmem:[%s7 + $0x28] sm:$0xff]
    %v2557 = vld [vmem:[%s7 + $0x30] sm:$0xff]
    %v2558 = vld [vmem:[%s7 + $0x38] sm:$0xff]
    %v2559 = vld [vmem:[%s7 + $0x40] sm:$0xff]
    %v2560 = vld [vmem:[%s7 + $0x48] sm:$0xff]
    %v2561 = vld [vmem:[%s7 + $0x50] sm:$0xff]
    %v2562 = vld [vmem:[%s7 + $0x58] sm:$0xff]
    %v2563 = vld [vmem:[%s7 + $0x60] sm:$0xff]
    %v2564 = vld [vmem:[%s7 + $0x68] sm:$0xff]
    %vm2565 = vcmask 916480
    %v2567 = vsel %vm2565, %v2550, 0
    %2569 = vmatprep.subr.mxu0 0.0
    %2570 = vmatpush1.msra.mxu0 %v2551
    %2571 = vmatprep.subr.mxu0 0.0
    %2572 = vmatpush1.msra.mxu0 %v2552
    %2573 = vmatprep.subr.mxu0 0.0
    %2574 = vmatpush1.msra.mxu0 %v2553
    %2575 = vmatprep.subr.mxu0 0.0
    %2576 = vmatpush1.msra.mxu0 %v2554
    %2577 = vmatprep.subr.mxu0 0.0
    %2578 = vmatpush1.msra.mxu0 %v2555
    %2579 = vmatprep.subr.mxu0 0.0
    %2580 = vmatpush1.msra.mxu0 %v2556
    %2581 = vmatprep.subr.mxu0 0.0
    %2582 = vmatpush1.msra.mxu0 %v2557
    %2583 = vmatprep.subr.mxu0 0.0
    %2584 = vmatpush1.msra.mxu0 %v2558
    %2585 = vmatprep.subr.mxu0 0.0
    %2586 = vmatpush1.msra.mxu0 %v2559
    %2587 = vmatprep.subr.mxu0 0.0
    %2588 = vmatpush1.msra.mxu0 %v2560
    %2589 = vmatprep.subr.mxu0 0.0
    %2590 = vmatpush1.msra.mxu0 %v2561
    %2591 = vmatprep.subr.mxu0 0.0
    %2592 = vmatpush1.msra.mxu0 %v2562
    %2593 = vmatprep.subr.mxu0 0.0
    %2594 = vmatpush1.msra.mxu0 %v2563
    %2595 = vmatprep.subr.mxu0 0.0
    %2596 = vmatpush1.msra.mxu0 %v2564
    %2597 = vmatprep.subr.mxu0 0.0
    %2598 = vmatpush1.msra.mxu0 0.0
    %2599 = vmatprep.subr.mxu0 0.0
    %2600 = vmatpush1.msra.mxu0 0.0
    %2601 = vmatprep.subr.mxu0 0.0
    %2602 = vmatpush1.msra.mxu0 0.0
    %2603 = vmatprep.subr.mxu0 0.0
    %2604 = vmatpush1.msra.mxu0 0.0
    %2605 = vmatprep.subr.mxu0 0.0
    %2606 = vmatpush1.msra.mxu0 0.0
    %2607 = vmatprep.subr.mxu0 0.0
    %2608 = vmatpush1.msra.mxu0 0.0
    %2609 = vmatprep.subr.mxu0 0.0
    %2610 = vmatpush1.msra.mxu0 0.0
    %2611 = vmatprep.subr.mxu0 0.0
    %2612 = vmatpush1.msra.mxu0 0.0
    %2613 = vmatprep.subr.mxu0 0.0
    %2614 = vmatpush1.msra.mxu0 0.0
    %2615 = vmatprep.subr.mxu0 0.0
    %2616 = vmatpush1.msra.mxu0 0.0
    %2617 = vmatprep.subr.mxu0 0.0
    %2618 = vmatpush1.msra.mxu0 0.0
    %2619 = vmatprep.subr.mxu0 0.0
    %2620 = vmatpush1.msra.mxu0 0.0
    %2621 = vmatprep.subr.mxu0 0.0
    %2622 = vmatpush1.msra.mxu0 0.0
    %2623 = vmatprep.subr.mxu0 0.0
    %2624 = vmatpush1.msra.mxu0 0.0
    %2625 = vmatprep.subr.mxu0 0.0
    %2626 = vmatpush1.msra.mxu0 0.0
    %2627 = vmatprep.subr.mxu0 0.0
    %2628 = vmatpush1.msra.mxu0 0.0
    %2629 = vmatprep.subr.mxu0 0.0
    %2630 = vmatpush1.msra.mxu0 0.0
    %2631 = vmatprep.subr.mxu0 0.0
    %2632 = vmatpush1.msra.mxu0 0.0
    %2633 = vmatprep.mubr.f32.mxu0 0.0
    %2634 = vmatmul.mubr.f32.gmra.mrb[0].mxu0 %v2567
    %v2635 = vpop.f32.mrb[0].mxu0
    %v2636 = vadd.f32 0.0, %v2635
    %v2637 = vpop.f32.mrb[0].mxu0
    %2638 = vdwg.mxu0
    %2639 = vmatprep.subr.mxu0 0.0
    %2640 = vmatpush1.msra.mxu0 %v2534
    %2641 = vmatprep.subr.mxu0 0.0
    %2642 = vmatpush1.msra.mxu0 %v2535
    %2643 = vmatprep.subr.mxu0 0.0
    %2644 = vmatpush1.msra.mxu0 %v2536
    %2645 = vmatprep.subr.mxu0 0.0
    %2646 = vmatpush1.msra.mxu0 %v2537
    %2647 = vmatprep.subr.mxu0 0.0
    %2648 = vmatpush1.msra.mxu0 %v2538
    %2649 = vmatprep.subr.mxu0 0.0
    %2650 = vmatpush1.msra.mxu0 %v2539
    %2651 = vmatprep.subr.mxu0 0.0
    %2652 = vmatpush1.msra.mxu0 %v2540
    %2653 = vmatprep.subr.mxu0 0.0
    %2654 = vmatpush1.msra.mxu0 %v2541
    %2655 = vmatprep.subr.mxu0 0.0
    %2656 = vmatpush1.msra.mxu0 %v2542
    %2657 = vmatprep.subr.mxu0 0.0
    %2658 = vmatpush1.msra.mxu0 %v2543
    %2659 = vmatprep.subr.mxu0 0.0
    %2660 = vmatpush1.msra.mxu0 %v2544
    %2661 = vmatprep.subr.mxu0 0.0
    %2662 = vmatpush1.msra.mxu0 %v2545
    %2663 = vmatprep.subr.mxu0 0.0
    %2664 = vmatpush1.msra.mxu0 %v2546
    %2665 = vmatprep.subr.mxu0 0.0
    %2666 = vmatpush1.msra.mxu0 %v2547
    %2667 = vmatprep.subr.mxu0 0.0
    %2668 = vmatpush1.msra.mxu0 %v2548
    %2669 = vmatprep.subr.mxu0 0.0
    %2670 = vmatpush1.msra.mxu0 %v2549
    %2671 = vmatprep.subr.mxu0 0.0
    %2672 = vmatpush1.msra.mxu0 0.0
    %2673 = vmatprep.subr.mxu0 0.0
    %2674 = vmatpush1.msra.mxu0 0.0
    %2675 = vmatprep.subr.mxu0 0.0
    %2676 = vmatpush1.msra.mxu0 0.0
    %2677 = vmatprep.subr.mxu0 0.0
    %2678 = vmatpush1.msra.mxu0 0.0
    %2679 = vmatprep.subr.mxu0 0.0
    %2680 = vmatpush1.msra.mxu0 0.0
    %2681 = vmatprep.subr.mxu0 0.0
    %2682 = vmatpush1.msra.mxu0 0.0
    %2683 = vmatprep.subr.mxu0 0.0
    %2684 = vmatpush1.msra.mxu0 0.0
    %2685 = vmatprep.subr.mxu0 0.0
    %2686 = vmatpush1.msra.mxu0 0.0
    %2687 = vmatprep.subr.mxu0 0.0
    %2688 = vmatpush1.msra.mxu0 0.0
    %2689 = vmatprep.subr.mxu0 0.0
    %2690 = vmatpush1.msra.mxu0 0.0
    %2691 = vmatprep.subr.mxu0 0.0
    %2692 = vmatpush1.msra.mxu0 0.0
    %2693 = vmatprep.subr.mxu0 0.0
    %2694 = vmatpush1.msra.mxu0 0.0
    %2695 = vmatprep.subr.mxu0 0.0
    %2696 = vmatpush1.msra.mxu0 0.0
    %2697 = vmatprep.subr.mxu0 0.0
    %2698 = vmatpush1.msra.mxu0 0.0
    %2699 = vmatprep.subr.mxu0 0.0
    %2700 = vmatpush1.msra.mxu0 0.0
    %2701 = vmatprep.subr.mxu0 0.0
    %2702 = vmatpush1.msra.mxu0 0.0
    %2703 = vmatprep.mubr.f32.mxu0 0.0
    %2704 = vmatmul.mubr.f32.gmra.mrb[0].mxu0 %v2533
    %v2705 = vpop.f32.mrb[0].mxu0
    %v2706 = vadd.f32 %v2636, %v2705
    %v2707 = vpop.f32.mrb[0].mxu0
    %2708 = vdwg.mxu0
    %v2709 = vld [vmem:[%s8] sm:$0x1]
    %v2711 = vlaneseq
    %v2712 = vshrl.u32 %v2711, 7
    %v2713 = vsub.s32 0, %v2712
    %v2714 = vrot.slane %v2709, %v2713
    %v2716 = vadd.f32 %v2706, %v2714
    %v2717 = vtanh.pop %v2716
    %v2718 = vld [vmem:[%s9] sm:$0xff]
    %v2719 = vld [vmem:[%s9 + $0x8] sm:$0xff]
    %v2720 = vld [vmem:[%s9 + $0x10] sm:$0xff]
    %v2721 = vld [vmem:[%s9 + $0x18] sm:$0xff]
    %v2722 = vld [vmem:[%s10] sm:$0x1]
    %v2724 = vlaneseq
    %v2725 = vshrl.u32 %v2724, 7
    %v2726 = vsub.s32 0, %v2725
    %v2727 = vrot.slane %v2722, %v2726
    %v2730 = vsel %vm101, %v2717, 0
    %2732 = vmatprep.subr.mxu0 0.0
    %2733 = vmatpush1.msra.mxu0 %v2718
    %2734 = vmatprep.subr.mxu0 0.0
    %2735 = vmatpush1.msra.mxu0 %v2719
    %2736 = vmatprep.subr.mxu0 0.0
    %2737 = vmatpush1.msra.mxu0 %v2720
    %2738 = vmatprep.subr.mxu0 0.0
    %2739 = vmatpush1.msra.mxu0 %v2721
    %2740 = vmatprep.subr.mxu0 0.0
    %2741 = vmatpush1.msra.mxu0 0.0
    %2742 = vmatprep.subr.mxu0 0.0
    %2743 = vmatpush1.msra.mxu0 0.0
    %2744 = vmatprep.subr.mxu0 0.0
    %2745 = vmatpush1.msra.mxu0 0.0
    %2746 = vmatprep.subr.mxu0 0.0
    %2747 = vmatpush1.msra.mxu0 0.0
    %2748 = vmatprep.subr.mxu0 0.0
    %2749 = vmatpush1.msra.mxu0 0.0
    %2750 = vmatprep.subr.mxu0 0.0
    %2751 = vmatpush1.msra.mxu0 0.0
    %2752 = vmatprep.subr.mxu0 0.0
    %2753 = vmatpush1.msra.mxu0 0.0
    %2754 = vmatprep.subr.mxu0 0.0
    %2755 = vmatpush1.msra.mxu0 0.0
    %2756 = vmatprep.subr.mxu0 0.0
    %2757 = vmatpush1.msra.mxu0 0.0
    %2758 = vmatprep.subr.mxu0 0.0
    %2759 = vmatpush1.msra.mxu0 0.0
    %2760 = vmatprep.subr.mxu0 0.0
    %2761 = vmatpush1.msra.mxu0 0.0
    %2762 = vmatprep.subr.mxu0 0.0
    %2763 = vmatpush1.msra.mxu0 0.0
    %2764 = vmatprep.subr.mxu0 0.0
    %2765 = vmatpush1.msra.mxu0 0.0
    %2766 = vmatprep.subr.mxu0 0.0
    %2767 = vmatpush1.msra.mxu0 0.0
    %2768 = vmatprep.subr.mxu0 0.0
    %2769 = vmatpush1.msra.mxu0 0.0
    %2770 = vmatprep.subr.mxu0 0.0
    %2771 = vmatpush1.msra.mxu0 0.0
    %2772 = vmatprep.subr.mxu0 0.0
    %2773 = vmatpush1.msra.mxu0 0.0
    %2774 = vmatprep.subr.mxu0 0.0
    %2775 = vmatpush1.msra.mxu0 0.0
    %2776 = vmatprep.subr.mxu0 0.0
    %2777 = vmatpush1.msra.mxu0 0.0
    %2778 = vmatprep.subr.mxu0 0.0
    %2779 = vmatpush1.msra.mxu0 0.0
    %2780 = vmatprep.subr.mxu0 0.0
    %2781 = vmatpush1.msra.mxu0 0.0
    %2782 = vmatprep.subr.mxu0 0.0
    %2783 = vmatpush1.msra.mxu0 0.0
    %2784 = vmatprep.subr.mxu0 0.0
    %2785 = vmatpush1.msra.mxu0 0.0
    %2786 = vmatprep.subr.mxu0 0.0
    %2787 = vmatpush1.msra.mxu0 0.0
    %2788 = vmatprep.subr.mxu0 0.0
    %2789 = vmatpush1.msra.mxu0 0.0
    %2790 = vmatprep.subr.mxu0 0.0
    %2791 = vmatpush1.msra.mxu0 0.0
    %2792 = vmatprep.subr.mxu0 0.0
    %2793 = vmatpush1.msra.mxu0 0.0
    %2794 = vmatprep.subr.mxu0 0.0
    %2795 = vmatpush1.msra.mxu0 0.0
    %2796 = vmatprep.mubr.f32.mxu0 0.0
    %2797 = vmatmul.mubr.f32.gmra.mrb[0].mxu0 %v2730
    %v2798 = vpop.f32.mrb[0].mxu0
    %v2799 = vadd.f32 %v2727, %v2798
    %v2800 = vpop.f32.mrb[0].mxu0
    %2801 = vdwg.mxu0
    %vm2802 = vcmask 15360
    %2803 = vst.msk [vmem:[%s11] sm:$0xff] %vm2802, %v2799
    // Predicated region
    $region50: #{tpu_custom_call.1} parent=1 // pred_check
      _
    $region51: #{tpu_custom_call.1} parent=1 // pred_check_branch
      %2805 = sbr.rel (0) target = $region53
    $region52: #{tpu_custom_call.1} parent=1 // pred_region
      _
    $region53: #{tpu_custom_call.1} parent=1 // pred_fallthru
      _
    // Predicated region
    $region54: #{tpu_custom_call.1} parent=1 // pred_check
      _
    $region55: #{tpu_custom_call.1} parent=1 // pred_check_branch
      %2807 = sbr.rel (0) target = $region57
    $region56: #{tpu_custom_call.1} parent=1 // pred_region
      _
    $region57: #{tpu_custom_call.1} parent=1 // pred_fallthru
      _
    %2808 = vsyncpa [#allocation4], 1

</llo_original>
